<compile_context>
chip_gen: v7x
topology: tpu7x:2x2x1
jax: 0.10.0
libtpu: 0.0.40
codegen_flags: <defaults>
</compile_context>

<pallas_src>
import functools

import jax
import jax.numpy as jnp
import numpy as np
from jax import lax
from jax.experimental import pallas as pl
from jax.experimental.pallas import tpu as pltpu

# Safe on every generation (fits v7x's 64 MiB/TC). Raise to ~96-112 MiB on
# v6e/v5e (128 MiB physical) if the chosen tiles want it.
DEFAULT_VMEM_LIMIT = 48 * 1024 * 1024


# ---------------- Kernel 1: token-shift mix + projections ----------------
def _mix_proj_kernel(E, mm_dtype,
                     x_ref, prev_ref, maa_ref, w1_ref, w2_ref,
                     wr_ref, wk_ref, wv_ref, wg_ref,
                     td0_ref, tdw1_ref, tdw2_ref,
                     r_out, k_out, v_out, g_out, td_out):
    def mm(a, b):
        return jnp.dot(a.astype(mm_dtype), b.astype(mm_dtype),
                       preferred_element_type=jnp.float32)

    x = x_ref[...]                                    # (RB, C) f32 row tile
    RB = x.shape[0]
    # In-tile token shift: row r <- row r-1 via a sub-diagonal permutation
    # matmul (exact in f32, <1% of the projection FLOPs); row 0 <- the tile's
    # carry-in row (shift_state for the first tile of a sequence, last row of
    # the previous tile otherwise).  Replaces the old (B,T,C) HBM `shifted`.
    ri = lax.broadcasted_iota(jnp.int32, (RB, RB), 0)
    rj = lax.broadcasted_iota(jnp.int32, (RB, RB), 1)
    shift_mat = (ri == rj + 1).astype(jnp.float32)
    first_row = (lax.broadcasted_iota(jnp.int32, (RB, 1), 0) == 0
                 ).astype(jnp.float32)
    sh = (jnp.dot(shift_mat, x, preferred_element_type=jnp.float32)
          + first_row * prev_ref[0])
    xx = sh - x
    xxx = x + xx * maa_ref[pl.ds(0, 1), :]            # time_maa_x mix

    # Five low-rank mixes; w1 is pre-reshaped to (5, C, E) so every factor is
    # a leading-axis ref slice (no non-128-aligned column slicing of h5, and
    # tanh commutes with the column split).  Order: w, k, v, r, g.
    mixed = []
    for i in range(5):
        hi = jnp.tanh(mm(xxx, w1_ref[i]))             # (RB, E)
        mi = mm(hi, w2_ref[i]) + maa_ref[pl.ds(i + 1, 1), :]
        mixed.append(x + xx * mi)
    xw, xk, xv, xr, xg = mixed

    # Projections for this A-column tile.
    r_out[...] = mm(xr, wr_ref[...]).astype(r_out.dtype)
    k_out[...] = mm(xk, wk_ref[...]).astype(k_out.dtype)
    v_out[...] = mm(xv, wv_ref[...]).astype(v_out.dtype)
    gp = mm(xg, wg_ref[...])
    g_out[...] = (gp * jax.nn.sigmoid(gp)).astype(g_out.dtype)   # SiLU gate
    dd = jnp.tanh(mm(xw, tdw1_ref[...]))
    td_out[...] = (mm(dd, tdw2_ref[...]) + td0_ref[...]).astype(td_out.dtype)


def mix_proj(x2, tile_prev, maa, w1_5, w2_5, wr, wk, wv, wg, td0, tdw1, tdw2,
             E, row_block, a_tile, act_dtype, mm_dtype, vmem_limit):
    BT, C = x2.shape
    A = wr.shape[1]
    D = tdw1.shape[1]
    An = min(a_tile, A)
    assert BT % row_block == 0 and row_block % 8 == 0
    assert A % An == 0

    x_spec = pl.BlockSpec((row_block, C), lambda i, n: (i, 0))
    prev_spec = pl.BlockSpec((1, 1, C), lambda i, n: (i, 0, 0))
    out_spec = pl.BlockSpec((row_block, An), lambda i, n: (i, n))
    col_a = pl.BlockSpec((C, An), lambda i, n: (0, n))

    def full(arr):
        nd = arr.ndim
        return pl.BlockSpec(arr.shape, lambda i, n, _nd=nd: (0,) * _nd)

    # NOTE: the mix (shift + 5 low-rank factors) is recomputed per A-tile;
    # at production sizes that is <10% redundant FLOPs and buys weight tiling.
    out_shapes = tuple(jax.ShapeDtypeStruct((BT, A), act_dtype)
                       for _ in range(4)) + (
        jax.ShapeDtypeStruct((BT, A), jnp.float32),)   # time_decay stays f32
    return pl.pallas_call(
        functools.partial(_mix_proj_kernel, E, mm_dtype),
        grid=(BT // row_block, A // An),
        in_specs=[x_spec, prev_spec, full(maa), full(w1_5), full(w2_5),
                  col_a, col_a, col_a, col_a,
                  pl.BlockSpec((1, An), lambda i, n: (0, n)),
                  full(tdw1),
                  pl.BlockSpec((D, An), lambda i, n: (0, n))],
        out_specs=tuple([out_spec] * 5),
        out_shape=out_shapes,
        compiler_params=pltpu.CompilerParams(
            dimension_semantics=("parallel", "parallel"),
            vmem_limit_bytes=vmem_limit),
    )(x2, tile_prev, maa, w1_5, w2_5, wr, wk, wv, wg, td0, tdw1, tdw2)


# ------- Kernel 2: chunk-parallel WKV recurrence + group-norm + gate -------
def _wkv_gn_kernel(Tc, Hb, S, eps,
                   r_ref, k_ref, v_ref, td_ref, g_ref,
                   u_ref, lnw_ref, lnb_ref, s0_ref,
                   o_ref, sT_ref, st_scr, o_scr):
    c = pl.program_id(2)
    f32 = jnp.float32

    @pl.when(c == 0)
    def _():
        # Chunk-start state for this (batch, head-group).  Stored TRANSPOSED
        # (value channel j in sublanes, key channel i in lanes) so the decay
        # of the carried state below is a lane-broadcast VPU multiply.
        st_scr[...] = s0_ref[0]                      # (Hb, S, S)

    r = r_ref[...].astype(f32)
    k = k_ref[...].astype(f32)
    v = v_ref[...].astype(f32)
    g = g_ref[...].astype(f32)
    lw = -jnp.exp(td_ref[...])                       # log decay (<=0), (Tc, Hb*S), f32

    # Per-channel inclusive log-cumsum via a lower-triangular-ones matmul.
    ti = lax.broadcasted_iota(jnp.int32, (Tc, Tc), 0)
    tj = lax.broadcasted_iota(jnp.int32, (Tc, Tc), 1)
    l_incl = (ti >= tj).astype(f32)
    eye_t = (ti == tj).astype(f32)
    cum = jnp.dot(l_incl, lw, preferred_element_type=f32)   # sum_{s<=t}
    cum_prev = cum - lw                                      # sum_{s<t}
    cum_last = cum[Tc - 1:Tc, :]                             # (1, Hb*S)
    dec_all = jnp.exp(cum_last)                              # whole-chunk decay
    r_dec = r * jnp.exp(cum_prev)
    # TODO(synk): sub-chunk this factorization before raising Tc past ~64;
    # exp(-cum) can overflow for strongly decaying channels on long chunks.
    k_dec = k * jnp.exp(-cum)
    k_rem = k_dec * dec_all            # == k * exp(cum_last - cum); one fewer exp
    ruk = r * u_ref[...] * k           # current-token bonus term

    # Small per-head loop inside the head-group (Hb ~ 2 at production so the
    # group lane width Hb*S is a multiple of 128); heads beyond the group are
    # a "parallel" grid axis, not an unrolled loop.
    for h in range(Hb):
        sl = slice(h * S, (h + 1) * S)
        p0_h = st_scr[h]                             # (S_j, S_i) transposed state
        rt_h = r_dec[:, sl]
        v_h = v[:, sl]
        # intra-chunk attention matrix (Tc, Tc): strictly-causal + diag bonus
        a_lo = jnp.einsum('ts,us->tu', rt_h, k_dec[:, sl],
                          preferred_element_type=f32)
        d_h = jnp.sum(ruk[:, sl], axis=-1, keepdims=True)    # (Tc, 1)
        a_mat = jnp.where(ti > tj, a_lo, 0.0) + eye_t * d_h
        out_h = (jnp.dot(a_mat, v_h, preferred_element_type=f32)
                 + jnp.einsum('ti,ji->tj', rt_h, p0_h,
                              preferred_element_type=f32))
        # state update to the end of the chunk (still transposed): the decay
        # of the carried state is a pure broadcast multiply (no diag matmul).
        st_scr[h] = (p0_h * dec_all[:, sl]
                     + jnp.einsum('tj,ti->ji', v_h, k_rem[:, sl],
                                  preferred_element_type=f32))
        # fused per-head group norm, written straight into the output scratch
        mean = jnp.mean(out_h, axis=-1, keepdims=True)
        var = jnp.mean((out_h - mean) ** 2, axis=-1, keepdims=True)
        xn = (out_h - mean) * lax.rsqrt(var + eps)
        o_scr[:, sl] = xn * lnw_ref[:, sl] + lnb_ref[:, sl]

    # single lane-dense (Tc, Hb*S) store; SiLU gate fused here
    o_ref[...] = (o_scr[...] * g).astype(o_ref.dtype)

    @pl.when(c == pl.num_programs(2) - 1)
    def _():
        sT_ref[0] = st_scr[...]


def wkv_gn(r2, k2, v2, td2, g2, u_row, lnw, lnb, s0_t,
           B, T, H, S, eps, chunk, heads_per_block, act_dtype, vmem_limit):
    BT, A = r2.shape
    assert BT == B * T and A == H * S
    Tc = min(chunk, T)
    assert T % Tc == 0 and Tc % 8 == 0
    NC = T // Tc
    Hb = min(heads_per_block, H)
    assert H % Hb == 0
    HG = H // Hb
    HbS = Hb * S

    # (Tc, Hb*S) tiles taken straight out of the (B*T, A) activations.
    act_spec = pl.BlockSpec((Tc, HbS), lambda b, hg, c: (b * NC + c, hg))
    vec_spec = pl.BlockSpec((1, HbS), lambda b, hg, c: (0, hg))
    st_spec = pl.BlockSpec((1, Hb, S, S), lambda b, hg, c: (b, hg, 0, 0))
    out_shapes = (jax.ShapeDtypeStruct((BT, A), act_dtype),
                  jax.ShapeDtypeStruct((B, H, S, S), jnp.float32))
    return pl.pallas_call(
        functools.partial(_wkv_gn_kernel, Tc, Hb, S, eps),
        grid=(B, HG, NC),
        in_specs=[act_spec, act_spec, act_spec, act_spec, act_spec,
                  vec_spec, vec_spec, vec_spec, st_spec],
        out_specs=(act_spec, st_spec),
        out_shape=out_shapes,
        scratch_shapes=[pltpu.VMEM((Hb, S, S), jnp.float32),
                        pltpu.VMEM((Tc, HbS), jnp.float32)],
        # attn_state (transposed) aliases the new-state output; each (b, hg)
        # block is read only at c==0 and written only at the last chunk, and
        # the chunk axis stays innermost, so the ordering is preserved.
        input_output_aliases={8: 1},
        compiler_params=pltpu.CompilerParams(
            dimension_semantics=("parallel", "parallel", "arbitrary"),
            vmem_limit_bytes=vmem_limit),
    )(r2, k2, v2, td2, g2, u_row, lnw, lnb, s0_t)


# ---------------- Kernel 3: output projection (N / K tiled) ----------------
def _outproj_kernel(mm_dtype, x_ref, wo_ref, o_ref, acc_ref):
    @pl.when(pl.program_id(2) == 0)
    def _():
        acc_ref[...] = jnp.zeros_like(acc_ref)
    acc_ref[...] += jnp.dot(x_ref[...].astype(mm_dtype),
                            wo_ref[...].astype(mm_dtype),
                            preferred_element_type=jnp.float32)

    @pl.when(pl.program_id(2) == pl.num_programs(2) - 1)
    def _():
        o_ref[...] = acc_ref[...].astype(o_ref.dtype)


def outproj(x2, wo, row_block, c_tile, k_tile, mm_dtype, vmem_limit):
    BT, A = x2.shape
    C = wo.shape[1]
    assert BT % row_block == 0 and row_block % 8 == 0
    Cn = min(c_tile, C)
    Ak = min(k_tile, A)
    assert C % Cn == 0 and A % Ak == 0
    return pl.pallas_call(
        functools.partial(_outproj_kernel, mm_dtype),
        grid=(BT // row_block, C // Cn, A // Ak),
        in_specs=[pl.BlockSpec((row_block, Ak), lambda i, j, k: (i, k)),
                  pl.BlockSpec((Ak, Cn), lambda i, j, k: (k, j))],
        out_specs=pl.BlockSpec((row_block, Cn), lambda i, j, k: (i, j)),
        out_shape=jax.ShapeDtypeStruct((BT, C), jnp.float32),
        scratch_shapes=[pltpu.VMEM((row_block, Cn), jnp.float32)],
        compiler_params=pltpu.CompilerParams(
            dimension_semantics=("parallel", "parallel", "arbitrary"),
            vmem_limit_bytes=vmem_limit),
    )(x2, wo)


# ---------------- Glue: full forward ----------------
def rwkv6_attention_forward(hidden, shift_state, attn_state, p, H, S, E, eps,
                            chunk=64, row_block=128, heads_per_block=2,
                            a_tile=512, c_tile=1024, k_tile=1024,
                            compute_dtype=jnp.bfloat16,
                            vmem_limit=DEFAULT_VMEM_LIMIT):
    B, T, C = hidden.shape
    A = H * S
    BT = B * T
    row_block = min(row_block, T)
    assert T % row_block == 0

    x2 = hidden.reshape(BT, C).astype(jnp.float32)
    # Carry-in row for every row tile: shift_state for the first tile of each
    # sequence, last row of the previous tile otherwise (tiny (BT/RB, 1, C)
    # sideband instead of a full (B, T, C) shifted copy in HBM).
    NR = T // row_block
    prev_tail = hidden[:, row_block - 1:T - 1:row_block, :]     # (B, NR-1, C)
    tile_prev = jnp.concatenate([shift_state[:, None, :], prev_tail], axis=1)
    tile_prev = tile_prev.reshape(B * NR, 1, C).astype(jnp.float32)

    maa = jnp.stack([p['time_maa_x'], p['time_maa_w'], p['time_maa_k'],
                     p['time_maa_v'], p['time_maa_r'], p['time_maa_g']],
                    axis=0)                                      # (6, C)
    w1_5 = p['time_maa_w1'].reshape(C, 5, E).transpose(1, 0, 2)  # (5, C, E)
    w2_5 = p['time_maa_w2']                                      # (5, E, C)

    # Big projection weights stored/streamed at the MXU operand dtype (in a
    # real model keep them in bf16/fp8 permanently instead of casting here).
    def wc(w):
        return w.astype(compute_dtype)

    act_dtype = compute_dtype
    r2, k2, v2, g2, td2 = mix_proj(
        x2, tile_prev, maa, w1_5, w2_5,
        wc(p['w_r']), wc(p['w_k']), wc(p['w_v']), wc(p['w_g']),
        p['time_decay'].reshape(1, A), p['time_decay_w1'], p['time_decay_w2'],
        E, row_block, a_tile, act_dtype, compute_dtype, vmem_limit)

    # WKV + group-norm + gate in the (B*T, A) layout; state carried transposed
    # (j, i) so the per-chunk decay is a lane-broadcast multiply.
    s0_t = jnp.swapaxes(attn_state.astype(jnp.float32), -1, -2)
    gn_gated, new_state_t = wkv_gn(
        r2, k2, v2, td2, g2,
        p['time_faaaa'].reshape(1, A), p['ln_w'].reshape(1, A),
        p['ln_b'].reshape(1, A), s0_t,
        B, T, H, S, eps, chunk, heads_per_block, act_dtype, vmem_limit)
    new_state = jnp.swapaxes(new_state_t, -1, -2)

    o2 = outproj(gn_gated, wc(p['w_o']), row_block, c_tile, k_tile,
                 compute_dtype, vmem_limit)
    out = o2.reshape(B, T, C)
    new_shift = hidden[:, -1, :]
    return out, new_shift, new_state


# ---------------- Pure-JAX reference (for verification) ----------------
def reference_forward(hidden, shift_state, attn_state, p, H, S, E, eps):
    B, T, C = hidden.shape
    A = H * S
    x = hidden
    shifted = jnp.concatenate([shift_state[:, None, :], x[:, :-1, :]], axis=1)
    xx = shifted - x
    xxx = x + xx * p['time_maa_x']
    h5 = jnp.tanh(xxx @ p['time_maa_w1'])
    maas = [p['time_maa_w'], p['time_maa_k'], p['time_maa_v'],
            p['time_maa_r'], p['time_maa_g']]
    mixed = []
    for i in range(5):
        mi = h5[..., i * E:(i + 1) * E] @ p['time_maa_w2'][i] + maas[i]
        mixed.append(x + xx * mi)
    xw, xk, xv, xr, xg = mixed
    r = xr @ p['w_r']
    k = xk @ p['w_k']
    v = xv @ p['w_v']
    g = jax.nn.silu(xg @ p['w_g'])
    td = jnp.tanh(xw @ p['time_decay_w1']) @ p['time_decay_w2'] + p['time_decay']
    w = jnp.exp(-jnp.exp(td)).reshape(B, T, H, S)
    r = r.reshape(B, T, H, S)
    k = k.reshape(B, T, H, S)
    v = v.reshape(B, T, H, S)
    u = p['time_faaaa']
    state = attn_state
    outs = []
    for t in range(T):
        kt, vt, rt, wt = k[:, t], v[:, t], r[:, t], w[:, t]
        a = kt[..., :, None] * vt[..., None, :]
        tf = u[None, :, :, None] * a + state
        outs.append(jnp.einsum('bhi,bhij->bhj', rt, tf))
        state = a + wt[..., :, None] * state
    out = jnp.stack(outs, axis=1)                         # (B,T,H,S)
    x2 = out.reshape(B * T, H, S)
    mean = x2.mean(axis=-1, keepdims=True)
    var = ((x2 - mean) ** 2).mean(axis=-1, keepdims=True)
    xn = ((x2 - mean) / jnp.sqrt(var + eps)).reshape(B * T, A)
    xn = xn * p['ln_w'] + p['ln_b']
    o = (xn.reshape(B, T, A) * g) @ p['w_o']
    return o, hidden[:, -1, :], state


# ---------------- Deterministic parameter init ----------------
def init_params(key, C, A, H, S, E, D):
    ks = jax.random.split(key, 19)

    def nrm(k, shape, scale=0.1):
        return (scale * jax.random.normal(k, shape)).astype(jnp.float32)

    p = {
        'time_maa_x': nrm(ks[0], (C,), 0.5),
        'time_maa_w': nrm(ks[1], (C,), 0.5),
        'time_maa_k': nrm(ks[2], (C,), 0.5),
        'time_maa_v': nrm(ks[3], (C,), 0.5),
        'time_maa_r': nrm(ks[4], (C,), 0.5),
        'time_maa_g': nrm(ks[5], (C,), 0.5),
        'time_maa_w1': nrm(ks[6], (C, 5 * E)),
        'time_maa_w2': nrm(ks[7], (5, E, C)),
        'time_decay': nrm(ks[8], (A,), 0.3),
        'time_decay_w1': nrm(ks[9], (C, D)),
        'time_decay_w2': nrm(ks[10], (D, A)),
        'time_faaaa': nrm(ks[11], (H, S), 0.5),
        'w_r': nrm(ks[12], (C, A)),
        'w_k': nrm(ks[13], (C, A)) * 0.5,   # module halves key.weight on first forward
        'w_v': nrm(ks[14], (C, A)) * 0.25,  # module quarters value.weight on first forward
        'w_g': nrm(ks[15], (C, A)),
        'w_o': nrm(ks[16], (A, C)),
        'ln_w': (1.0 + nrm(ks[17], (A,))).astype(jnp.float32),
        'ln_b': nrm(ks[18], (A,)),
    }
    return p


if __name__ == "__main__":
    B, T = 2, 16           # two chunks of 8 -> exercises the inter-chunk state carry
    C = 32                 # hidden_size
    A = 32                 # attention_hidden_size
    S = 16                 # head_size
    H = A // S             # num_heads
    E = 32                 # TIME_MIX_EXTRA_DIM
    D = 64                 # TIME_DECAY_EXTRA_DIM
    head_size_divisor = 8
    eps = 1e-5 * head_size_divisor ** 2

    key = jax.random.PRNGKey(0)
    kp, kx = jax.random.split(key)
    params = init_params(kp, C, A, H, S, E, D)
    hidden = jax.random.normal(kx, (B, T, C), dtype=jnp.float32)
    shift_state = jnp.zeros((B, C), jnp.float32)          # state[layer_id*3]
    attn_state = jnp.zeros((B, H, S, S), jnp.float32)     # state[layer_id*3 + 1]

    ref_out, ref_shift, ref_state = reference_forward(
        hidden, shift_state, attn_state, params, H, S, E, eps)

    # Small chunk/row tiles to exercise multi-step grids at toy sizes;
    # use chunk=64..128, row_block=128..256, a_tile/c_tile/k_tile=512..1024
    # at production sizes (re-derive against 64 MiB VMEM on v7x).

    # 1) f32 MXU operands / f32 intermediates: tight check vs the f32 reference.
    fwd_f32 = jax.jit(functools.partial(
        rwkv6_attention_forward, H=H, S=S, E=E, eps=eps,
        chunk=8, row_block=8, heads_per_block=2, compute_dtype=jnp.float32))
    out, new_shift, new_state = fwd_f32(hidden, shift_state, attn_state, params)
    jax.block_until_ready((out, new_shift, new_state))
    assert np.allclose(np.asarray(out), np.asarray(ref_out), atol=2e-3, rtol=2e-3), (
        "max abs err", float(np.max(np.abs(np.asarray(out) - np.asarray(ref_out)))))
    assert np.allclose(np.asarray(new_state), np.asarray(ref_state),
                       atol=2e-3, rtol=2e-3), (
        "state max abs err",
        float(np.max(np.abs(np.asarray(new_state) - np.asarray(ref_state)))))
    assert np.allclose(np.asarray(new_shift), np.asarray(ref_shift))

    # 2) bf16 MXU operands / bf16 intermediates (the production path on
    # v5e/v6e/v7x): looser sanity check against the same f32 reference.
    fwd_bf16 = jax.jit(functools.partial(
        rwkv6_attention_forward, H=H, S=S, E=E, eps=eps,
        chunk=8, row_block=8, heads_per_block=2, compute_dtype=jnp.bfloat16))
    out_b, shift_b, state_b = fwd_bf16(hidden, shift_state, attn_state, params)
    jax.block_until_ready((out_b, shift_b, state_b))
    assert np.allclose(np.asarray(out_b), np.asarray(ref_out),
                       atol=6e-2, rtol=6e-2), (
        "bf16 max abs err",
        float(np.max(np.abs(np.asarray(out_b) - np.asarray(ref_out)))))
    assert np.allclose(np.asarray(state_b), np.asarray(ref_state),
                       atol=6e-2, rtol=6e-2), (
        "bf16 state max abs err",
        float(np.max(np.abs(np.asarray(state_b) - np.asarray(ref_state)))))

    print("KERNEL_OK")
</pallas_src>

<mosaic_0001>
module attributes {stable_mosaic.version = 11 : i64} {
  func.func @_outproj_kernel(%arg0: i32, %arg1: i32, %arg2: i32, %arg3: memref<8x32xf32, #tpu.memory_space<vmem>>, %arg4: memref<32x32xf32, #tpu.memory_space<vmem>>, %arg5: memref<8x32xf32, #tpu.memory_space<vmem>>, %arg6: memref<8x32xf32, #tpu.memory_space<vmem>>) attributes {dimension_semantics = [#tpu.dimension_semantics<parallel>, #tpu.dimension_semantics<parallel>, #tpu.dimension_semantics<arbitrary>], iteration_bounds = array<i64: 4, 1, 1>, scalar_prefetch = 0 : i64, scratch_operands = 1 : i64, tpu.core_type = #tpu.core_type<tc>, window_params = [{transform_indices = @transform_0, window_bounds = array<i64: 8, 32>}, {transform_indices = @transform_1, window_bounds = array<i64: 32, 32>}, {transform_indices = @transform_2, window_bounds = array<i64: 8, 32>}]} {
    %c0_i32 = arith.constant 0 : i32
    %0 = arith.cmpi eq, %arg2, %c0_i32 : i32
    %1 = arith.extui %0 : i1 to i32
    %c0_i32_0 = arith.constant 0 : i32
    %2 = arith.cmpi ne, %1, %c0_i32_0 : i32
    scf.if %2 {
      %cst_10 = arith.constant 0.000000e+00 : f32
      %12 = vector.broadcast %cst_10 : f32 to vector<8x32xf32>
      %c0_11 = arith.constant 0 : index
      %c0_12 = arith.constant 0 : index
      %13 = vector.load %arg6[%c0_11, %c0_12] : memref<8x32xf32, #tpu.memory_space<vmem>>, vector<8x32xf32>
      tpu.vector_store %arg6[%c0_11, %c0_12], %12 {strides = array<i32>} : memref<8x32xf32, #tpu.memory_space<vmem>>, vector<8x32xf32>,
    } else {
    }
    %c0 = arith.constant 0 : index
    %c0_1 = arith.constant 0 : index
    %3 = vector.load %arg6[%c0, %c0_1] : memref<8x32xf32, #tpu.memory_space<vmem>>, vector<8x32xf32>
    %c0_2 = arith.constant 0 : index
    %c0_3 = arith.constant 0 : index
    %4 = vector.load %arg3[%c0_2, %c0_3] : memref<8x32xf32, #tpu.memory_space<vmem>>, vector<8x32xf32>
    %c0_4 = arith.constant 0 : index
    %c0_5 = arith.constant 0 : index
    %5 = vector.load %arg4[%c0_4, %c0_5] : memref<32x32xf32, #tpu.memory_space<vmem>>, vector<32x32xf32>
    %cst = arith.constant dense<0.000000e+00> : vector<8x32xf32>
    %6 = tpu.matmul %4, %5, %cst {dimension_numbers = #tpu.dot_dimension_numbers<[1], [0], [0], [1], [0, 0, 1, 1], [], []>} : vector<8x32xf32>, vector<32x32xf32>, vector<8x32xf32> -> vector<8x32xf32>
    %7 = arith.addf %3, %6 : vector<8x32xf32>
    %c0_6 = arith.constant 0 : index
    %c0_7 = arith.constant 0 : index
    %8 = vector.load %arg6[%c0_6, %c0_7] : memref<8x32xf32, #tpu.memory_space<vmem>>, vector<8x32xf32>
    tpu.vector_store %arg6[%c0_6, %c0_7], %7 {strides = array<i32>} : memref<8x32xf32, #tpu.memory_space<vmem>>, vector<8x32xf32>,
    %c0_i32_8 = arith.constant 0 : i32
    %9 = arith.cmpi eq, %arg2, %c0_i32_8 : i32
    %10 = arith.extui %9 : i1 to i32
    %c0_i32_9 = arith.constant 0 : i32
    %11 = arith.cmpi ne, %10, %c0_i32_9 : i32
    scf.if %11 {
      %c0_10 = arith.constant 0 : index
      %c0_11 = arith.constant 0 : index
      %12 = vector.load %arg6[%c0_10, %c0_11] : memref<8x32xf32, #tpu.memory_space<vmem>>, vector<8x32xf32>
      %c0_12 = arith.constant 0 : index
      %c0_13 = arith.constant 0 : index
      %13 = vector.load %arg5[%c0_12, %c0_13] : memref<8x32xf32, #tpu.memory_space<vmem>>, vector<8x32xf32>
      tpu.vector_store %arg5[%c0_12, %c0_13], %12 {strides = array<i32>} : memref<8x32xf32, #tpu.memory_space<vmem>>, vector<8x32xf32>,
    } else {
    }
    return
  }
  func.func @transform_0(%arg0: i32, %arg1: i32, %arg2: i32) -> (i32, i32) {
    %c0_i32 = arith.constant 0 : i32
    return %arg0, %arg2 : i32, i32
  }
  func.func @transform_1(%arg0: i32, %arg1: i32, %arg2: i32) -> (i32, i32) {
    %c0_i32 = arith.constant 0 : i32
    return %arg2, %arg1 : i32, i32
  }
  func.func @transform_2(%arg0: i32, %arg1: i32, %arg2: i32) -> (i32, i32) {
    %c0_i32 = arith.constant 0 : i32
    return %arg0, %arg1 : i32, i32
  }
}

module attributes {stable_mosaic.version = 11 : i64} {
  func.func @_mix_proj_kernel(%arg0: i32, %arg1: i32, %arg2: memref<8x32xf32, #tpu.memory_space<vmem>>, %arg3: memref<1x1x32xf32, #tpu.memory_space<vmem>>, %arg4: memref<6x32xf32, #tpu.memory_space<vmem>>, %arg5: memref<5x32x32xf32, #tpu.memory_space<vmem>>, %arg6: memref<5x32x32xf32, #tpu.memory_space<vmem>>, %arg7: memref<32x32xf32, #tpu.memory_space<vmem>>, %arg8: memref<32x32xf32, #tpu.memory_space<vmem>>, %arg9: memref<32x32xf32, #tpu.memory_space<vmem>>, %arg10: memref<32x32xf32, #tpu.memory_space<vmem>>, %arg11: memref<1x32xf32, #tpu.memory_space<vmem>>, %arg12: memref<32x64xf32, #tpu.memory_space<vmem>>, %arg13: memref<64x32xf32, #tpu.memory_space<vmem>>, %arg14: memref<8x32xf32, #tpu.memory_space<vmem>>, %arg15: memref<8x32xf32, #tpu.memory_space<vmem>>, %arg16: memref<8x32xf32, #tpu.memory_space<vmem>>, %arg17: memref<8x32xf32, #tpu.memory_space<vmem>>, %arg18: memref<8x32xf32, #tpu.memory_space<vmem>>) attributes {dimension_semantics = [#tpu.dimension_semantics<parallel>, #tpu.dimension_semantics<parallel>], iteration_bounds = array<i64: 4, 1>, scalar_prefetch = 0 : i64, scratch_operands = 0 : i64, tpu.core_type = #tpu.core_type<tc>, window_params = [{transform_indices = @transform_0, window_bounds = array<i64: 8, 32>}, {transform_indices = @transform_1, window_bounds = array<i64: 1, 1, 32>}, {pipeline_mode = #tpu.pipeline_mode<synchronous>, transform_indices = @transform_2, window_bounds = array<i64: 6, 32>}, {pipeline_mode = #tpu.pipeline_mode<synchronous>, transform_indices = @transform_3, window_bounds = array<i64: 5, 32, 32>}, {pipeline_mode = #tpu.pipeline_mode<synchronous>, transform_indices = @transform_4, window_bounds = array<i64: 5, 32, 32>}, {transform_indices = @transform_5, window_bounds = array<i64: 32, 32>}, {transform_indices = @transform_6, window_bounds = array<i64: 32, 32>}, {transform_indices = @transform_7, window_bounds = array<i64: 32, 32>}, {transform_indices = @transform_8, window_bounds = array<i64: 32, 32>}, {transform_indices = @transform_9, window_bounds = array<i64: 1, 32>}, {pipeline_mode = #tpu.pipeline_mode<synchronous>, transform_indices = @transform_10, window_bounds = array<i64: 32, 64>}, {transform_indices = @transform_11, window_bounds = array<i64: 64, 32>}, {transform_indices = @transform_12, window_bounds = array<i64: 8, 32>}, {transform_indices = @transform_13, window_bounds = array<i64: 8, 32>}, {transform_indices = @transform_14, window_bounds = array<i64: 8, 32>}, {transform_indices = @transform_15, window_bounds = array<i64: 8, 32>}, {transform_indices = @transform_16, window_bounds = array<i64: 8, 32>}]} {
    %c0 = arith.constant 0 : index
    %c0_0 = arith.constant 0 : index
    %0 = vector.load %arg2[%c0, %c0_0] : memref<8x32xf32, #tpu.memory_space<vmem>>, vector<8x32xf32>
    %1 = tpu.iota {dimensions = array<i32: 0>} : vector<8x8xi32>
    %2 = tpu.iota {dimensions = array<i32: 1>} : vector<8x8xi32>
    %c1_i32 = arith.constant 1 : i32
    %3 = vector.broadcast %c1_i32 : i32 to vector<8x8xi32>
    %4 = arith.addi %2, %3 : vector<8x8xi32>
    %5 = arith.cmpi eq, %1, %4 : vector<8x8xi32>
    %6 = arith.extui %5 : vector<8x8xi1> to vector<8x8xi32>
    %7 = arith.sitofp %6 : vector<8x8xi32> to vector<8x8xf32>
    %8 = tpu.iota {dimensions = array<i32: 0>} : vector<8x1xi32>
    %c0_i32 = arith.constant 0 : i32
    %9 = vector.broadcast %c0_i32 : i32 to vector<8x1xi32>
    %10 = arith.cmpi eq, %8, %9 : vector<8x1xi32>
    %11 = arith.extui %10 : vector<8x1xi1> to vector<8x1xi32>
    %12 = arith.sitofp %11 : vector<8x1xi32> to vector<8x1xf32>
    %cst = arith.constant dense<0.000000e+00> : vector<8x32xf32>
    %13 = tpu.matmul %7, %0, %cst {dimension_numbers = #tpu.dot_dimension_numbers<[1], [0], [0], [1], [0, 0, 1, 1], [], []>} : vector<8x8xf32>, vector<8x32xf32>, vector<8x32xf32> -> vector<8x32xf32>
    %c0_1 = arith.constant 0 : index
    %c0_2 = arith.constant 0 : index
    %c0_3 = arith.constant 0 : index
    %14 = vector.load %arg3[%c0_1, %c0_2, %c0_3] : memref<1x1x32xf32, #tpu.memory_space<vmem>>, vector<1x1x32xf32>
    %15 = vector.shape_cast %14 : vector<1x1x32xf32> to vector<1x32xf32>
    %16 = vector.broadcast %12 : vector<8x1xf32> to vector<8x32xf32>
    %17 = vector.broadcast %15 : vector<1x32xf32> to vector<8x32xf32>
    %18 = arith.mulf %16, %17 : vector<8x32xf32>
    %19 = arith.addf %13, %18 : vector<8x32xf32>
    %20 = arith.subf %19, %0 : vector<8x32xf32>
    %c0_4 = arith.constant 0 : index
    %c0_5 = arith.constant 0 : index
    %21 = vector.load %arg4[%c0_4, %c0_5] : memref<6x32xf32, #tpu.memory_space<vmem>>, vector<1x32xf32>
    %22 = vector.broadcast %21 : vector<1x32xf32> to vector<8x32xf32>
    %23 = arith.mulf %20, %22 : vector<8x32xf32>
    %24 = arith.addf %0, %23 : vector<8x32xf32>
    %c0_6 = arith.constant 0 : index
    %c0_7 = arith.constant 0 : index
    %c0_8 = arith.constant 0 : index
    %25 = vector.load %arg5[%c0_6, %c0_7, %c0_8] : memref<5x32x32xf32, #tpu.memory_space<vmem>>, vector<1x32x32xf32>
    %26 = vector.shape_cast %25 : vector<1x32x32xf32> to vector<32x32xf32>
    %cst_9 = arith.constant dense<0.000000e+00> : vector<8x32xf32>
    %27 = tpu.matmul %24, %26, %cst_9 {dimension_numbers = #tpu.dot_dimension_numbers<[1], [0], [0], [1], [0, 0, 1, 1], [], []>} : vector<8x32xf32>, vector<32x32xf32>, vector<8x32xf32> -> vector<8x32xf32>
    %28 = math.tanh %27 : vector<8x32xf32>
    %c0_10 = arith.constant 0 : index
    %c0_11 = arith.constant 0 : index
    %c0_12 = arith.constant 0 : index
    %29 = vector.load %arg6[%c0_10, %c0_11, %c0_12] : memref<5x32x32xf32, #tpu.memory_space<vmem>>, vector<1x32x32xf32>
    %30 = vector.shape_cast %29 : vector<1x32x32xf32> to vector<32x32xf32>
    %cst_13 = arith.constant dense<0.000000e+00> : vector<8x32xf32>
    %31 = tpu.matmul %28, %30, %cst_13 {dimension_numbers = #tpu.dot_dimension_numbers<[1], [0], [0], [1], [0, 0, 1, 1], [], []>} : vector<8x32xf32>, vector<32x32xf32>, vector<8x32xf32> -> vector<8x32xf32>
    %c1 = arith.constant 1 : index
    %c0_14 = arith.constant 0 : index
    %32 = vector.load %arg4[%c1, %c0_14] : memref<6x32xf32, #tpu.memory_space<vmem>>, vector<1x32xf32>
    %33 = vector.broadcast %32 : vector<1x32xf32> to vector<8x32xf32>
    %34 = arith.addf %31, %33 : vector<8x32xf32>
    %35 = arith.mulf %20, %34 : vector<8x32xf32>
    %36 = arith.addf %0, %35 : vector<8x32xf32>
    %c1_15 = arith.constant 1 : index
    %c0_16 = arith.constant 0 : index
    %c0_17 = arith.constant 0 : index
    %37 = vector.load %arg5[%c1_15, %c0_16, %c0_17] : memref<5x32x32xf32, #tpu.memory_space<vmem>>, vector<1x32x32xf32>
    %38 = vector.shape_cast %37 : vector<1x32x32xf32> to vector<32x32xf32>
    %cst_18 = arith.constant dense<0.000000e+00> : vector<8x32xf32>
    %39 = tpu.matmul %24, %38, %cst_18 {dimension_numbers = #tpu.dot_dimension_numbers<[1], [0], [0], [1], [0, 0, 1, 1], [], []>} : vector<8x32xf32>, vector<32x32xf32>, vector<8x32xf32> -> vector<8x32xf32>
    %40 = math.tanh %39 : vector<8x32xf32>
    %c1_19 = arith.constant 1 : index
    %c0_20 = arith.constant 0 : index
    %c0_21 = arith.constant 0 : index
    %41 = vector.load %arg6[%c1_19, %c0_20, %c0_21] : memref<5x32x32xf32, #tpu.memory_space<vmem>>, vector<1x32x32xf32>
    %42 = vector.shape_cast %41 : vector<1x32x32xf32> to vector<32x32xf32>
    %cst_22 = arith.constant dense<0.000000e+00> : vector<8x32xf32>
    %43 = tpu.matmul %40, %42, %cst_22 {dimension_numbers = #tpu.dot_dimension_numbers<[1], [0], [0], [1], [0, 0, 1, 1], [], []>} : vector<8x32xf32>, vector<32x32xf32>, vector<8x32xf32> -> vector<8x32xf32>
    %c2 = arith.constant 2 : index
    %c0_23 = arith.constant 0 : index
    %44 = vector.load %arg4[%c2, %c0_23] : memref<6x32xf32, #tpu.memory_space<vmem>>, vector<1x32xf32>
    %45 = vector.broadcast %44 : vector<1x32xf32> to vector<8x32xf32>
    %46 = arith.addf %43, %45 : vector<8x32xf32>
    %47 = arith.mulf %20, %46 : vector<8x32xf32>
    %48 = arith.addf %0, %47 : vector<8x32xf32>
    %c2_24 = arith.constant 2 : index
    %c0_25 = arith.constant 0 : index
    %c0_26 = arith.constant 0 : index
    %49 = vector.load %arg5[%c2_24, %c0_25, %c0_26] : memref<5x32x32xf32, #tpu.memory_space<vmem>>, vector<1x32x32xf32>
    %50 = vector.shape_cast %49 : vector<1x32x32xf32> to vector<32x32xf32>
    %cst_27 = arith.constant dense<0.000000e+00> : vector<8x32xf32>
    %51 = tpu.matmul %24, %50, %cst_27 {dimension_numbers = #tpu.dot_dimension_numbers<[1], [0], [0], [1], [0, 0, 1, 1], [], []>} : vector<8x32xf32>, vector<32x32xf32>, vector<8x32xf32> -> vector<8x32xf32>
    %52 = math.tanh %51 : vector<8x32xf32>
    %c2_28 = arith.constant 2 : index
    %c0_29 = arith.constant 0 : index
    %c0_30 = arith.constant 0 : index
    %53 = vector.load %arg6[%c2_28, %c0_29, %c0_30] : memref<5x32x32xf32, #tpu.memory_space<vmem>>, vector<1x32x32xf32>
    %54 = vector.shape_cast %53 : vector<1x32x32xf32> to vector<32x32xf32>
    %cst_31 = arith.constant dense<0.000000e+00> : vector<8x32xf32>
    %55 = tpu.matmul %52, %54, %cst_31 {dimension_numbers = #tpu.dot_dimension_numbers<[1], [0], [0], [1], [0, 0, 1, 1], [], []>} : vector<8x32xf32>, vector<32x32xf32>, vector<8x32xf32> -> vector<8x32xf32>
    %c3 = arith.constant 3 : index
    %c0_32 = arith.constant 0 : index
    %56 = vector.load %arg4[%c3, %c0_32] : memref<6x32xf32, #tpu.memory_space<vmem>>, vector<1x32xf32>
    %57 = vector.broadcast %56 : vector<1x32xf32> to vector<8x32xf32>
    %58 = arith.addf %55, %57 : vector<8x32xf32>
    %59 = arith.mulf %20, %58 : vector<8x32xf32>
    %60 = arith.addf %0, %59 : vector<8x32xf32>
    %c3_33 = arith.constant 3 : index
    %c0_34 = arith.constant 0 : index
    %c0_35 = arith.constant 0 : index
    %61 = vector.load %arg5[%c3_33, %c0_34, %c0_35] : memref<5x32x32xf32, #tpu.memory_space<vmem>>, vector<1x32x32xf32>
    %62 = vector.shape_cast %61 : vector<1x32x32xf32> to vector<32x32xf32>
    %cst_36 = arith.constant dense<0.000000e+00> : vector<8x32xf32>
    %63 = tpu.matmul %24, %62, %cst_36 {dimension_numbers = #tpu.dot_dimension_numbers<[1], [0], [0], [1], [0, 0, 1, 1], [], []>} : vector<8x32xf32>, vector<32x32xf32>, vector<8x32xf32> -> vector<8x32xf32>
    %64 = math.tanh %63 : vector<8x32xf32>
    %c3_37 = arith.constant 3 : index
    %c0_38 = arith.constant 0 : index
    %c0_39 = arith.constant 0 : index
    %65 = vector.load %arg6[%c3_37, %c0_38, %c0_39] : memref<5x32x32xf32, #tpu.memory_space<vmem>>, vector<1x32x32xf32>
    %66 = vector.shape_cast %65 : vector<1x32x32xf32> to vector<32x32xf32>
    %cst_40 = arith.constant dense<0.000000e+00> : vector<8x32xf32>
    %67 = tpu.matmul %64, %66, %cst_40 {dimension_numbers = #tpu.dot_dimension_numbers<[1], [0], [0], [1], [0, 0, 1, 1], [], []>} : vector<8x32xf32>, vector<32x32xf32>, vector<8x32xf32> -> vector<8x32xf32>
    %c4 = arith.constant 4 : index
    %c0_41 = arith.constant 0 : index
    %68 = vector.load %arg4[%c4, %c0_41] : memref<6x32xf32, #tpu.memory_space<vmem>>, vector<1x32xf32>
    %69 = vector.broadcast %68 : vector<1x32xf32> to vector<8x32xf32>
    %70 = arith.addf %67, %69 : vector<8x32xf32>
    %71 = arith.mulf %20, %70 : vector<8x32xf32>
    %72 = arith.addf %0, %71 : vector<8x32xf32>
    %c4_42 = arith.constant 4 : index
    %c0_43 = arith.constant 0 : index
    %c0_44 = arith.constant 0 : index
    %73 = vector.load %arg5[%c4_42, %c0_43, %c0_44] : memref<5x32x32xf32, #tpu.memory_space<vmem>>, vector<1x32x32xf32>
    %74 = vector.shape_cast %73 : vector<1x32x32xf32> to vector<32x32xf32>
    %cst_45 = arith.constant dense<0.000000e+00> : vector<8x32xf32>
    %75 = tpu.matmul %24, %74, %cst_45 {dimension_numbers = #tpu.dot_dimension_numbers<[1], [0], [0], [1], [0, 0, 1, 1], [], []>} : vector<8x32xf32>, vector<32x32xf32>, vector<8x32xf32> -> vector<8x32xf32>
    %76 = math.tanh %75 : vector<8x32xf32>
    %c4_46 = arith.constant 4 : index
    %c0_47 = arith.constant 0 : index
    %c0_48 = arith.constant 0 : index
    %77 = vector.load %arg6[%c4_46, %c0_47, %c0_48] : memref<5x32x32xf32, #tpu.memory_space<vmem>>, vector<1x32x32xf32>
    %78 = vector.shape_cast %77 : vector<1x32x32xf32> to vector<32x32xf32>
    %cst_49 = arith.constant dense<0.000000e+00> : vector<8x32xf32>
    %79 = tpu.matmul %76, %78, %cst_49 {dimension_numbers = #tpu.dot_dimension_numbers<[1], [0], [0], [1], [0, 0, 1, 1], [], []>} : vector<8x32xf32>, vector<32x32xf32>, vector<8x32xf32> -> vector<8x32xf32>
    %c5 = arith.constant 5 : index
    %c0_50 = arith.constant 0 : index
    %80 = vector.load %arg4[%c5, %c0_50] : memref<6x32xf32, #tpu.memory_space<vmem>>, vector<1x32xf32>
    %81 = vector.broadcast %80 : vector<1x32xf32> to vector<8x32xf32>
    %82 = arith.addf %79, %81 : vector<8x32xf32>
    %83 = arith.mulf %20, %82 : vector<8x32xf32>
    %84 = arith.addf %0, %83 : vector<8x32xf32>
    %c0_51 = arith.constant 0 : index
    %c0_52 = arith.constant 0 : index
    %85 = vector.load %arg7[%c0_51, %c0_52] : memref<32x32xf32, #tpu.memory_space<vmem>>, vector<32x32xf32>
    %cst_53 = arith.constant dense<0.000000e+00> : vector<8x32xf32>
    %86 = tpu.matmul %72, %85, %cst_53 {dimension_numbers = #tpu.dot_dimension_numbers<[1], [0], [0], [1], [0, 0, 1, 1], [], []>} : vector<8x32xf32>, vector<32x32xf32>, vector<8x32xf32> -> vector<8x32xf32>
    %c0_54 = arith.constant 0 : index
    %c0_55 = arith.constant 0 : index
    %87 = vector.load %arg14[%c0_54, %c0_55] : memref<8x32xf32, #tpu.memory_space<vmem>>, vector<8x32xf32>
    tpu.vector_store %arg14[%c0_54, %c0_55], %86 {strides = array<i32>} : memref<8x32xf32, #tpu.memory_space<vmem>>, vector<8x32xf32>,
    %c0_56 = arith.constant 0 : index
    %c0_57 = arith.constant 0 : index
    %88 = vector.load %arg8[%c0_56, %c0_57] : memref<32x32xf32, #tpu.memory_space<vmem>>, vector<32x32xf32>
    %cst_58 = arith.constant dense<0.000000e+00> : vector<8x32xf32>
    %89 = tpu.matmul %48, %88, %cst_58 {dimension_numbers = #tpu.dot_dimension_numbers<[1], [0], [0], [1], [0, 0, 1, 1], [], []>} : vector<8x32xf32>, vector<32x32xf32>, vector<8x32xf32> -> vector<8x32xf32>
    %c0_59 = arith.constant 0 : index
    %c0_60 = arith.constant 0 : index
    %90 = vector.load %arg15[%c0_59, %c0_60] : memref<8x32xf32, #tpu.memory_space<vmem>>, vector<8x32xf32>
    tpu.vector_store %arg15[%c0_59, %c0_60], %89 {strides = array<i32>} : memref<8x32xf32, #tpu.memory_space<vmem>>, vector<8x32xf32>,
    %c0_61 = arith.constant 0 : index
    %c0_62 = arith.constant 0 : index
    %91 = vector.load %arg9[%c0_61, %c0_62] : memref<32x32xf32, #tpu.memory_space<vmem>>, vector<32x32xf32>
    %cst_63 = arith.constant dense<0.000000e+00> : vector<8x32xf32>
    %92 = tpu.matmul %60, %91, %cst_63 {dimension_numbers = #tpu.dot_dimension_numbers<[1], [0], [0], [1], [0, 0, 1, 1], [], []>} : vector<8x32xf32>, vector<32x32xf32>, vector<8x32xf32> -> vector<8x32xf32>
    %c0_64 = arith.constant 0 : index
    %c0_65 = arith.constant 0 : index
    %93 = vector.load %arg16[%c0_64, %c0_65] : memref<8x32xf32, #tpu.memory_space<vmem>>, vector<8x32xf32>
    tpu.vector_store %arg16[%c0_64, %c0_65], %92 {strides = array<i32>} : memref<8x32xf32, #tpu.memory_space<vmem>>, vector<8x32xf32>,
    %c0_66 = arith.constant 0 : index
    %c0_67 = arith.constant 0 : index
    %94 = vector.load %arg10[%c0_66, %c0_67] : memref<32x32xf32, #tpu.memory_space<vmem>>, vector<32x32xf32>
    %cst_68 = arith.constant dense<0.000000e+00> : vector<8x32xf32>
    %95 = tpu.matmul %84, %94, %cst_68 {dimension_numbers = #tpu.dot_dimension_numbers<[1], [0], [0], [1], [0, 0, 1, 1], [], []>} : vector<8x32xf32>, vector<32x32xf32>, vector<8x32xf32> -> vector<8x32xf32>
    %96 = arith.negf %95 : vector<8x32xf32>
    %97 = math.exp %96 : vector<8x32xf32>
    %cst_69 = arith.constant 1.000000e+00 : f32
    %98 = vector.broadcast %cst_69 : f32 to vector<8x32xf32>
    %99 = arith.addf %98, %97 : vector<8x32xf32>
    %100 = arith.divf %98, %99 : vector<8x32xf32>
    %101 = arith.mulf %95, %100 : vector<8x32xf32>
    %c0_70 = arith.constant 0 : index
    %c0_71 = arith.constant 0 : index
    %102 = vector.load %arg17[%c0_70, %c0_71] : memref<8x32xf32, #tpu.memory_space<vmem>>, vector<8x32xf32>
    tpu.vector_store %arg17[%c0_70, %c0_71], %101 {strides = array<i32>} : memref<8x32xf32, #tpu.memory_space<vmem>>, vector<8x32xf32>,
    %c0_72 = arith.constant 0 : index
    %c0_73 = arith.constant 0 : index
    %103 = vector.load %arg12[%c0_72, %c0_73] : memref<32x64xf32, #tpu.memory_space<vmem>>, vector<32x64xf32>
    %cst_74 = arith.constant dense<0.000000e+00> : vector<8x64xf32>
    %104 = tpu.matmul %36, %103, %cst_74 {dimension_numbers = #tpu.dot_dimension_numbers<[1], [0], [0], [1], [0, 0, 1, 1], [], []>} : vector<8x32xf32>, vector<32x64xf32>, vector<8x64xf32> -> vector<8x64xf32>
    %105 = math.tanh %104 : vector<8x64xf32>
    %c0_75 = arith.constant 0 : index
    %c0_76 = arith.constant 0 : index
    %106 = vector.load %arg13[%c0_75, %c0_76] : memref<64x32xf32, #tpu.memory_space<vmem>>, vector<64x32xf32>
    %cst_77 = arith.constant dense<0.000000e+00> : vector<8x32xf32>
    %107 = tpu.matmul %105, %106, %cst_77 {dimension_numbers = #tpu.dot_dimension_numbers<[1], [0], [0], [1], [0, 0, 1, 1], [], []>} : vector<8x64xf32>, vector<64x32xf32>, vector<8x32xf32> -> vector<8x32xf32>
    %c0_78 = arith.constant 0 : index
    %c0_79 = arith.constant 0 : index
    %108 = vector.load %arg11[%c0_78, %c0_79] : memref<1x32xf32, #tpu.memory_space<vmem>>, vector<1x32xf32>
    %109 = vector.broadcast %108 : vector<1x32xf32> to vector<8x32xf32>
    %110 = arith.addf %107, %109 : vector<8x32xf32>
    %c0_80 = arith.constant 0 : index
    %c0_81 = arith.constant 0 : index
    %111 = vector.load %arg18[%c0_80, %c0_81] : memref<8x32xf32, #tpu.memory_space<vmem>>, vector<8x32xf32>
    tpu.vector_store %arg18[%c0_80, %c0_81], %110 {strides = array<i32>} : memref<8x32xf32, #tpu.memory_space<vmem>>, vector<8x32xf32>,
    return
  }
  func.func @transform_0(%arg0: i32, %arg1: i32) -> (i32, i32) {
    %c0_i32 = arith.constant 0 : i32
    %c0_i32_0 = arith.constant 0 : i32
    return %arg0, %c0_i32 : i32, i32
  }
  func.func @transform_1(%arg0: i32, %arg1: i32) -> (i32, i32, i32) {
    %c0_i32 = arith.constant 0 : i32
    %c0_i32_0 = arith.constant 0 : i32
    %c0_i32_1 = arith.constant 0 : i32
    return %arg0, %c0_i32, %c0_i32_0 : i32, i32, i32
  }
  func.func @transform_2(%arg0: i32, %arg1: i32) -> (i32, i32) {
    %c0_i32 = arith.constant 0 : i32
    %c0_i32_0 = arith.constant 0 : i32
    %c0_i32_1 = arith.constant 0 : i32
    return %c0_i32, %c0_i32_0 : i32, i32
  }
  func.func @transform_3(%arg0: i32, %arg1: i32) -> (i32, i32, i32) {
    %c0_i32 = arith.constant 0 : i32
    %c0_i32_0 = arith.constant 0 : i32
    %c0_i32_1 = arith.constant 0 : i32
    %c0_i32_2 = arith.constant 0 : i32
    return %c0_i32, %c0_i32_0, %c0_i32_1 : i32, i32, i32
  }
  func.func @transform_4(%arg0: i32, %arg1: i32) -> (i32, i32, i32) {
    %c0_i32 = arith.constant 0 : i32
    %c0_i32_0 = arith.constant 0 : i32
    %c0_i32_1 = arith.constant 0 : i32
    %c0_i32_2 = arith.constant 0 : i32
    return %c0_i32, %c0_i32_0, %c0_i32_1 : i32, i32, i32
  }
  func.func @transform_5(%arg0: i32, %arg1: i32) -> (i32, i32) {
    %c0_i32 = arith.constant 0 : i32
    %c0_i32_0 = arith.constant 0 : i32
    return %c0_i32, %arg1 : i32, i32
  }
  func.func @transform_6(%arg0: i32, %arg1: i32) -> (i32, i32) {
    %c0_i32 = arith.constant 0 : i32
    %c0_i32_0 = arith.constant 0 : i32
    return %c0_i32, %arg1 : i32, i32
  }
  func.func @transform_7(%arg0: i32, %arg1: i32) -> (i32, i32) {
    %c0_i32 = arith.constant 0 : i32
    %c0_i32_0 = arith.constant 0 : i32
    return %c0_i32, %arg1 : i32, i32
  }
  func.func @transform_8(%arg0: i32, %arg1: i32) -> (i32, i32) {
    %c0_i32 = arith.constant 0 : i32
    %c0_i32_0 = arith.constant 0 : i32
    return %c0_i32, %arg1 : i32, i32
  }
  func.func @transform_9(%arg0: i32, %arg1: i32) -> (i32, i32) {
    %c0_i32 = arith.constant 0 : i32
    %c0_i32_0 = arith.constant 0 : i32
    return %c0_i32, %arg1 : i32, i32
  }
  func.func @transform_10(%arg0: i32, %arg1: i32) -> (i32, i32) {
    %c0_i32 = arith.constant 0 : i32
    %c0_i32_0 = arith.constant 0 : i32
    %c0_i32_1 = arith.constant 0 : i32
    return %c0_i32, %c0_i32_0 : i32, i32
  }
  func.func @transform_11(%arg0: i32, %arg1: i32) -> (i32, i32) {
    %c0_i32 = arith.constant 0 : i32
    %c0_i32_0 = arith.constant 0 : i32
    return %c0_i32, %arg1 : i32, i32
  }
  func.func @transform_12(%arg0: i32, %arg1: i32) -> (i32, i32) {
    %c0_i32 = arith.constant 0 : i32
    return %arg0, %arg1 : i32, i32
  }
  func.func @transform_13(%arg0: i32, %arg1: i32) -> (i32, i32) {
    %c0_i32 = arith.constant 0 : i32
    return %arg0, %arg1 : i32, i32
  }
  func.func @transform_14(%arg0: i32, %arg1: i32) -> (i32, i32) {
    %c0_i32 = arith.constant 0 : i32
    return %arg0, %arg1 : i32, i32
  }
  func.func @transform_15(%arg0: i32, %arg1: i32) -> (i32, i32) {
    %c0_i32 = arith.constant 0 : i32
    return %arg0, %arg1 : i32, i32
  }
  func.func @transform_16(%arg0: i32, %arg1: i32) -> (i32, i32) {
    %c0_i32 = arith.constant 0 : i32
    return %arg0, %arg1 : i32, i32
  }
}

module attributes {stable_mosaic.version = 11 : i64} {
  func.func @_wkv_gn_kernel(%arg0: i32, %arg1: i32, %arg2: i32, %arg3: memref<8x32xf32, #tpu.memory_space<vmem>>, %arg4: memref<8x32xf32, #tpu.memory_space<vmem>>, %arg5: memref<8x32xf32, #tpu.memory_space<vmem>>, %arg6: memref<8x32xf32, #tpu.memory_space<vmem>>, %arg7: memref<8x32xf32, #tpu.memory_space<vmem>>, %arg8: memref<1x32xf32, #tpu.memory_space<vmem>>, %arg9: memref<1x32xf32, #tpu.memory_space<vmem>>, %arg10: memref<1x32xf32, #tpu.memory_space<vmem>>, %arg11: memref<1x2x16x16xf32, #tpu.memory_space<vmem>>, %arg12: memref<8x32xf32, #tpu.memory_space<vmem>>, %arg13: memref<1x2x16x16xf32, #tpu.memory_space<vmem>>, %arg14: memref<2x16x16xf32, #tpu.memory_space<vmem>>, %arg15: memref<8x32xf32, #tpu.memory_space<vmem>>) attributes {dimension_semantics = [#tpu.dimension_semantics<parallel>, #tpu.dimension_semantics<parallel>, #tpu.dimension_semantics<arbitrary>], iteration_bounds = array<i64: 2, 1, 2>, scalar_prefetch = 0 : i64, scratch_operands = 2 : i64, tpu.core_type = #tpu.core_type<tc>, window_params = [{transform_indices = @transform_0, window_bounds = array<i64: 8, 32>}, {transform_indices = @transform_1, window_bounds = array<i64: 8, 32>}, {transform_indices = @transform_2, window_bounds = array<i64: 8, 32>}, {transform_indices = @transform_3, window_bounds = array<i64: 8, 32>}, {transform_indices = @transform_4, window_bounds = array<i64: 8, 32>}, {transform_indices = @transform_5, window_bounds = array<i64: 1, 32>}, {transform_indices = @transform_6, window_bounds = array<i64: 1, 32>}, {transform_indices = @transform_7, window_bounds = array<i64: 1, 32>}, {transform_indices = @transform_8, window_bounds = array<i64: 1, 2, 16, 16>}, {transform_indices = @transform_9, window_bounds = array<i64: 8, 32>}, {transform_indices = @transform_10, window_bounds = array<i64: 1, 2, 16, 16>}]} {
    %c0_i32 = arith.constant 0 : i32
    %0 = arith.cmpi eq, %arg2, %c0_i32 : i32
    %1 = arith.extui %0 : i1 to i32
    %c0_i32_0 = arith.constant 0 : i32
    %2 = arith.cmpi ne, %1, %c0_i32_0 : i32
    scf.if %2 {
      %c0_63 = arith.constant 0 : index
      %c0_64 = arith.constant 0 : index
      %c0_65 = arith.constant 0 : index
      %c0_66 = arith.constant 0 : index
      %145 = vector.load %arg11[%c0_63, %c0_64, %c0_65, %c0_66] : memref<1x2x16x16xf32, #tpu.memory_space<vmem>>, vector<1x2x16x16xf32>
      %146 = vector.shape_cast %145 : vector<1x2x16x16xf32> to vector<2x16x16xf32>
      %c0_67 = arith.constant 0 : index
      %c0_68 = arith.constant 0 : index
      %c0_69 = arith.constant 0 : index
      %147 = vector.load %arg14[%c0_67, %c0_68, %c0_69] : memref<2x16x16xf32, #tpu.memory_space<vmem>>, vector<2x16x16xf32>
      tpu.vector_store %arg14[%c0_67, %c0_68, %c0_69], %146 {strides = array<i32>} : memref<2x16x16xf32, #tpu.memory_space<vmem>>, vector<2x16x16xf32>,
    } else {
    }
    %c0 = arith.constant 0 : index
    %c0_1 = arith.constant 0 : index
    %3 = vector.load %arg3[%c0, %c0_1] : memref<8x32xf32, #tpu.memory_space<vmem>>, vector<8x32xf32>
    %c0_2 = arith.constant 0 : index
    %c0_3 = arith.constant 0 : index
    %4 = vector.load %arg4[%c0_2, %c0_3] : memref<8x32xf32, #tpu.memory_space<vmem>>, vector<8x32xf32>
    %c0_4 = arith.constant 0 : index
    %c0_5 = arith.constant 0 : index
    %5 = vector.load %arg5[%c0_4, %c0_5] : memref<8x32xf32, #tpu.memory_space<vmem>>, vector<8x32xf32>
    %c0_6 = arith.constant 0 : index
    %c0_7 = arith.constant 0 : index
    %6 = vector.load %arg7[%c0_6, %c0_7] : memref<8x32xf32, #tpu.memory_space<vmem>>, vector<8x32xf32>
    %c0_8 = arith.constant 0 : index
    %c0_9 = arith.constant 0 : index
    %7 = vector.load %arg6[%c0_8, %c0_9] : memref<8x32xf32, #tpu.memory_space<vmem>>, vector<8x32xf32>
    %8 = math.exp %7 : vector<8x32xf32>
    %cst = arith.constant 0.000000e+00 : f32
    %9 = vector.broadcast %cst : f32 to vector<8x32xf32>
    %10 = arith.subf %9, %8 : vector<8x32xf32>
    %11 = tpu.iota {dimensions = array<i32: 0>} : vector<8x8xi32>
    %12 = tpu.iota {dimensions = array<i32: 1>} : vector<8x8xi32>
    %13 = arith.cmpi sge, %11, %12 : vector<8x8xi32>
    %14 = arith.extui %13 : vector<8x8xi1> to vector<8x8xi32>
    %15 = arith.sitofp %14 : vector<8x8xi32> to vector<8x8xf32>
    %16 = arith.cmpi eq, %11, %12 : vector<8x8xi32>
    %17 = arith.extui %16 : vector<8x8xi1> to vector<8x8xi32>
    %18 = arith.sitofp %17 : vector<8x8xi32> to vector<8x8xf32>
    %cst_10 = arith.constant dense<0.000000e+00> : vector<8x32xf32>
    %19 = tpu.matmul %15, %10, %cst_10 {dimension_numbers = #tpu.dot_dimension_numbers<[1], [0], [0], [1], [0, 0, 1, 1], [], []>} : vector<8x8xf32>, vector<8x32xf32>, vector<8x32xf32> -> vector<8x32xf32>
    %20 = arith.subf %19, %10 : vector<8x32xf32>
    %21 = vector.extract_strided_slice %19 {offsets = [7, 0], sizes = [1, 32], strides = [1, 1]} : vector<8x32xf32> to vector<1x32xf32>
    %22 = math.exp %21 : vector<1x32xf32>
    %23 = math.exp %20 : vector<8x32xf32>
    %24 = arith.mulf %3, %23 : vector<8x32xf32>
    %cst_11 = arith.constant 0.000000e+00 : f32
    %25 = vector.broadcast %cst_11 : f32 to vector<8x32xf32>
    %26 = arith.subf %25, %19 : vector<8x32xf32>
    %27 = math.exp %26 : vector<8x32xf32>
    %28 = arith.mulf %4, %27 : vector<8x32xf32>
    %29 = vector.broadcast %22 : vector<1x32xf32> to vector<8x32xf32>
    %30 = arith.mulf %28, %29 : vector<8x32xf32>
    %c0_12 = arith.constant 0 : index
    %c0_13 = arith.constant 0 : index
    %31 = vector.load %arg8[%c0_12, %c0_13] : memref<1x32xf32, #tpu.memory_space<vmem>>, vector<1x32xf32>
    %32 = vector.broadcast %31 : vector<1x32xf32> to vector<8x32xf32>
    %33 = arith.mulf %3, %32 : vector<8x32xf32>
    %34 = arith.mulf %33, %4 : vector<8x32xf32>
    %c0_14 = arith.constant 0 : index
    %c0_15 = arith.constant 0 : index
    %c0_16 = arith.constant 0 : index
    %35 = vector.load %arg14[%c0_14, %c0_15, %c0_16] : memref<2x16x16xf32, #tpu.memory_space<vmem>>, vector<1x16x16xf32>
    %36 = vector.shape_cast %35 : vector<1x16x16xf32> to vector<16x16xf32>
    %37 = vector.extract_strided_slice %24 {offsets = [0, 0], sizes = [8, 16], strides = [1, 1]} : vector<8x32xf32> to vector<8x16xf32>
    %38 = vector.extract_strided_slice %5 {offsets = [0, 0], sizes = [8, 16], strides = [1, 1]} : vector<8x32xf32> to vector<8x16xf32>
    %39 = vector.extract_strided_slice %28 {offsets = [0, 0], sizes = [8, 16], strides = [1, 1]} : vector<8x32xf32> to vector<8x16xf32>
    "tpu.trace_start"() <{level = 10 : i32, message = "ts,us->tu"}> : () -> ()
    %cst_17 = arith.constant dense<0.000000e+00> : vector<8x8xf32>
    %40 = tpu.matmul %37, %39, %cst_17 {dimension_numbers = #tpu.dot_dimension_numbers<[1], [1], [0], [0], [0, 0, 1, 0], [], []>} : vector<8x16xf32>, vector<8x16xf32>, vector<8x8xf32> -> vector<8x8xf32>
    "tpu.trace_stop"() : () -> ()
    %41 = vector.extract_strided_slice %34 {offsets = [0, 0], sizes = [8, 16], strides = [1, 1]} : vector<8x32xf32> to vector<8x16xf32>
    %cst_18 = arith.constant dense<0.000000e+00> : vector<8xf32>
    %42 = vector.multi_reduction <add>, %41, %cst_18 [1] : vector<8x16xf32> to vector<8xf32>
    %43 = vector.shape_cast %42 : vector<8xf32> to vector<8x1xf32>
    %44 = arith.cmpi sgt, %11, %12 : vector<8x8xi32>
    %cst_19 = arith.constant 0.000000e+00 : f32
    %45 = vector.broadcast %cst_19 : f32 to vector<8x8xf32>
    %46 = arith.select %44, %40, %45 : vector<8x8xi1>, vector<8x8xf32>
    %47 = vector.broadcast %43 : vector<8x1xf32> to vector<8x8xf32>
    %48 = arith.mulf %18, %47 : vector<8x8xf32>
    %49 = arith.addf %46, %48 : vector<8x8xf32>
    %cst_20 = arith.constant dense<0.000000e+00> : vector<8x16xf32>
    %50 = tpu.matmul %49, %38, %cst_20 {dimension_numbers = #tpu.dot_dimension_numbers<[1], [0], [0], [1], [0, 0, 1, 1], [], []>} : vector<8x8xf32>, vector<8x16xf32>, vector<8x16xf32> -> vector<8x16xf32>
    "tpu.trace_start"() <{level = 10 : i32, message = "ti,ji->tj"}> : () -> ()
    %cst_21 = arith.constant dense<0.000000e+00> : vector<8x16xf32>
    %51 = tpu.matmul %37, %36, %cst_21 {dimension_numbers = #tpu.dot_dimension_numbers<[1], [1], [0], [0], [0, 0, 1, 0], [], []>} : vector<8x16xf32>, vector<16x16xf32>, vector<8x16xf32> -> vector<8x16xf32>
    "tpu.trace_stop"() : () -> ()
    %52 = arith.addf %50, %51 : vector<8x16xf32>
    %53 = vector.extract_strided_slice %22 {offsets = [0, 0], sizes = [1, 16], strides = [1, 1]} : vector<1x32xf32> to vector<1x16xf32>
    %54 = vector.broadcast %53 : vector<1x16xf32> to vector<16x16xf32>
    %55 = arith.mulf %36, %54 : vector<16x16xf32>
    %56 = vector.extract_strided_slice %30 {offsets = [0, 0], sizes = [8, 16], strides = [1, 1]} : vector<8x32xf32> to vector<8x16xf32>
    "tpu.trace_start"() <{level = 10 : i32, message = "tj,ti->ji"}> : () -> ()
    %cst_22 = arith.constant dense<0.000000e+00> : vector<16x16xf32>
    %57 = tpu.matmul %38, %56, %cst_22 {dimension_numbers = #tpu.dot_dimension_numbers<[0], [0], [1], [1], [0, 1, 1, 1], [], []>} : vector<8x16xf32>, vector<8x16xf32>, vector<16x16xf32> -> vector<16x16xf32>
    "tpu.trace_stop"() : () -> ()
    %58 = arith.addf %55, %57 : vector<16x16xf32>
    %c0_23 = arith.constant 0 : index
    %c0_24 = arith.constant 0 : index
    %c0_25 = arith.constant 0 : index
    %59 = vector.load %arg14[%c0_23, %c0_24, %c0_25] : memref<2x16x16xf32, #tpu.memory_space<vmem>>, vector<1x16x16xf32>
    %60 = vector.shape_cast %59 : vector<1x16x16xf32> to vector<16x16xf32>
    %61 = vector.shape_cast %58 : vector<16x16xf32> to vector<1x16x16xf32>
    tpu.vector_store %arg14[%c0_23, %c0_24, %c0_25], %61 {strides = array<i32>} : memref<2x16x16xf32, #tpu.memory_space<vmem>>, vector<1x16x16xf32>,
    %cst_26 = arith.constant dense<0.000000e+00> : vector<8xf32>
    %62 = vector.multi_reduction <add>, %52, %cst_26 [1] : vector<8x16xf32> to vector<8xf32>
    %63 = vector.shape_cast %62 : vector<8xf32> to vector<8x1xf32>
    %cst_27 = arith.constant 1.600000e+01 : f32
    %64 = vector.broadcast %cst_27 : f32 to vector<8x1xf32>
    %65 = arith.divf %63, %64 : vector<8x1xf32>
    %66 = vector.broadcast %65 : vector<8x1xf32> to vector<8x16xf32>
    %67 = arith.subf %52, %66 : vector<8x16xf32>
    %68 = arith.mulf %67, %67 : vector<8x16xf32>
    %cst_28 = arith.constant dense<0.000000e+00> : vector<8xf32>
    %69 = vector.multi_reduction <add>, %68, %cst_28 [1] : vector<8x16xf32> to vector<8xf32>
    %70 = vector.shape_cast %69 : vector<8xf32> to vector<8x1xf32>
    %cst_29 = arith.constant 1.600000e+01 : f32
    %71 = vector.broadcast %cst_29 : f32 to vector<8x1xf32>
    %72 = arith.divf %70, %71 : vector<8x1xf32>
    %73 = vector.broadcast %65 : vector<8x1xf32> to vector<8x16xf32>
    %74 = arith.subf %52, %73 : vector<8x16xf32>
    %cst_30 = arith.constant 6.400000e-04 : f32
    %75 = vector.broadcast %cst_30 : f32 to vector<8x1xf32>
    %76 = arith.addf %72, %75 : vector<8x1xf32>
    %77 = math.rsqrt %76 : vector<8x1xf32>
    %78 = vector.broadcast %77 : vector<8x1xf32> to vector<8x16xf32>
    %79 = arith.mulf %74, %78 : vector<8x16xf32>
    %c0_31 = arith.constant 0 : index
    %c0_32 = arith.constant 0 : index
    %80 = vector.load %arg9[%c0_31, %c0_32] : memref<1x32xf32, #tpu.memory_space<vmem>>, vector<1x16xf32>
    %81 = vector.broadcast %80 : vector<1x16xf32> to vector<8x16xf32>
    %82 = arith.mulf %79, %81 : vector<8x16xf32>
    %c0_33 = arith.constant 0 : index
    %c0_34 = arith.constant 0 : index
    %83 = vector.load %arg10[%c0_33, %c0_34] : memref<1x32xf32, #tpu.memory_space<vmem>>, vector<1x16xf32>
    %84 = vector.broadcast %83 : vector<1x16xf32> to vector<8x16xf32>
    %85 = arith.addf %82, %84 : vector<8x16xf32>
    %c0_35 = arith.constant 0 : index
    %c0_36 = arith.constant 0 : index
    %86 = vector.load %arg15[%c0_35, %c0_36] : memref<8x32xf32, #tpu.memory_space<vmem>>, vector<8x16xf32>
    tpu.vector_store %arg15[%c0_35, %c0_36], %85 {strides = array<i32>} : memref<8x32xf32, #tpu.memory_space<vmem>>, vector<8x16xf32>,
    %c1 = arith.constant 1 : index
    %c0_37 = arith.constant 0 : index
    %c0_38 = arith.constant 0 : index
    %87 = vector.load %arg14[%c1, %c0_37, %c0_38] : memref<2x16x16xf32, #tpu.memory_space<vmem>>, vector<1x16x16xf32>
    %88 = vector.shape_cast %87 : vector<1x16x16xf32> to vector<16x16xf32>
    %89 = vector.extract_strided_slice %24 {offsets = [0, 16], sizes = [8, 16], strides = [1, 1]} : vector<8x32xf32> to vector<8x16xf32>
    %90 = vector.extract_strided_slice %5 {offsets = [0, 16], sizes = [8, 16], strides = [1, 1]} : vector<8x32xf32> to vector<8x16xf32>
    %91 = vector.extract_strided_slice %28 {offsets = [0, 16], sizes = [8, 16], strides = [1, 1]} : vector<8x32xf32> to vector<8x16xf32>
    "tpu.trace_start"() <{level = 10 : i32, message = "ts,us->tu"}> : () -> ()
    %cst_39 = arith.constant dense<0.000000e+00> : vector<8x8xf32>
    %92 = tpu.matmul %89, %91, %cst_39 {dimension_numbers = #tpu.dot_dimension_numbers<[1], [1], [0], [0], [0, 0, 1, 0], [], []>} : vector<8x16xf32>, vector<8x16xf32>, vector<8x8xf32> -> vector<8x8xf32>
    "tpu.trace_stop"() : () -> ()
    %93 = vector.extract_strided_slice %34 {offsets = [0, 16], sizes = [8, 16], strides = [1, 1]} : vector<8x32xf32> to vector<8x16xf32>
    %cst_40 = arith.constant dense<0.000000e+00> : vector<8xf32>
    %94 = vector.multi_reduction <add>, %93, %cst_40 [1] : vector<8x16xf32> to vector<8xf32>
    %95 = vector.shape_cast %94 : vector<8xf32> to vector<8x1xf32>
    %96 = arith.cmpi sgt, %11, %12 : vector<8x8xi32>
    %cst_41 = arith.constant 0.000000e+00 : f32
    %97 = vector.broadcast %cst_41 : f32 to vector<8x8xf32>
    %98 = arith.select %96, %92, %97 : vector<8x8xi1>, vector<8x8xf32>
    %99 = vector.broadcast %95 : vector<8x1xf32> to vector<8x8xf32>
    %100 = arith.mulf %18, %99 : vector<8x8xf32>
    %101 = arith.addf %98, %100 : vector<8x8xf32>
    %cst_42 = arith.constant dense<0.000000e+00> : vector<8x16xf32>
    %102 = tpu.matmul %101, %90, %cst_42 {dimension_numbers = #tpu.dot_dimension_numbers<[1], [0], [0], [1], [0, 0, 1, 1], [], []>} : vector<8x8xf32>, vector<8x16xf32>, vector<8x16xf32> -> vector<8x16xf32>
    "tpu.trace_start"() <{level = 10 : i32, message = "ti,ji->tj"}> : () -> ()
    %cst_43 = arith.constant dense<0.000000e+00> : vector<8x16xf32>
    %103 = tpu.matmul %89, %88, %cst_43 {dimension_numbers = #tpu.dot_dimension_numbers<[1], [1], [0], [0], [0, 0, 1, 0], [], []>} : vector<8x16xf32>, vector<16x16xf32>, vector<8x16xf32> -> vector<8x16xf32>
    "tpu.trace_stop"() : () -> ()
    %104 = arith.addf %102, %103 : vector<8x16xf32>
    %105 = vector.extract_strided_slice %22 {offsets = [0, 16], sizes = [1, 16], strides = [1, 1]} : vector<1x32xf32> to vector<1x16xf32>
    %106 = vector.broadcast %105 : vector<1x16xf32> to vector<16x16xf32>
    %107 = arith.mulf %88, %106 : vector<16x16xf32>
    %108 = vector.extract_strided_slice %30 {offsets = [0, 16], sizes = [8, 16], strides = [1, 1]} : vector<8x32xf32> to vector<8x16xf32>
    "tpu.trace_start"() <{level = 10 : i32, message = "tj,ti->ji"}> : () -> ()
    %cst_44 = arith.constant dense<0.000000e+00> : vector<16x16xf32>
    %109 = tpu.matmul %90, %108, %cst_44 {dimension_numbers = #tpu.dot_dimension_numbers<[0], [0], [1], [1], [0, 1, 1, 1], [], []>} : vector<8x16xf32>, vector<8x16xf32>, vector<16x16xf32> -> vector<16x16xf32>
    "tpu.trace_stop"() : () -> ()
    %110 = arith.addf %107, %109 : vector<16x16xf32>
    %c1_45 = arith.constant 1 : index
    %c0_46 = arith.constant 0 : index
    %c0_47 = arith.constant 0 : index
    %111 = vector.load %arg14[%c1_45, %c0_46, %c0_47] : memref<2x16x16xf32, #tpu.memory_space<vmem>>, vector<1x16x16xf32>
    %112 = vector.shape_cast %111 : vector<1x16x16xf32> to vector<16x16xf32>
    %113 = vector.shape_cast %110 : vector<16x16xf32> to vector<1x16x16xf32>
    tpu.vector_store %arg14[%c1_45, %c0_46, %c0_47], %113 {strides = array<i32>} : memref<2x16x16xf32, #tpu.memory_space<vmem>>, vector<1x16x16xf32>,
    %cst_48 = arith.constant dense<0.000000e+00> : vector<8xf32>
    %114 = vector.multi_reduction <add>, %104, %cst_48 [1] : vector<8x16xf32> to vector<8xf32>
    %115 = vector.shape_cast %114 : vector<8xf32> to vector<8x1xf32>
    %cst_49 = arith.constant 1.600000e+01 : f32
    %116 = vector.broadcast %cst_49 : f32 to vector<8x1xf32>
    %117 = arith.divf %115, %116 : vector<8x1xf32>
    %118 = vector.broadcast %117 : vector<8x1xf32> to vector<8x16xf32>
    %119 = arith.subf %104, %118 : vector<8x16xf32>
    %120 = arith.mulf %119, %119 : vector<8x16xf32>
    %cst_50 = arith.constant dense<0.000000e+00> : vector<8xf32>
    %121 = vector.multi_reduction <add>, %120, %cst_50 [1] : vector<8x16xf32> to vector<8xf32>
    %122 = vector.shape_cast %121 : vector<8xf32> to vector<8x1xf32>
    %cst_51 = arith.constant 1.600000e+01 : f32
    %123 = vector.broadcast %cst_51 : f32 to vector<8x1xf32>
    %124 = arith.divf %122, %123 : vector<8x1xf32>
    %125 = vector.broadcast %117 : vector<8x1xf32> to vector<8x16xf32>
    %126 = arith.subf %104, %125 : vector<8x16xf32>
    %cst_52 = arith.constant 6.400000e-04 : f32
    %127 = vector.broadcast %cst_52 : f32 to vector<8x1xf32>
    %128 = arith.addf %124, %127 : vector<8x1xf32>
    %129 = math.rsqrt %128 : vector<8x1xf32>
    %130 = vector.broadcast %129 : vector<8x1xf32> to vector<8x16xf32>
    %131 = arith.mulf %126, %130 : vector<8x16xf32>
    %c0_53 = arith.constant 0 : index
    %c16 = arith.constant 16 : index
    %132 = vector.load %arg9[%c0_53, %c16] : memref<1x32xf32, #tpu.memory_space<vmem>>, vector<1x16xf32>
    %133 = vector.broadcast %132 : vector<1x16xf32> to vector<8x16xf32>
    %134 = arith.mulf %131, %133 : vector<8x16xf32>
    %c0_54 = arith.constant 0 : index
    %c16_55 = arith.constant 16 : index
    %135 = vector.load %arg10[%c0_54, %c16_55] : memref<1x32xf32, #tpu.memory_space<vmem>>, vector<1x16xf32>
    %136 = vector.broadcast %135 : vector<1x16xf32> to vector<8x16xf32>
    %137 = arith.addf %134, %136 : vector<8x16xf32>
    %c0_56 = arith.constant 0 : index
    %c16_57 = arith.constant 16 : index
    %138 = vector.load %arg15[%c0_56, %c16_57] : memref<8x32xf32, #tpu.memory_space<vmem>>, vector<8x16xf32>
    tpu.vector_store %arg15[%c0_56, %c16_57], %137 {strides = array<i32>} : memref<8x32xf32, #tpu.memory_space<vmem>>, vector<8x16xf32>,
    %c0_58 = arith.constant 0 : index
    %c0_59 = arith.constant 0 : index
    %139 = vector.load %arg15[%c0_58, %c0_59] : memref<8x32xf32, #tpu.memory_space<vmem>>, vector<8x32xf32>
    %140 = arith.mulf %139, %6 : vector<8x32xf32>
    %c0_60 = arith.constant 0 : index
    %c0_61 = arith.constant 0 : index
    %141 = vector.load %arg12[%c0_60, %c0_61] : memref<8x32xf32, #tpu.memory_space<vmem>>, vector<8x32xf32>
    tpu.vector_store %arg12[%c0_60, %c0_61], %140 {strides = array<i32>} : memref<8x32xf32, #tpu.memory_space<vmem>>, vector<8x32xf32>,
    %c1_i32 = arith.constant 1 : i32
    %142 = arith.cmpi eq, %arg2, %c1_i32 : i32
    %143 = arith.extui %142 : i1 to i32
    %c0_i32_62 = arith.constant 0 : i32
    %144 = arith.cmpi ne, %143, %c0_i32_62 : i32
    scf.if %144 {
      %c0_63 = arith.constant 0 : index
      %c0_64 = arith.constant 0 : index
      %c0_65 = arith.constant 0 : index
      %145 = vector.load %arg14[%c0_63, %c0_64, %c0_65] : memref<2x16x16xf32, #tpu.memory_space<vmem>>, vector<2x16x16xf32>
      %c0_66 = arith.constant 0 : index
      %c0_67 = arith.constant 0 : index
      %c0_68 = arith.constant 0 : index
      %c0_69 = arith.constant 0 : index
      %146 = vector.load %arg13[%c0_66, %c0_67, %c0_68, %c0_69] : memref<1x2x16x16xf32, #tpu.memory_space<vmem>>, vector<1x2x16x16xf32>
      %147 = vector.shape_cast %146 : vector<1x2x16x16xf32> to vector<2x16x16xf32>
      %148 = vector.shape_cast %145 : vector<2x16x16xf32> to vector<1x2x16x16xf32>
      tpu.vector_store %arg13[%c0_66, %c0_67, %c0_68, %c0_69], %148 {strides = array<i32>} : memref<1x2x16x16xf32, #tpu.memory_space<vmem>>, vector<1x2x16x16xf32>,
    } else {
    }
    return
  }
  func.func @transform_0(%arg0: i32, %arg1: i32, %arg2: i32) -> (i32, i32) {
    %c2_i32 = arith.constant 2 : i32
    %0 = arith.muli %arg0, %c2_i32 : i32
    %1 = arith.addi %0, %arg2 : i32
    %c0_i32 = arith.constant 0 : i32
    return %1, %arg1 : i32, i32
  }
  func.func @transform_1(%arg0: i32, %arg1: i32, %arg2: i32) -> (i32, i32) {
    %c2_i32 = arith.constant 2 : i32
    %0 = arith.muli %arg0, %c2_i32 : i32
    %1 = arith.addi %0, %arg2 : i32
    %c0_i32 = arith.constant 0 : i32
    return %1, %arg1 : i32, i32
  }
  func.func @transform_2(%arg0: i32, %arg1: i32, %arg2: i32) -> (i32, i32) {
    %c2_i32 = arith.constant 2 : i32
    %0 = arith.muli %arg0, %c2_i32 : i32
    %1 = arith.addi %0, %arg2 : i32
    %c0_i32 = arith.constant 0 : i32
    return %1, %arg1 : i32, i32
  }
  func.func @transform_3(%arg0: i32, %arg1: i32, %arg2: i32) -> (i32, i32) {
    %c2_i32 = arith.constant 2 : i32
    %0 = arith.muli %arg0, %c2_i32 : i32
    %1 = arith.addi %0, %arg2 : i32
    %c0_i32 = arith.constant 0 : i32
    return %1, %arg1 : i32, i32
  }
  func.func @transform_4(%arg0: i32, %arg1: i32, %arg2: i32) -> (i32, i32) {
    %c2_i32 = arith.constant 2 : i32
    %0 = arith.muli %arg0, %c2_i32 : i32
    %1 = arith.addi %0, %arg2 : i32
    %c0_i32 = arith.constant 0 : i32
    return %1, %arg1 : i32, i32
  }
  func.func @transform_5(%arg0: i32, %arg1: i32, %arg2: i32) -> (i32, i32) {
    %c0_i32 = arith.constant 0 : i32
    %c0_i32_0 = arith.constant 0 : i32
    return %c0_i32, %arg1 : i32, i32
  }
  func.func @transform_6(%arg0: i32, %arg1: i32, %arg2: i32) -> (i32, i32) {
    %c0_i32 = arith.constant 0 : i32
    %c0_i32_0 = arith.constant 0 : i32
    return %c0_i32, %arg1 : i32, i32
  }
  func.func @transform_7(%arg0: i32, %arg1: i32, %arg2: i32) -> (i32, i32) {
    %c0_i32 = arith.constant 0 : i32
    %c0_i32_0 = arith.constant 0 : i32
    return %c0_i32, %arg1 : i32, i32
  }
  func.func @transform_8(%arg0: i32, %arg1: i32, %arg2: i32) -> (i32, i32, i32, i32) {
    %c0_i32 = arith.constant 0 : i32
    %c0_i32_0 = arith.constant 0 : i32
    %c0_i32_1 = arith.constant 0 : i32
    return %arg0, %arg1, %c0_i32, %c0_i32_0 : i32, i32, i32, i32
  }
  func.func @transform_9(%arg0: i32, %arg1: i32, %arg2: i32) -> (i32, i32) {
    %c2_i32 = arith.constant 2 : i32
    %0 = arith.muli %arg0, %c2_i32 : i32
    %1 = arith.addi %0, %arg2 : i32
    %c0_i32 = arith.constant 0 : i32
    return %1, %arg1 : i32, i32
  }
  func.func @transform_10(%arg0: i32, %arg1: i32, %arg2: i32) -> (i32, i32, i32, i32) {
    %c0_i32 = arith.constant 0 : i32
    %c0_i32_0 = arith.constant 0 : i32
    %c0_i32_1 = arith.constant 0 : i32
    return %arg0, %arg1, %c0_i32, %c0_i32_0 : i32, i32, i32, i32
  }
}

</mosaic_0001>

<llo_original>
// kernel: rwkv6_attention_forward.5
$region0: #{rwkv6_attention_forward.5}
  #allocation0 [shape = 'u32[]', space=smem, size = 0x4, offset = 0x4, fixed_abs, tag = 'smem constant byte address 0x4 - core index']
  #allocation1 [shape = 'u32[144,128]{1,0:T(1,128)}', space=vmem, size = 0x12000, scoped, tag = 'internal scratch']
  #allocation2 [shape = 'f32[8,32]{1,0:T(8,128)}', space=vmem, size = 0x1000, scoped, tag = 'scratch operand']
  %s0 = inlined_call_operand.vmem [shape: f32[32,32], index: 0, kind: input, shape index: {}]
  %s1 = inlined_call_operand.vmem [shape: f32[32,32], index: 1, kind: input, shape index: {}]
  %s2 = inlined_call_operand.hbm [shape: f32[32,32], index: 2, kind: output, shape index: {}]
  %s3 = sld [smem:[#allocation0]]
  $region49: #{rwkv6_attention_forward.5} parent=0
    _
  %s5 = ssub.s32 1, %s3
  %s6 = scalar_select 0, %s5, %s3
  $region1: #{rwkv6_attention_forward.5} parent=0
    #allocation3 [shape = 'u8[8192]{0}', space=vmem, size = 0x2000, scoped, tag = 'output window, operand 0']
    #allocation4 [shape = 's32[2]{0}', space=sflag, size = 0x8, scoped, tag = 'scoped memory for rwkv6_attention_forward.5']
    %7 = vsyncpa [#allocation4], 0
    %s8 = scalar_lea.sflag [#allocation4], 1
    %9 = vsyncpa %s8, 0
    loop: start=0, step=1, limit=6
    $region2: #{rwkv6_attention_forward.5} parent=1 // loop_pre_header
      _
    $region3: #{rwkv6_attention_forward.5} parent=1 // loop_header
      %s11 = sphi 0, %s15
      %p12 = scmp.ge.s32.totalorder %s11, 6
      %s18 = sphi 0, %s37
      %s19 = sphi 0, %s33
      %s20 = sphi 0, %s29
      %s21 = sphi 0, %s18
      %s22 = sphi 0, %s19
      %s23 = sphi 0, %s20
      %s24 = sphi 0, %s21
      %s25 = sphi 0, %s22
      %s26 = sphi 0, %s23
      %s42 = sphi 0, %s44
      %s45 = sphi 0, %s42
      %s46 = sphi 0, %s45
      %s62 = sphi 0, %s46
      %s70 = sphi 0, %s72
      %s73 = sphi 0, %s70
      %s74 = sphi 0, %s73
      %s90 = sphi 0, %s74
      %s98 = sphi 0, %s100
      %s101 = sphi 0, %s98
      %s102 = sphi 0, %s101
      %s118 = sphi 0, %s102
    $region4: #{rwkv6_attention_forward.5} parent=1 // loop_header_branch
      %14 = sbr.rel (%p12) target = $region8
    $region5: #{rwkv6_attention_forward.5} parent=1 // loop_body
      %s16 = ssub.s32 %s11, 1
      %s17 = ssub.s32 %s11, 2
      %s27 = sadd.s32 1, %s20
      %p28 = scmp.ge.s32.totalorder %s27, 1
      %s29 = scalar_select %p28, 0, %s27
      %s30 = sadd.s32 1, %s19
      %s31 = scalar_select %p28, %s30, %s19
      %p32 = scmp.ge.s32.totalorder %s31, 1
      %s33 = scalar_select %p32, 0, %s31
      %s34 = sadd.s32 1, %s18
      %s35 = scalar_select %p32, %s34, %s18
      %p36 = scmp.ge.s32.totalorder %s35, 4
      %s37 = scalar_select %p36, 0, %s35
      %s38 = ssub.s32 %s18, %s37
      %s39 = ssub.s32 %s20, %s29
      %s40 = sor.u32 %s38, %s39
      %p41 = scmp.eq.s32.totalorder %s40, 0
      %s43 = sadd.s32 %s42, 1
      %s44 = scalar_select %p41, %s42, %s43
      %p47 = pneg %p41
      %p48 = scmp.eq.s32.totalorder %s11, 3
      %p49 = por %p47, %p48
      %p50 = scmp.ne.s32.totalorder %s42, %s45
      %p51 = scmp.eq.s32.totalorder %s11, 0
      %p52 = por %p50, %p51
      %p53 = scmp.ne.s32.totalorder %s42, %s45
      %p54 = scmp.eq.s32.totalorder %s16, 3
      %p55 = por %p53, %p54
      %p56 = scmp.ne.s32.totalorder %s45, %s46
      %p57 = scmp.eq.s32.totalorder %s16, 0
      %p58 = por %p56, %p57
      %p59 = scmp.ne.s32.totalorder %s45, %s46
      %p60 = scmp.eq.s32.totalorder %s17, 3
      %p61 = por %p59, %p60
      %p63 = scmp.ne.s32.totalorder %s46, %s62
      %p64 = scmp.eq.s32.totalorder %s17, 0
      %p65 = por %p63, %p64
      %s66 = ssub.s32 %s20, %s29
      %s67 = ssub.s32 %s19, %s33
      %s68 = sor.u32 %s66, %s67
      %p69 = scmp.eq.s32.totalorder %s68, 0
      %s71 = sadd.s32 %s70, 1
      %s72 = scalar_select %p69, %s70, %s71
      %p75 = pneg %p69
      %p76 = scmp.eq.s32.totalorder %s11, 3
      %p77 = por %p75, %p76
      %p78 = scmp.ne.s32.totalorder %s70, %s73
      %p79 = scmp.eq.s32.totalorder %s11, 0
      %p80 = por %p78, %p79
      %p81 = scmp.ne.s32.totalorder %s70, %s73
      %p82 = scmp.eq.s32.totalorder %s16, 3
      %p83 = por %p81, %p82
      %p84 = scmp.ne.s32.totalorder %s73, %s74
      %p85 = scmp.eq.s32.totalorder %s16, 0
      %p86 = por %p84, %p85
      %p87 = scmp.ne.s32.totalorder %s73, %s74
      %p88 = scmp.eq.s32.totalorder %s17, 3
      %p89 = por %p87, %p88
      %p91 = scmp.ne.s32.totalorder %s74, %s90
      %p92 = scmp.eq.s32.totalorder %s17, 0
      %p93 = por %p91, %p92
      %s94 = ssub.s32 %s18, %s37
      %s95 = ssub.s32 %s19, %s33
      %s96 = sor.u32 %s94, %s95
      %p97 = scmp.eq.s32.totalorder %s96, 0
      %s99 = sadd.s32 %s98, 1
      %s100 = scalar_select %p97, %s98, %s99
      %p103 = pneg %p97
      %p104 = scmp.eq.s32.totalorder %s11, 3
      %p105 = por %p103, %p104
      %p106 = scmp.ne.s32.totalorder %s98, %s101
      %p107 = scmp.eq.s32.totalorder %s11, 0
      %p108 = por %p106, %p107
      %p109 = scmp.ne.s32.totalorder %s98, %s101
      %p110 = scmp.eq.s32.totalorder %s16, 3
      %p111 = por %p109, %p110
      %p112 = scmp.ne.s32.totalorder %s101, %s102
      %p113 = scmp.eq.s32.totalorder %s16, 0
      %p114 = por %p112, %p113
      %p115 = scmp.ne.s32.totalorder %s101, %s102
      %p116 = scmp.eq.s32.totalorder %s17, 3
      %p117 = por %p115, %p116
      %p119 = scmp.ne.s32.totalorder %s102, %s118
      %p120 = scmp.eq.s32.totalorder %s17, 0
      %p121 = por %p119, %p120
      %p122 = scmp.le.s32.totalorder 1, %s11
      %p123 = scmp.lt.s32.totalorder %s11, 5
      %p124 = pnand %p122, %p123
      %p125 = pneg %p124
      // Predicated region
      $region9: #{rwkv6_attention_forward.5} parent=5 // pred_check
        _
      $region10: #{rwkv6_attention_forward.5} parent=5 // pred_check_branch
        %127 = sbr.rel (%p124) target = $region12
      $region11: #{rwkv6_attention_forward.5} parent=5 // pred_region
        %s128 = ssub.s32 %s11, 1
        // Predicated region
        $region13: #{rwkv6_attention_forward.5} parent=11 // pred_check
          %p129 = pneg %p86
        $region14: #{rwkv6_attention_forward.5} parent=11 // pred_check_branch
          %131 = sbr.rel (%p129) target = $region16
        $region15: #{rwkv6_attention_forward.5} parent=11 // pred_region
          %s132 = smul.u32 4, %s23
          %p133 = scmp.lt.s32.totalorder %s132, 3
          %s134 = scalar_select %p133, %s132, 3
          %p135 = scmp.lt.s32.totalorder %s22, 0
          %s136 = scalar_select %p135, %s22, 0
          %s137 = sadd.s32 %s136, %s134
          %s138 = smul.addr %s137, 8
          %s139 = scalar_lea.vmem %s1, %s138
          %s140 = smul.u32 4, %s23
        $region16: #{rwkv6_attention_forward.5} parent=11 // pred_fallthru
          _
      $region12: #{rwkv6_attention_forward.5} parent=5 // pred_fallthru
        _
      %p141 = scmp.lt.s32.totalorder %s11, 4
      // Predicated region
      $region17: #{rwkv6_attention_forward.5} parent=5 // pred_check
        %p142 = pneg %p141
      $region18: #{rwkv6_attention_forward.5} parent=5 // pred_check_branch
        %144 = sbr.rel (%p142) target = $region20
      $region19: #{rwkv6_attention_forward.5} parent=5 // pred_region
        // Predicated region
        $region21: #{rwkv6_attention_forward.5} parent=19 // pred_check
          %p145 = pneg %p52
        $region22: #{rwkv6_attention_forward.5} parent=19 // pred_check_branch
          %147 = sbr.rel (%p145) target = $region24
        $region23: #{rwkv6_attention_forward.5} parent=19 // pred_region
          %p148 = scmp.lt.s32.totalorder %s18, 3
          %s149 = scalar_select %p148, %s18, 3
          %p150 = scmp.lt.s32.totalorder %s20, 0
          %s151 = scalar_select %p150, %s20, 0
          %s152 = sadd.s32 %s151, %s149
          %s153 = smul.addr %s152, 8
          %s154 = scalar_lea.vmem %s0, %s153
        $region24: #{rwkv6_attention_forward.5} parent=19 // pred_fallthru
          _
      $region20: #{rwkv6_attention_forward.5} parent=5 // pred_fallthru
        _
      %p155 = scmp.le.s32.totalorder 1, %s11
      %p156 = scmp.lt.s32.totalorder %s11, 5
      %p157 = pnand %p155, %p156
      %p158 = pneg %p157
      // Predicated region
      $region25: #{rwkv6_attention_forward.5} parent=5 // pred_check
        _
      $region26: #{rwkv6_attention_forward.5} parent=5 // pred_check_branch
        %160 = sbr.rel (%p157) target = $region28
      $region27: #{rwkv6_attention_forward.5} parent=5 // pred_region
        %s161 = ssub.s32 %s11, 1
        %p162 = scmp.lt.s32.totalorder %s21, 3
        %s163 = scalar_select %p162, %s21, 3
        %p164 = scmp.lt.s32.totalorder %s23, 0
        %s165 = scalar_select %p164, %s23, 0
        %s166 = sadd.s32 %s165, %s163
        %s167 = smul.addr %s166, 8
        %s168 = scalar_lea.vmem %s0, %s167
        %p169 = pneg %p58
        %p170 = pneg %p55
        %s171 = smul.u32 4, %s23
        %p172 = scmp.lt.s32.totalorder %s171, 3
        %s173 = scalar_select %p172, %s171, 3
        %p174 = scmp.lt.s32.totalorder %s22, 0
        %s175 = scalar_select %p174, %s22, 0
        %s176 = sadd.s32 %s175, %s173
        %s177 = smul.addr %s176, 8
        %s178 = scalar_lea.vmem %s1, %s177
        %p179 = pneg %p86
        %p180 = pneg %p83
        %p181 = pneg %p114
        %p182 = pneg %p111
        %s183 = sand.u32 %s101, 1
        %s184 = scalar_lea.sflag [#allocation4], %s183
        %s185 = sand.u32 %s101, 1
        %s186 = smul.addr %s185, 8
        %s187 = scalar_lea.vmem [#allocation3], %s186
        %p188 = scmp.lt.s32.totalorder %s21, 3
        %s189 = scalar_select %p188, %s21, 3
        %p190 = scmp.lt.s32.totalorder %s23, 0
        %s191 = scalar_select %p190, %s23, 0
        %s192 = sadd.s32 %s191, %s189
        %s193 = smul.addr %s192, 8
        %s194 = scalar_lea.vmem %s0, %s193
        %s195 = smul.u32 4, %s23
        %p196 = scmp.lt.s32.totalorder %s195, 3
        %s197 = scalar_select %p196, %s195, 3
        %p198 = scmp.lt.s32.totalorder %s22, 0
        %s199 = scalar_select %p198, %s22, 0
        %s200 = sadd.s32 %s199, %s197
        %s201 = smul.addr %s200, 8
        %s202 = scalar_lea.vmem %s1, %s201
        %s203 = smul.u32 4, %s23
        %p204 = scmp.eq.s32.totalorder %s23, 0
        // Predicated region
        $region29: #{rwkv6_attention_forward.5} parent=27 // pred_check
          %p205 = pneg %p204
        $region30: #{rwkv6_attention_forward.5} parent=27 // pred_check_branch
          %207 = sbr.rel (%p205) target = $region32
        $region31: #{rwkv6_attention_forward.5} parent=27 // pred_region
          %vm208 = vcmask 261120
          %209 = vst.msk [vmem:[#allocation2] sm:$0xff] %vm208, 0.0
        $region32: #{rwkv6_attention_forward.5} parent=27 // pred_fallthru
          _
        %v210 = vld [vmem:[#allocation2] sm:$0xff]
        %v211 = vld [vmem:[%s194] sm:$0xff]
        %v212 = vld [vmem:[%s202] sm:$0xff]
        %v213 = vld [vmem:[%s202 + $0x8] sm:$0xff]
        %v214 = vld [vmem:[%s202 + $0x10] sm:$0xff]
        %v215 = vld [vmem:[%s202 + $0x18] sm:$0xff]
        %vm216 = vcmask 261120
        %v218 = vsel %vm216, %v211, 0
        %220 = vmatprep.subr.mxu0 0.0
        %221 = vmatpush1.msra.mxu0 %v212
        %222 = vmatprep.subr.mxu0 0.0
        %223 = vmatpush1.msra.mxu0 %v213
        %224 = vmatprep.subr.mxu0 0.0
        %225 = vmatpush1.msra.mxu0 %v214
        %226 = vmatprep.subr.mxu0 0.0
        %227 = vmatpush1.msra.mxu0 %v215
        %228 = vmatprep.subr.mxu0 0.0
        %229 = vmatpush1.msra.mxu0 0.0
        %230 = vmatprep.subr.mxu0 0.0
        %231 = vmatpush1.msra.mxu0 0.0
        %232 = vmatprep.subr.mxu0 0.0
        %233 = vmatpush1.msra.mxu0 0.0
        %234 = vmatprep.subr.mxu0 0.0
        %235 = vmatpush1.msra.mxu0 0.0
        %236 = vmatprep.subr.mxu0 0.0
        %237 = vmatpush1.msra.mxu0 0.0
        %238 = vmatprep.subr.mxu0 0.0
        %239 = vmatpush1.msra.mxu0 0.0
        %240 = vmatprep.subr.mxu0 0.0
        %241 = vmatpush1.msra.mxu0 0.0
        %242 = vmatprep.subr.mxu0 0.0
        %243 = vmatpush1.msra.mxu0 0.0
        %244 = vmatprep.subr.mxu0 0.0
        %245 = vmatpush1.msra.mxu0 0.0
        %246 = vmatprep.subr.mxu0 0.0
        %247 = vmatpush1.msra.mxu0 0.0
        %248 = vmatprep.subr.mxu0 0.0
        %249 = vmatpush1.msra.mxu0 0.0
        %250 = vmatprep.subr.mxu0 0.0
        %251 = vmatpush1.msra.mxu0 0.0
        %252 = vmatprep.subr.mxu0 0.0
        %253 = vmatpush1.msra.mxu0 0.0
        %254 = vmatprep.subr.mxu0 0.0
        %255 = vmatpush1.msra.mxu0 0.0
        %256 = vmatprep.subr.mxu0 0.0
        %257 = vmatpush1.msra.mxu0 0.0
        %258 = vmatprep.subr.mxu0 0.0
        %259 = vmatpush1.msra.mxu0 0.0
        %260 = vmatprep.subr.mxu0 0.0
        %261 = vmatpush1.msra.mxu0 0.0
        %262 = vmatprep.subr.mxu0 0.0
        %263 = vmatpush1.msra.mxu0 0.0
        %264 = vmatprep.subr.mxu0 0.0
        %265 = vmatpush1.msra.mxu0 0.0
        %266 = vmatprep.subr.mxu0 0.0
        %267 = vmatpush1.msra.mxu0 0.0
        %268 = vmatprep.subr.mxu0 0.0
        %269 = vmatpush1.msra.mxu0 0.0
        %270 = vmatprep.subr.mxu0 0.0
        %271 = vmatpush1.msra.mxu0 0.0
        %272 = vmatprep.subr.mxu0 0.0
        %273 = vmatpush1.msra.mxu0 0.0
        %274 = vmatprep.subr.mxu0 0.0
        %275 = vmatpush1.msra.mxu0 0.0
        %276 = vmatprep.subr.mxu0 0.0
        %277 = vmatpush1.msra.mxu0 0.0
        %278 = vmatprep.subr.mxu0 0.0
        %279 = vmatpush1.msra.mxu0 0.0
        %280 = vmatprep.subr.mxu0 0.0
        %281 = vmatpush1.msra.mxu0 0.0
        %282 = vmatprep.subr.mxu0 0.0
        %283 = vmatpush1.msra.mxu0 0.0
        %284 = vmatprep.mubr.f32.mxu0 0.0
        %285 = vmatmul.mubr.f32.gmra.mrb[0].mxu0 %v218
        %v286 = vpop.f32.mrb[0].mxu0
        %v287 = vadd.f32 0.0, %v286
        %v288 = vpop.f32.mrb[0].mxu0
        %289 = vdwg.mxu0
        %v290 = vadd.f32 %v210, %v287
        %291 = vst.msk [vmem:[#allocation2] sm:$0xff] %vm216, %v290
        // Predicated region
        $region33: #{rwkv6_attention_forward.5} parent=27 // pred_check
          %p292 = pneg %p204
        $region34: #{rwkv6_attention_forward.5} parent=27 // pred_check_branch
          %294 = sbr.rel (%p292) target = $region36
        $region35: #{rwkv6_attention_forward.5} parent=27 // pred_region
          %v295 = vld [vmem:[#allocation2] sm:$0xff]
          %296 = vst.msk [vmem:[%s187] sm:$0xff] %vm216, %v295
        $region36: #{rwkv6_attention_forward.5} parent=27 // pred_fallthru
          _
        %s297 = sand.u32 %s101, 1
        %s298 = scalar_lea.sflag [#allocation4], %s297
        %s299 = sand.u32 %s101, 1
        %s300 = smul.addr %s299, 8
        %s301 = scalar_lea.vmem [#allocation3], %s300
        // Predicated region
        $region37: #{rwkv6_attention_forward.5} parent=27 // pred_check
          %p302 = pneg %p111
        $region38: #{rwkv6_attention_forward.5} parent=27 // pred_check_branch
          %304 = sbr.rel (%p302) target = $region40
        $region39: #{rwkv6_attention_forward.5} parent=27 // pred_region
          %s306 = ssub.s32 128, 128
          %307 = vsyncadd %s298, %s306
          %s308 = sadd.s32 %s22, %s21
          %s309 = smul.addr %s308, 128
          %s310 = scalar_lea.hbm %s2, %s309
          %s312 = sshll.u32 %s301, 4
          %s313 = int_to_ptr.vmem [resolvable:$true] %s312
          %315 = dma.vmem_to_hbm [thread:$0]  %s313, 128, %s310, %s298
        $region40: #{rwkv6_attention_forward.5} parent=27 // pred_fallthru
          _
      $region28: #{rwkv6_attention_forward.5} parent=5 // pred_fallthru
        _
      %p316 = scmp.le.s32.totalorder 2, %s11
      // Predicated region
      $region41: #{rwkv6_attention_forward.5} parent=5 // pred_check
        %p317 = pneg %p316
      $region42: #{rwkv6_attention_forward.5} parent=5 // pred_check_branch
        %319 = sbr.rel (%p317) target = $region44
      $region43: #{rwkv6_attention_forward.5} parent=5 // pred_region
        %s320 = ssub.s32 %s11, 2
        // Predicated region
        $region45: #{rwkv6_attention_forward.5} parent=43 // pred_check
          %p321 = pneg %p117
        $region46: #{rwkv6_attention_forward.5} parent=43 // pred_check_branch
          %323 = sbr.rel (%p321) target = $region48
        $region47: #{rwkv6_attention_forward.5} parent=43 // pred_region
          %s324 = sand.u32 %s102, 1
          %s325 = scalar_lea.sflag [#allocation4], %s324
          %s326 = sand.u32 %s102, 1
          %s327 = smul.addr %s326, 8
          %s328 = scalar_lea.vmem [#allocation3], %s327
          %329 = dma.done %s325, 128
        $region48: #{rwkv6_attention_forward.5} parent=43 // pred_fallthru
          _
      $region44: #{rwkv6_attention_forward.5} parent=5 // pred_fallthru
        _
    $region6: #{rwkv6_attention_forward.5} parent=1 // loop_footer
      %s15 = sadd.s32 1, %s11
    $region7: #{rwkv6_attention_forward.5} parent=1 // loop_footer_branch
      %10 = sbr.rel target = $region3
    $region8: #{rwkv6_attention_forward.5} parent=1 // loop_exit
      _
    %330 = vsyncpa [#allocation4], 1
    %s331 = scalar_lea.sflag [#allocation4], 1
    %332 = vsyncpa %s331, 1

// kernel: rwkv6_attention_forward.4
$region0: #{rwkv6_attention_forward.4}
  #allocation0 [shape = 'u32[]', space=smem, size = 0x4, offset = 0x4, fixed_abs, tag = 'smem constant byte address 0x4 - core index']
  #allocation1 [shape = 'u32[144,128]{1,0:T(1,128)}', space=vmem, size = 0x12000, scoped, tag = 'internal scratch']
  #allocation2 [shape = 'f32[2,16,16]{2,1,0:T(8,128)}', space=vmem, size = 0x4000, scoped, tag = 'scratch operand']
  #allocation3 [shape = 'f32[8,32]{1,0:T(8,128)}', space=vmem, size = 0x1000, scoped, tag = 'scratch operand']
  %s0 = inlined_call_operand.vmem [shape: f32[32,32], index: 0, kind: input, shape index: {}]
  %s1 = inlined_call_operand.vmem [shape: f32[32,32], index: 1, kind: input, shape index: {}]
  %s2 = inlined_call_operand.vmem [shape: f32[32,32], index: 2, kind: input, shape index: {}]
  %s3 = inlined_call_operand.vmem [shape: f32[32,32], index: 3, kind: input, shape index: {}]
  %s4 = inlined_call_operand.vmem [shape: f32[32,32], index: 4, kind: input, shape index: {}]
  %s5 = inlined_call_operand.vmem [shape: f32[1,32], index: 5, kind: input, shape index: {}]
  %s6 = inlined_call_operand.vmem [shape: f32[1,32], index: 6, kind: input, shape index: {}]
  %s7 = inlined_call_operand.vmem [shape: f32[1,32], index: 7, kind: input, shape index: {}]
  %s8 = inlined_call_operand.vmem [shape: f32[2,2,16,16], index: 8, kind: input, shape index: {}, may-alias: {8,10}]
  %s9 = inlined_call_operand.vmem [shape: f32[32,32], index: 9, kind: output, shape index: {0}]
  %s10 = inlined_call_operand.vmem [shape: f32[2,2,16,16], index: 10, kind: output, shape index: {1}, may-alias: {8,10}]
  %11 = xla_tuple %s9, %s10
  %s12 = sld [smem:[#allocation0]]
  $region85: #{rwkv6_attention_forward.4} parent=0
    _
  %s14 = ssub.s32 1, %s12
  %s15 = scalar_select 0, %s14, %s12
  loop: start=0, step=1, limit=6
  $region2: #{rwkv6_attention_forward.4} parent=0 // loop_pre_header
    _
  $region3: #{rwkv6_attention_forward.4} parent=0 // loop_header
    %s17 = sphi 0, %s21
    %p18 = scmp.ge.s32.totalorder %s17, 6
    %s24 = sphi 0, %s43
    %s25 = sphi 0, %s39
    %s26 = sphi 0, %s35
    %s27 = sphi 0, %s24
    %s28 = sphi 0, %s25
    %s29 = sphi 0, %s26
    %s30 = sphi 0, %s27
    %s31 = sphi 0, %s28
    %s32 = sphi 0, %s29
    %s52 = sphi 0, %s54
    %s55 = sphi 0, %s52
    %s56 = sphi 0, %s55
    %s72 = sphi 0, %s56
    %s84 = sphi 0, %s86
    %s87 = sphi 0, %s84
    %s88 = sphi 0, %s87
    %s104 = sphi 0, %s88
    %s116 = sphi 0, %s118
    %s119 = sphi 0, %s116
    %s120 = sphi 0, %s119
    %s136 = sphi 0, %s120
    %s148 = sphi 0, %s150
    %s151 = sphi 0, %s148
    %s152 = sphi 0, %s151
    %s168 = sphi 0, %s152
    %s180 = sphi 0, %s182
    %s183 = sphi 0, %s180
    %s184 = sphi 0, %s183
    %s200 = sphi 0, %s184
    %s206 = sphi 0, %s208
    %s209 = sphi 0, %s206
    %s210 = sphi 0, %s209
    %s226 = sphi 0, %s210
    %s232 = sphi 0, %s234
    %s235 = sphi 0, %s232
    %s236 = sphi 0, %s235
    %s252 = sphi 0, %s236
    %s258 = sphi 0, %s260
    %s261 = sphi 0, %s258
    %s262 = sphi 0, %s261
    %s278 = sphi 0, %s262
    %s286 = sphi 0, %s288
    %s289 = sphi 0, %s286
    %s290 = sphi 0, %s289
    %s306 = sphi 0, %s290
    %s318 = sphi 0, %s320
    %s321 = sphi 0, %s318
    %s322 = sphi 0, %s321
    %s338 = sphi 0, %s322
    %s346 = sphi 0, %s348
    %s349 = sphi 0, %s346
    %s350 = sphi 0, %s349
    %s366 = sphi 0, %s350
  $region4: #{rwkv6_attention_forward.4} parent=0 // loop_header_branch
    %20 = sbr.rel (%p18) target = $region8
  $region5: #{rwkv6_attention_forward.4} parent=0 // loop_body
    %s22 = ssub.s32 %s17, 1
    %s23 = ssub.s32 %s17, 2
    %s33 = sadd.s32 1, %s26
    %p34 = scmp.ge.s32.totalorder %s33, 2
    %s35 = scalar_select %p34, 0, %s33
    %s36 = sadd.s32 1, %s25
    %s37 = scalar_select %p34, %s36, %s25
    %p38 = scmp.ge.s32.totalorder %s37, 1
    %s39 = scalar_select %p38, 0, %s37
    %s40 = sadd.s32 1, %s24
    %s41 = scalar_select %p38, %s40, %s24
    %p42 = scmp.ge.s32.totalorder %s41, 2
    %s43 = scalar_select %p42, 0, %s41
    %s44 = smul.u32 %s24, 2
    %s45 = sadd.s32 %s44, %s26
    %s46 = smul.u32 %s43, 2
    %s47 = sadd.s32 %s46, %s35
    %s48 = ssub.s32 %s45, %s47
    %s49 = ssub.s32 %s25, %s39
    %s50 = sor.u32 %s48, %s49
    %p51 = scmp.eq.s32.totalorder %s50, 0
    %s53 = sadd.s32 %s52, 1
    %s54 = scalar_select %p51, %s52, %s53
    %p57 = pneg %p51
    %p58 = scmp.eq.s32.totalorder %s17, 3
    %p59 = por %p57, %p58
    %p60 = scmp.ne.s32.totalorder %s52, %s55
    %p61 = scmp.eq.s32.totalorder %s17, 0
    %p62 = por %p60, %p61
    %p63 = scmp.ne.s32.totalorder %s52, %s55
    %p64 = scmp.eq.s32.totalorder %s22, 3
    %p65 = por %p63, %p64
    %p66 = scmp.ne.s32.totalorder %s55, %s56
    %p67 = scmp.eq.s32.totalorder %s22, 0
    %p68 = por %p66, %p67
    %p69 = scmp.ne.s32.totalorder %s55, %s56
    %p70 = scmp.eq.s32.totalorder %s23, 3
    %p71 = por %p69, %p70
    %p73 = scmp.ne.s32.totalorder %s56, %s72
    %p74 = scmp.eq.s32.totalorder %s23, 0
    %p75 = por %p73, %p74
    %s76 = smul.u32 %s24, 2
    %s77 = sadd.s32 %s76, %s26
    %s78 = smul.u32 %s43, 2
    %s79 = sadd.s32 %s78, %s35
    %s80 = ssub.s32 %s77, %s79
    %s81 = ssub.s32 %s25, %s39
    %s82 = sor.u32 %s80, %s81
    %p83 = scmp.eq.s32.totalorder %s82, 0
    %s85 = sadd.s32 %s84, 1
    %s86 = scalar_select %p83, %s84, %s85
    %p89 = pneg %p83
    %p90 = scmp.eq.s32.totalorder %s17, 3
    %p91 = por %p89, %p90
    %p92 = scmp.ne.s32.totalorder %s84, %s87
    %p93 = scmp.eq.s32.totalorder %s17, 0
    %p94 = por %p92, %p93
    %p95 = scmp.ne.s32.totalorder %s84, %s87
    %p96 = scmp.eq.s32.totalorder %s22, 3
    %p97 = por %p95, %p96
    %p98 = scmp.ne.s32.totalorder %s87, %s88
    %p99 = scmp.eq.s32.totalorder %s22, 0
    %p100 = por %p98, %p99
    %p101 = scmp.ne.s32.totalorder %s87, %s88
    %p102 = scmp.eq.s32.totalorder %s23, 3
    %p103 = por %p101, %p102
    %p105 = scmp.ne.s32.totalorder %s88, %s104
    %p106 = scmp.eq.s32.totalorder %s23, 0
    %p107 = por %p105, %p106
    %s108 = smul.u32 %s24, 2
    %s109 = sadd.s32 %s108, %s26
    %s110 = smul.u32 %s43, 2
    %s111 = sadd.s32 %s110, %s35
    %s112 = ssub.s32 %s109, %s111
    %s113 = ssub.s32 %s25, %s39
    %s114 = sor.u32 %s112, %s113
    %p115 = scmp.eq.s32.totalorder %s114, 0
    %s117 = sadd.s32 %s116, 1
    %s118 = scalar_select %p115, %s116, %s117
    %p121 = pneg %p115
    %p122 = scmp.eq.s32.totalorder %s17, 3
    %p123 = por %p121, %p122
    %p124 = scmp.ne.s32.totalorder %s116, %s119
    %p125 = scmp.eq.s32.totalorder %s17, 0
    %p126 = por %p124, %p125
    %p127 = scmp.ne.s32.totalorder %s116, %s119
    %p128 = scmp.eq.s32.totalorder %s22, 3
    %p129 = por %p127, %p128
    %p130 = scmp.ne.s32.totalorder %s119, %s120
    %p131 = scmp.eq.s32.totalorder %s22, 0
    %p132 = por %p130, %p131
    %p133 = scmp.ne.s32.totalorder %s119, %s120
    %p134 = scmp.eq.s32.totalorder %s23, 3
    %p135 = por %p133, %p134
    %p137 = scmp.ne.s32.totalorder %s120, %s136
    %p138 = scmp.eq.s32.totalorder %s23, 0
    %p139 = por %p137, %p138
    %s140 = smul.u32 %s24, 2
    %s141 = sadd.s32 %s140, %s26
    %s142 = smul.u32 %s43, 2
    %s143 = sadd.s32 %s142, %s35
    %s144 = ssub.s32 %s141, %s143
    %s145 = ssub.s32 %s25, %s39
    %s146 = sor.u32 %s144, %s145
    %p147 = scmp.eq.s32.totalorder %s146, 0
    %s149 = sadd.s32 %s148, 1
    %s150 = scalar_select %p147, %s148, %s149
    %p153 = pneg %p147
    %p154 = scmp.eq.s32.totalorder %s17, 3
    %p155 = por %p153, %p154
    %p156 = scmp.ne.s32.totalorder %s148, %s151
    %p157 = scmp.eq.s32.totalorder %s17, 0
    %p158 = por %p156, %p157
    %p159 = scmp.ne.s32.totalorder %s148, %s151
    %p160 = scmp.eq.s32.totalorder %s22, 3
    %p161 = por %p159, %p160
    %p162 = scmp.ne.s32.totalorder %s151, %s152
    %p163 = scmp.eq.s32.totalorder %s22, 0
    %p164 = por %p162, %p163
    %p165 = scmp.ne.s32.totalorder %s151, %s152
    %p166 = scmp.eq.s32.totalorder %s23, 3
    %p167 = por %p165, %p166
    %p169 = scmp.ne.s32.totalorder %s152, %s168
    %p170 = scmp.eq.s32.totalorder %s23, 0
    %p171 = por %p169, %p170
    %s172 = smul.u32 %s24, 2
    %s173 = sadd.s32 %s172, %s26
    %s174 = smul.u32 %s43, 2
    %s175 = sadd.s32 %s174, %s35
    %s176 = ssub.s32 %s173, %s175
    %s177 = ssub.s32 %s25, %s39
    %s178 = sor.u32 %s176, %s177
    %p179 = scmp.eq.s32.totalorder %s178, 0
    %s181 = sadd.s32 %s180, 1
    %s182 = scalar_select %p179, %s180, %s181
    %p185 = pneg %p179
    %p186 = scmp.eq.s32.totalorder %s17, 3
    %p187 = por %p185, %p186
    %p188 = scmp.ne.s32.totalorder %s180, %s183
    %p189 = scmp.eq.s32.totalorder %s17, 0
    %p190 = por %p188, %p189
    %p191 = scmp.ne.s32.totalorder %s180, %s183
    %p192 = scmp.eq.s32.totalorder %s22, 3
    %p193 = por %p191, %p192
    %p194 = scmp.ne.s32.totalorder %s183, %s184
    %p195 = scmp.eq.s32.totalorder %s22, 0
    %p196 = por %p194, %p195
    %p197 = scmp.ne.s32.totalorder %s183, %s184
    %p198 = scmp.eq.s32.totalorder %s23, 3
    %p199 = por %p197, %p198
    %p201 = scmp.ne.s32.totalorder %s184, %s200
    %p202 = scmp.eq.s32.totalorder %s23, 0
    %p203 = por %p201, %p202
    %s204 = ssub.s32 %s25, %s39
    %p205 = scmp.eq.s32.totalorder %s204, 0
    %s207 = sadd.s32 %s206, 1
    %s208 = scalar_select %p205, %s206, %s207
    %p211 = pneg %p205
    %p212 = scmp.eq.s32.totalorder %s17, 3
    %p213 = por %p211, %p212
    %p214 = scmp.ne.s32.totalorder %s206, %s209
    %p215 = scmp.eq.s32.totalorder %s17, 0
    %p216 = por %p214, %p215
    %p217 = scmp.ne.s32.totalorder %s206, %s209
    %p218 = scmp.eq.s32.totalorder %s22, 3
    %p219 = por %p217, %p218
    %p220 = scmp.ne.s32.totalorder %s209, %s210
    %p221 = scmp.eq.s32.totalorder %s22, 0
    %p222 = por %p220, %p221
    %p223 = scmp.ne.s32.totalorder %s209, %s210
    %p224 = scmp.eq.s32.totalorder %s23, 3
    %p225 = por %p223, %p224
    %p227 = scmp.ne.s32.totalorder %s210, %s226
    %p228 = scmp.eq.s32.totalorder %s23, 0
    %p229 = por %p227, %p228
    %s230 = ssub.s32 %s25, %s39
    %p231 = scmp.eq.s32.totalorder %s230, 0
    %s233 = sadd.s32 %s232, 1
    %s234 = scalar_select %p231, %s232, %s233
    %p237 = pneg %p231
    %p238 = scmp.eq.s32.totalorder %s17, 3
    %p239 = por %p237, %p238
    %p240 = scmp.ne.s32.totalorder %s232, %s235
    %p241 = scmp.eq.s32.totalorder %s17, 0
    %p242 = por %p240, %p241
    %p243 = scmp.ne.s32.totalorder %s232, %s235
    %p244 = scmp.eq.s32.totalorder %s22, 3
    %p245 = por %p243, %p244
    %p246 = scmp.ne.s32.totalorder %s235, %s236
    %p247 = scmp.eq.s32.totalorder %s22, 0
    %p248 = por %p246, %p247
    %p249 = scmp.ne.s32.totalorder %s235, %s236
    %p250 = scmp.eq.s32.totalorder %s23, 3
    %p251 = por %p249, %p250
    %p253 = scmp.ne.s32.totalorder %s236, %s252
    %p254 = scmp.eq.s32.totalorder %s23, 0
    %p255 = por %p253, %p254
    %s256 = ssub.s32 %s25, %s39
    %p257 = scmp.eq.s32.totalorder %s256, 0
    %s259 = sadd.s32 %s258, 1
    %s260 = scalar_select %p257, %s258, %s259
    %p263 = pneg %p257
    %p264 = scmp.eq.s32.totalorder %s17, 3
    %p265 = por %p263, %p264
    %p266 = scmp.ne.s32.totalorder %s258, %s261
    %p267 = scmp.eq.s32.totalorder %s17, 0
    %p268 = por %p266, %p267
    %p269 = scmp.ne.s32.totalorder %s258, %s261
    %p270 = scmp.eq.s32.totalorder %s22, 3
    %p271 = por %p269, %p270
    %p272 = scmp.ne.s32.totalorder %s261, %s262
    %p273 = scmp.eq.s32.totalorder %s22, 0
    %p274 = por %p272, %p273
    %p275 = scmp.ne.s32.totalorder %s261, %s262
    %p276 = scmp.eq.s32.totalorder %s23, 3
    %p277 = por %p275, %p276
    %p279 = scmp.ne.s32.totalorder %s262, %s278
    %p280 = scmp.eq.s32.totalorder %s23, 0
    %p281 = por %p279, %p280
    %s282 = ssub.s32 %s24, %s43
    %s283 = ssub.s32 %s25, %s39
    %s284 = sor.u32 %s282, %s283
    %p285 = scmp.eq.s32.totalorder %s284, 0
    %s287 = sadd.s32 %s286, 1
    %s288 = scalar_select %p285, %s286, %s287
    %p291 = pneg %p285
    %p292 = scmp.eq.s32.totalorder %s17, 3
    %p293 = por %p291, %p292
    %p294 = scmp.ne.s32.totalorder %s286, %s289
    %p295 = scmp.eq.s32.totalorder %s17, 0
    %p296 = por %p294, %p295
    %p297 = scmp.ne.s32.totalorder %s286, %s289
    %p298 = scmp.eq.s32.totalorder %s22, 3
    %p299 = por %p297, %p298
    %p300 = scmp.ne.s32.totalorder %s289, %s290
    %p301 = scmp.eq.s32.totalorder %s22, 0
    %p302 = por %p300, %p301
    %p303 = scmp.ne.s32.totalorder %s289, %s290
    %p304 = scmp.eq.s32.totalorder %s23, 3
    %p305 = por %p303, %p304
    %p307 = scmp.ne.s32.totalorder %s290, %s306
    %p308 = scmp.eq.s32.totalorder %s23, 0
    %p309 = por %p307, %p308
    %s310 = smul.u32 %s24, 2
    %s311 = sadd.s32 %s310, %s26
    %s312 = smul.u32 %s43, 2
    %s313 = sadd.s32 %s312, %s35
    %s314 = ssub.s32 %s311, %s313
    %s315 = ssub.s32 %s25, %s39
    %s316 = sor.u32 %s314, %s315
    %p317 = scmp.eq.s32.totalorder %s316, 0
    %s319 = sadd.s32 %s318, 1
    %s320 = scalar_select %p317, %s318, %s319
    %p323 = pneg %p317
    %p324 = scmp.eq.s32.totalorder %s17, 3
    %p325 = por %p323, %p324
    %p326 = scmp.ne.s32.totalorder %s318, %s321
    %p327 = scmp.eq.s32.totalorder %s17, 0
    %p328 = por %p326, %p327
    %p329 = scmp.ne.s32.totalorder %s318, %s321
    %p330 = scmp.eq.s32.totalorder %s22, 3
    %p331 = por %p329, %p330
    %p332 = scmp.ne.s32.totalorder %s321, %s322
    %p333 = scmp.eq.s32.totalorder %s22, 0
    %p334 = por %p332, %p333
    %p335 = scmp.ne.s32.totalorder %s321, %s322
    %p336 = scmp.eq.s32.totalorder %s23, 3
    %p337 = por %p335, %p336
    %p339 = scmp.ne.s32.totalorder %s322, %s338
    %p340 = scmp.eq.s32.totalorder %s23, 0
    %p341 = por %p339, %p340
    %s342 = ssub.s32 %s24, %s43
    %s343 = ssub.s32 %s25, %s39
    %s344 = sor.u32 %s342, %s343
    %p345 = scmp.eq.s32.totalorder %s344, 0
    %s347 = sadd.s32 %s346, 1
    %s348 = scalar_select %p345, %s346, %s347
    %p351 = pneg %p345
    %p352 = scmp.eq.s32.totalorder %s17, 3
    %p353 = por %p351, %p352
    %p354 = scmp.ne.s32.totalorder %s346, %s349
    %p355 = scmp.eq.s32.totalorder %s17, 0
    %p356 = por %p354, %p355
    %p357 = scmp.ne.s32.totalorder %s346, %s349
    %p358 = scmp.eq.s32.totalorder %s22, 3
    %p359 = por %p357, %p358
    %p360 = scmp.ne.s32.totalorder %s349, %s350
    %p361 = scmp.eq.s32.totalorder %s22, 0
    %p362 = por %p360, %p361
    %p363 = scmp.ne.s32.totalorder %s349, %s350
    %p364 = scmp.eq.s32.totalorder %s23, 3
    %p365 = por %p363, %p364
    %p367 = scmp.ne.s32.totalorder %s350, %s366
    %p368 = scmp.eq.s32.totalorder %s23, 0
    %p369 = por %p367, %p368
    %p370 = scmp.le.s32.totalorder 1, %s17
    %p371 = scmp.lt.s32.totalorder %s17, 5
    %p372 = pnand %p370, %p371
    %p373 = pneg %p372
    // Predicated region
    $region9: #{rwkv6_attention_forward.4} parent=5 // pred_check
      _
    $region10: #{rwkv6_attention_forward.4} parent=5 // pred_check_branch
      %375 = sbr.rel (%p372) target = $region12
    $region11: #{rwkv6_attention_forward.4} parent=5 // pred_region
      %s376 = ssub.s32 %s17, 1
      // Predicated region
      $region13: #{rwkv6_attention_forward.4} parent=11 // pred_check
        %p377 = pneg %p222
      $region14: #{rwkv6_attention_forward.4} parent=11 // pred_check_branch
        %379 = sbr.rel (%p377) target = $region16
      $region15: #{rwkv6_attention_forward.4} parent=11 // pred_region
        %p380 = scmp.lt.s32.totalorder %s28, 0
        %s381 = scalar_select %p380, %s28, 0
        %s382 = scalar_lea.vmem %s5, %s381
      $region16: #{rwkv6_attention_forward.4} parent=11 // pred_fallthru
        _
      // Predicated region
      $region17: #{rwkv6_attention_forward.4} parent=11 // pred_check
        %p383 = pneg %p248
      $region18: #{rwkv6_attention_forward.4} parent=11 // pred_check_branch
        %385 = sbr.rel (%p383) target = $region20
      $region19: #{rwkv6_attention_forward.4} parent=11 // pred_region
        %p386 = scmp.lt.s32.totalorder %s28, 0
        %s387 = scalar_select %p386, %s28, 0
        %s388 = scalar_lea.vmem %s6, %s387
      $region20: #{rwkv6_attention_forward.4} parent=11 // pred_fallthru
        _
      // Predicated region
      $region21: #{rwkv6_attention_forward.4} parent=11 // pred_check
        %p389 = pneg %p274
      $region22: #{rwkv6_attention_forward.4} parent=11 // pred_check_branch
        %391 = sbr.rel (%p389) target = $region24
      $region23: #{rwkv6_attention_forward.4} parent=11 // pred_region
        %p392 = scmp.lt.s32.totalorder %s28, 0
        %s393 = scalar_select %p392, %s28, 0
        %s394 = scalar_lea.vmem %s7, %s393
      $region24: #{rwkv6_attention_forward.4} parent=11 // pred_fallthru
        _
    $region12: #{rwkv6_attention_forward.4} parent=5 // pred_fallthru
      _
    %p395 = scmp.lt.s32.totalorder %s17, 4
    // Predicated region
    $region25: #{rwkv6_attention_forward.4} parent=5 // pred_check
      %p396 = pneg %p395
    $region26: #{rwkv6_attention_forward.4} parent=5 // pred_check_branch
      %398 = sbr.rel (%p396) target = $region28
    $region27: #{rwkv6_attention_forward.4} parent=5 // pred_region
      // Predicated region
      $region29: #{rwkv6_attention_forward.4} parent=27 // pred_check
        %p399 = pneg %p62
      $region30: #{rwkv6_attention_forward.4} parent=27 // pred_check_branch
        %401 = sbr.rel (%p399) target = $region32
      $region31: #{rwkv6_attention_forward.4} parent=27 // pred_region
        %s402 = smul.u32 %s24, 2
        %s403 = sadd.s32 %s402, %s26
        %p404 = scmp.lt.s32.totalorder %s403, 3
        %s405 = scalar_select %p404, %s403, 3
        %p406 = scmp.lt.s32.totalorder %s25, 0
        %s407 = scalar_select %p406, %s25, 0
        %s408 = sadd.s32 %s407, %s405
        %s409 = smul.addr %s408, 8
        %s410 = scalar_lea.vmem %s0, %s409
        %s411 = smul.u32 %s24, 2
        %s412 = sadd.s32 %s411, %s26
      $region32: #{rwkv6_attention_forward.4} parent=27 // pred_fallthru
        _
      // Predicated region
      $region33: #{rwkv6_attention_forward.4} parent=27 // pred_check
        %p413 = pneg %p94
      $region34: #{rwkv6_attention_forward.4} parent=27 // pred_check_branch
        %415 = sbr.rel (%p413) target = $region36
      $region35: #{rwkv6_attention_forward.4} parent=27 // pred_region
        %s416 = smul.u32 %s24, 2
        %s417 = sadd.s32 %s416, %s26
        %p418 = scmp.lt.s32.totalorder %s417, 3
        %s419 = scalar_select %p418, %s417, 3
        %p420 = scmp.lt.s32.totalorder %s25, 0
        %s421 = scalar_select %p420, %s25, 0
        %s422 = sadd.s32 %s421, %s419
        %s423 = smul.addr %s422, 8
        %s424 = scalar_lea.vmem %s1, %s423
        %s425 = smul.u32 %s24, 2
        %s426 = sadd.s32 %s425, %s26
      $region36: #{rwkv6_attention_forward.4} parent=27 // pred_fallthru
        _
      // Predicated region
      $region37: #{rwkv6_attention_forward.4} parent=27 // pred_check
        %p427 = pneg %p126
      $region38: #{rwkv6_attention_forward.4} parent=27 // pred_check_branch
        %429 = sbr.rel (%p427) target = $region40
      $region39: #{rwkv6_attention_forward.4} parent=27 // pred_region
        %s430 = smul.u32 %s24, 2
        %s431 = sadd.s32 %s430, %s26
        %p432 = scmp.lt.s32.totalorder %s431, 3
        %s433 = scalar_select %p432, %s431, 3
        %p434 = scmp.lt.s32.totalorder %s25, 0
        %s435 = scalar_select %p434, %s25, 0
        %s436 = sadd.s32 %s435, %s433
        %s437 = smul.addr %s436, 8
        %s438 = scalar_lea.vmem %s2, %s437
        %s439 = smul.u32 %s24, 2
        %s440 = sadd.s32 %s439, %s26
      $region40: #{rwkv6_attention_forward.4} parent=27 // pred_fallthru
        _
      // Predicated region
      $region41: #{rwkv6_attention_forward.4} parent=27 // pred_check
        %p441 = pneg %p158
      $region42: #{rwkv6_attention_forward.4} parent=27 // pred_check_branch
        %443 = sbr.rel (%p441) target = $region44
      $region43: #{rwkv6_attention_forward.4} parent=27 // pred_region
        %s444 = smul.u32 %s24, 2
        %s445 = sadd.s32 %s444, %s26
        %p446 = scmp.lt.s32.totalorder %s445, 3
        %s447 = scalar_select %p446, %s445, 3
        %p448 = scmp.lt.s32.totalorder %s25, 0
        %s449 = scalar_select %p448, %s25, 0
        %s450 = sadd.s32 %s449, %s447
        %s451 = smul.addr %s450, 8
        %s452 = scalar_lea.vmem %s3, %s451
        %s453 = smul.u32 %s24, 2
        %s454 = sadd.s32 %s453, %s26
      $region44: #{rwkv6_attention_forward.4} parent=27 // pred_fallthru
        _
      // Predicated region
      $region45: #{rwkv6_attention_forward.4} parent=27 // pred_check
        %p455 = pneg %p190
      $region46: #{rwkv6_attention_forward.4} parent=27 // pred_check_branch
        %457 = sbr.rel (%p455) target = $region48
      $region47: #{rwkv6_attention_forward.4} parent=27 // pred_region
        %s458 = smul.u32 %s24, 2
        %s459 = sadd.s32 %s458, %s26
        %p460 = scmp.lt.s32.totalorder %s459, 3
        %s461 = scalar_select %p460, %s459, 3
        %p462 = scmp.lt.s32.totalorder %s25, 0
        %s463 = scalar_select %p462, %s25, 0
        %s464 = sadd.s32 %s463, %s461
        %s465 = smul.addr %s464, 8
        %s466 = scalar_lea.vmem %s4, %s465
        %s467 = smul.u32 %s24, 2
        %s468 = sadd.s32 %s467, %s26
      $region48: #{rwkv6_attention_forward.4} parent=27 // pred_fallthru
        _
      // Predicated region
      $region49: #{rwkv6_attention_forward.4} parent=27 // pred_check
        %p469 = pneg %p296
      $region50: #{rwkv6_attention_forward.4} parent=27 // pred_check_branch
        %471 = sbr.rel (%p469) target = $region52
      $region51: #{rwkv6_attention_forward.4} parent=27 // pred_region
        %s472 = smul.u32 2, %s25
        %p473 = scmp.lt.s32.totalorder %s24, 1
        %s474 = scalar_select %p473, %s24, 1
        %p475 = scmp.lt.s32.totalorder %s472, 1
        %s476 = scalar_select %p475, %s472, 1
        %s477 = smul.addr %s476, 2
        %s478 = smul.addr %s474, 4
        %s479 = sadd.s32 %s477, %s478
        %s480 = smul.addr %s479, 8
        %s481 = scalar_lea.vmem %s8, %s480
        %s482 = smul.u32 2, %s25
      $region52: #{rwkv6_attention_forward.4} parent=27 // pred_fallthru
        _
    $region28: #{rwkv6_attention_forward.4} parent=5 // pred_fallthru
      _
    %p483 = scmp.le.s32.totalorder 1, %s17
    %p484 = scmp.lt.s32.totalorder %s17, 5
    %p485 = pnand %p483, %p484
    %p486 = pneg %p485
    // Predicated region
    $region53: #{rwkv6_attention_forward.4} parent=5 // pred_check
      _
    $region54: #{rwkv6_attention_forward.4} parent=5 // pred_check_branch
      %488 = sbr.rel (%p485) target = $region56
    $region55: #{rwkv6_attention_forward.4} parent=5 // pred_region
      %s489 = ssub.s32 %s17, 1
      %s490 = smul.u32 %s27, 2
      %s491 = sadd.s32 %s490, %s29
      %p492 = scmp.lt.s32.totalorder %s491, 3
      %s493 = scalar_select %p492, %s491, 3
      %p494 = scmp.lt.s32.totalorder %s28, 0
      %s495 = scalar_select %p494, %s28, 0
      %s496 = sadd.s32 %s495, %s493
      %s497 = smul.addr %s496, 8
      %s498 = scalar_lea.vmem %s0, %s497
      %p499 = pneg %p68
      %p500 = pneg %p65
      %s501 = smul.u32 %s27, 2
      %s502 = sadd.s32 %s501, %s29
      %p503 = scmp.lt.s32.totalorder %s502, 3
      %s504 = scalar_select %p503, %s502, 3
      %p505 = scmp.lt.s32.totalorder %s28, 0
      %s506 = scalar_select %p505, %s28, 0
      %s507 = sadd.s32 %s506, %s504
      %s508 = smul.addr %s507, 8
      %s509 = scalar_lea.vmem %s1, %s508
      %p510 = pneg %p100
      %p511 = pneg %p97
      %s512 = smul.u32 %s27, 2
      %s513 = sadd.s32 %s512, %s29
      %p514 = scmp.lt.s32.totalorder %s513, 3
      %s515 = scalar_select %p514, %s513, 3
      %p516 = scmp.lt.s32.totalorder %s28, 0
      %s517 = scalar_select %p516, %s28, 0
      %s518 = sadd.s32 %s517, %s515
      %s519 = smul.addr %s518, 8
      %s520 = scalar_lea.vmem %s2, %s519
      %p521 = pneg %p132
      %p522 = pneg %p129
      %s523 = smul.u32 %s27, 2
      %s524 = sadd.s32 %s523, %s29
      %p525 = scmp.lt.s32.totalorder %s524, 3
      %s526 = scalar_select %p525, %s524, 3
      %p527 = scmp.lt.s32.totalorder %s28, 0
      %s528 = scalar_select %p527, %s28, 0
      %s529 = sadd.s32 %s528, %s526
      %s530 = smul.addr %s529, 8
      %s531 = scalar_lea.vmem %s3, %s530
      %p532 = pneg %p164
      %p533 = pneg %p161
      %s534 = smul.u32 %s27, 2
      %s535 = sadd.s32 %s534, %s29
      %p536 = scmp.lt.s32.totalorder %s535, 3
      %s537 = scalar_select %p536, %s535, 3
      %p538 = scmp.lt.s32.totalorder %s28, 0
      %s539 = scalar_select %p538, %s28, 0
      %s540 = sadd.s32 %s539, %s537
      %s541 = smul.addr %s540, 8
      %s542 = scalar_lea.vmem %s4, %s541
      %p543 = pneg %p196
      %p544 = pneg %p193
      %p545 = scmp.lt.s32.totalorder %s28, 0
      %s546 = scalar_select %p545, %s28, 0
      %s547 = scalar_lea.vmem %s5, %s546
      %p548 = pneg %p222
      %p549 = pneg %p219
      %p550 = scmp.lt.s32.totalorder %s28, 0
      %s551 = scalar_select %p550, %s28, 0
      %s552 = scalar_lea.vmem %s6, %s551
      %p553 = pneg %p248
      %p554 = pneg %p245
      %p555 = scmp.lt.s32.totalorder %s28, 0
      %s556 = scalar_select %p555, %s28, 0
      %s557 = scalar_lea.vmem %s7, %s556
      %p558 = pneg %p274
      %p559 = pneg %p271
      %s560 = smul.u32 2, %s28
      %p561 = scmp.lt.s32.totalorder %s27, 1
      %s562 = scalar_select %p561, %s27, 1
      %p563 = scmp.lt.s32.totalorder %s560, 1
      %s564 = scalar_select %p563, %s560, 1
      %s565 = smul.addr %s564, 2
      %s566 = smul.addr %s562, 4
      %s567 = sadd.s32 %s565, %s566
      %s568 = smul.addr %s567, 8
      %s569 = scalar_lea.vmem %s8, %s568
      %p570 = pneg %p302
      %p571 = pneg %p299
      %p572 = pneg %p334
      %p573 = pneg %p331
      %s574 = smul.u32 %s27, 2
      %s575 = sadd.s32 %s574, %s29
      %p576 = scmp.lt.s32.totalorder %s575, 3
      %s577 = scalar_select %p576, %s575, 3
      %p578 = scmp.lt.s32.totalorder %s28, 0
      %s579 = scalar_select %p578, %s28, 0
      %s580 = sadd.s32 %s579, %s577
      %s581 = smul.addr %s580, 8
      %s582 = scalar_lea.vmem %s9, %s581
      %p583 = pneg %p362
      %p584 = pneg %p359
      %s585 = smul.u32 2, %s28
      %p586 = scmp.lt.s32.totalorder %s27, 1
      %s587 = scalar_select %p586, %s27, 1
      %p588 = scmp.lt.s32.totalorder %s585, 1
      %s589 = scalar_select %p588, %s585, 1
      %s590 = smul.addr %s589, 2
      %s591 = smul.addr %s587, 4
      %s592 = sadd.s32 %s590, %s591
      %s593 = smul.addr %s592, 8
      %s594 = scalar_lea.vmem %s10, %s593
      %s595 = smul.u32 %s27, 2
      %s596 = sadd.s32 %s595, %s29
      %p597 = scmp.lt.s32.totalorder %s596, 3
      %s598 = scalar_select %p597, %s596, 3
      %p599 = scmp.lt.s32.totalorder %s28, 0
      %s600 = scalar_select %p599, %s28, 0
      %s601 = sadd.s32 %s600, %s598
      %s602 = smul.addr %s601, 8
      %s603 = scalar_lea.vmem %s0, %s602
      %s604 = smul.u32 %s27, 2
      %s605 = sadd.s32 %s604, %s29
      %s606 = smul.u32 %s27, 2
      %s607 = sadd.s32 %s606, %s29
      %p608 = scmp.lt.s32.totalorder %s607, 3
      %s609 = scalar_select %p608, %s607, 3
      %p610 = scmp.lt.s32.totalorder %s28, 0
      %s611 = scalar_select %p610, %s28, 0
      %s612 = sadd.s32 %s611, %s609
      %s613 = smul.addr %s612, 8
      %s614 = scalar_lea.vmem %s1, %s613
      %s615 = smul.u32 %s27, 2
      %s616 = sadd.s32 %s615, %s29
      %s617 = smul.u32 %s27, 2
      %s618 = sadd.s32 %s617, %s29
      %p619 = scmp.lt.s32.totalorder %s618, 3
      %s620 = scalar_select %p619, %s618, 3
      %p621 = scmp.lt.s32.totalorder %s28, 0
      %s622 = scalar_select %p621, %s28, 0
      %s623 = sadd.s32 %s622, %s620
      %s624 = smul.addr %s623, 8
      %s625 = scalar_lea.vmem %s2, %s624
      %s626 = smul.u32 %s27, 2
      %s627 = sadd.s32 %s626, %s29
      %s628 = smul.u32 %s27, 2
      %s629 = sadd.s32 %s628, %s29
      %p630 = scmp.lt.s32.totalorder %s629, 3
      %s631 = scalar_select %p630, %s629, 3
      %p632 = scmp.lt.s32.totalorder %s28, 0
      %s633 = scalar_select %p632, %s28, 0
      %s634 = sadd.s32 %s633, %s631
      %s635 = smul.addr %s634, 8
      %s636 = scalar_lea.vmem %s3, %s635
      %s637 = smul.u32 %s27, 2
      %s638 = sadd.s32 %s637, %s29
      %s639 = smul.u32 %s27, 2
      %s640 = sadd.s32 %s639, %s29
      %p641 = scmp.lt.s32.totalorder %s640, 3
      %s642 = scalar_select %p641, %s640, 3
      %p643 = scmp.lt.s32.totalorder %s28, 0
      %s644 = scalar_select %p643, %s28, 0
      %s645 = sadd.s32 %s644, %s642
      %s646 = smul.addr %s645, 8
      %s647 = scalar_lea.vmem %s4, %s646
      %s648 = smul.u32 %s27, 2
      %s649 = sadd.s32 %s648, %s29
      %p650 = scmp.lt.s32.totalorder %s28, 0
      %s651 = scalar_select %p650, %s28, 0
      %s652 = scalar_lea.vmem %s5, %s651
      %p653 = scmp.lt.s32.totalorder %s28, 0
      %s654 = scalar_select %p653, %s28, 0
      %s655 = scalar_lea.vmem %s6, %s654
      %p656 = scmp.lt.s32.totalorder %s28, 0
      %s657 = scalar_select %p656, %s28, 0
      %s658 = scalar_lea.vmem %s7, %s657
      %s659 = smul.u32 2, %s28
      %p660 = scmp.lt.s32.totalorder %s27, 1
      %s661 = scalar_select %p660, %s27, 1
      %p662 = scmp.lt.s32.totalorder %s659, 1
      %s663 = scalar_select %p662, %s659, 1
      %s664 = smul.addr %s663, 2
      %s665 = smul.addr %s661, 4
      %s666 = sadd.s32 %s664, %s665
      %s667 = smul.addr %s666, 8
      %s668 = scalar_lea.vmem %s8, %s667
      %s669 = smul.u32 2, %s28
      %s670 = smul.u32 %s27, 2
      %s671 = sadd.s32 %s670, %s29
      %p672 = scmp.lt.s32.totalorder %s671, 3
      %s673 = scalar_select %p672, %s671, 3
      %p674 = scmp.lt.s32.totalorder %s28, 0
      %s675 = scalar_select %p674, %s28, 0
      %s676 = sadd.s32 %s675, %s673
      %s677 = smul.addr %s676, 8
      %s678 = scalar_lea.vmem %s9, %s677
      %s679 = smul.u32 %s27, 2
      %s680 = sadd.s32 %s679, %s29
      %s681 = smul.u32 2, %s28
      %p682 = scmp.lt.s32.totalorder %s27, 1
      %s683 = scalar_select %p682, %s27, 1
      %p684 = scmp.lt.s32.totalorder %s681, 1
      %s685 = scalar_select %p684, %s681, 1
      %s686 = smul.addr %s685, 2
      %s687 = smul.addr %s683, 4
      %s688 = sadd.s32 %s686, %s687
      %s689 = smul.addr %s688, 8
      %s690 = scalar_lea.vmem %s10, %s689
      %s691 = smul.u32 2, %s28
      %p692 = scmp.eq.s32.totalorder %s29, 0
      // Predicated region
      $region57: #{rwkv6_attention_forward.4} parent=55 // pred_check
        %p693 = pneg %p692
      $region58: #{rwkv6_attention_forward.4} parent=55 // pred_check_branch
        %695 = sbr.rel (%p693) target = $region60
      $region59: #{rwkv6_attention_forward.4} parent=55 // pred_region
        %v696 = vld [vmem:[%s668] sm:$0xff]
        %v697 = vld [vmem:[%s668 + $0x8] sm:$0xff]
        %v698 = vld [vmem:[%s668 + $0x10] sm:$0xff]
        %v699 = vld [vmem:[%s668 + $0x18] sm:$0xff]
        %vm700 = vcmask 130048
        %701 = vst.msk [vmem:[#allocation2] sm:$0xff] %vm700, %v696
        %702 = vst.msk [vmem:[#allocation2 + $0x8] sm:$0xff] %vm700, %v697
        %703 = vst.msk [vmem:[#allocation2 + $0x10] sm:$0xff] %vm700, %v698
        %704 = vst.msk [vmem:[#allocation2 + $0x18] sm:$0xff] %vm700, %v699
      $region60: #{rwkv6_attention_forward.4} parent=55 // pred_fallthru
        _
      %v705 = vld [vmem:[%s603] sm:$0xff]
      %v706 = vld [vmem:[%s614] sm:$0xff]
      %v707 = vld [vmem:[%s625] sm:$0xff]
      %v708 = vld [vmem:[%s647] sm:$0xff]
      %v709 = vld [vmem:[%s636] sm:$0xff]
      %v710 = vmul.f32 %v709, 1.442695
      %v711 = vpow.pop %v710
      %v712 = vsub.f32 0.0, %v711
      %v713 = vlaneseq
      %v714 = vshrl.u32 %v713, 7
      %v715 = vlaneseq
      %v716 = vand.u32 %v715, 127
      %vm717 = vcmp.ge.s32.totalorder %v714, %v716
      %v718 = vsel %vm717, 1, 0
      %v719 = vcvt.s32.f32 %v718
      %vm720 = vcmp.eq.s32.totalorder %v714, %v716
      %v721 = vsel %vm720, 1, 0
      %v722 = vcvt.s32.f32 %v721
      %vm723 = vcmask 64512
      %v725 = vsel %vm723, %v719, 0
      %727 = vmatprep.subr.mxu0 0.0
      %728 = vmatpush1.msra.mxu0 %v712
      %729 = vmatprep.subr.mxu0 0.0
      %730 = vmatpush1.msra.mxu0 0.0
      %731 = vmatprep.subr.mxu0 0.0
      %732 = vmatpush1.msra.mxu0 0.0
      %733 = vmatprep.subr.mxu0 0.0
      %734 = vmatpush1.msra.mxu0 0.0
      %735 = vmatprep.subr.mxu0 0.0
      %736 = vmatpush1.msra.mxu0 0.0
      %737 = vmatprep.subr.mxu0 0.0
      %738 = vmatpush1.msra.mxu0 0.0
      %739 = vmatprep.subr.mxu0 0.0
      %740 = vmatpush1.msra.mxu0 0.0
      %741 = vmatprep.subr.mxu0 0.0
      %742 = vmatpush1.msra.mxu0 0.0
      %743 = vmatprep.subr.mxu0 0.0
      %744 = vmatpush1.msra.mxu0 0.0
      %745 = vmatprep.subr.mxu0 0.0
      %746 = vmatpush1.msra.mxu0 0.0
      %747 = vmatprep.subr.mxu0 0.0
      %748 = vmatpush1.msra.mxu0 0.0
      %749 = vmatprep.subr.mxu0 0.0
      %750 = vmatpush1.msra.mxu0 0.0
      %751 = vmatprep.subr.mxu0 0.0
      %752 = vmatpush1.msra.mxu0 0.0
      %753 = vmatprep.subr.mxu0 0.0
      %754 = vmatpush1.msra.mxu0 0.0
      %755 = vmatprep.subr.mxu0 0.0
      %756 = vmatpush1.msra.mxu0 0.0
      %757 = vmatprep.subr.mxu0 0.0
      %758 = vmatpush1.msra.mxu0 0.0
      %759 = vmatprep.subr.mxu0 0.0
      %760 = vmatpush1.msra.mxu0 0.0
      %761 = vmatprep.subr.mxu0 0.0
      %762 = vmatpush1.msra.mxu0 0.0
      %763 = vmatprep.subr.mxu0 0.0
      %764 = vmatpush1.msra.mxu0 0.0
      %765 = vmatprep.subr.mxu0 0.0
      %766 = vmatpush1.msra.mxu0 0.0
      %767 = vmatprep.subr.mxu0 0.0
      %768 = vmatpush1.msra.mxu0 0.0
      %769 = vmatprep.subr.mxu0 0.0
      %770 = vmatpush1.msra.mxu0 0.0
      %771 = vmatprep.subr.mxu0 0.0
      %772 = vmatpush1.msra.mxu0 0.0
      %773 = vmatprep.subr.mxu0 0.0
      %774 = vmatpush1.msra.mxu0 0.0
      %775 = vmatprep.subr.mxu0 0.0
      %776 = vmatpush1.msra.mxu0 0.0
      %777 = vmatprep.subr.mxu0 0.0
      %778 = vmatpush1.msra.mxu0 0.0
      %779 = vmatprep.subr.mxu0 0.0
      %780 = vmatpush1.msra.mxu0 0.0
      %781 = vmatprep.subr.mxu0 0.0
      %782 = vmatpush1.msra.mxu0 0.0
      %783 = vmatprep.subr.mxu0 0.0
      %784 = vmatpush1.msra.mxu0 0.0
      %785 = vmatprep.subr.mxu0 0.0
      %786 = vmatpush1.msra.mxu0 0.0
      %787 = vmatprep.subr.mxu0 0.0
      %788 = vmatpush1.msra.mxu0 0.0
      %789 = vmatprep.subr.mxu0 0.0
      %790 = vmatpush1.msra.mxu0 0.0
      %791 = vmatprep.mubr.f32.mxu0 0.0
      %792 = vmatmul.mubr.f32.gmra.mrb[0].mxu0 %v725
      %v793 = vpop.f32.mrb[0].mxu0
      %v794 = vadd.f32 0.0, %v793
      %v795 = vpop.f32.mrb[0].mxu0
      %796 = vdwg.mxu0
      %v797 = vsub.f32 %v794, %v712
      %v798 = vmul.f32 %v794, 1.442695
      %v799 = vpow.pop %v798
      %v800 = vmul.f32 %v797, 1.442695
      %v801 = vpow.pop %v800
      %v802 = vmul.f32 %v705, %v801
      %v803 = vsub.f32 0.0, %v794
      %v804 = vmul.f32 %v803, 1.442695
      %v805 = vpow.pop %v804
      %v806 = vmul.f32 %v706, %v805
      %v807 = vlaneseq
      %v808 = vshrl.u32 %v807, 7
      %v809 = vsub.s32 7, %v808
      %v810 = vrot.slane %v799, %v809
      %v811 = vmul.f32 %v806, %v810
      %v812 = vld [vmem:[%s652] sm:$0x1]
      %v814 = vlaneseq
      %v815 = vshrl.u32 %v814, 7
      %v816 = vsub.s32 0, %v815
      %v817 = vrot.slane %v812, %v816
      %v819 = vmul.f32 %v705, %v817
      %v820 = vmul.f32 %v819, %v706
      %v821 = vld [vmem:[#allocation2] sm:$0xff]
      %v822 = vld [vmem:[#allocation2 + $0x8] sm:$0xff]
      %vm823 = vcmask 130048
      %v825 = vsel %vm823, %v802, 0
      %v828 = vsel %vm823, %v806, 0
      %830 = vmatprep.subr.mxu0 0.0
      %831 = vmatpush1.xpose.msra.mxu0 %v828
      %832 = vmatprep.subr.mxu0 0.0
      %833 = vmatpush1.xpose.msra.mxu0 0.0
      %834 = vmatprep.subr.mxu0 0.0
      %835 = vmatpush1.xpose.msra.mxu0 0.0
      %836 = vmatprep.subr.mxu0 0.0
      %837 = vmatpush1.xpose.msra.mxu0 0.0
      %838 = vmatprep.subr.mxu0 0.0
      %839 = vmatpush1.xpose.msra.mxu0 0.0
      %840 = vmatprep.subr.mxu0 0.0
      %841 = vmatpush1.xpose.msra.mxu0 0.0
      %842 = vmatprep.subr.mxu0 0.0
      %843 = vmatpush1.xpose.msra.mxu0 0.0
      %844 = vmatprep.subr.mxu0 0.0
      %845 = vmatpush1.xpose.msra.mxu0 0.0
      %846 = vmatprep.subr.mxu0 0.0
      %847 = vmatpush1.xpose.msra.mxu0 0.0
      %848 = vmatprep.subr.mxu0 0.0
      %849 = vmatpush1.xpose.msra.mxu0 0.0
      %850 = vmatprep.subr.mxu0 0.0
      %851 = vmatpush1.xpose.msra.mxu0 0.0
      %852 = vmatprep.subr.mxu0 0.0
      %853 = vmatpush1.xpose.msra.mxu0 0.0
      %854 = vmatprep.subr.mxu0 0.0
      %855 = vmatpush1.xpose.msra.mxu0 0.0
      %856 = vmatprep.subr.mxu0 0.0
      %857 = vmatpush1.xpose.msra.mxu0 0.0
      %858 = vmatprep.subr.mxu0 0.0
      %859 = vmatpush1.xpose.msra.mxu0 0.0
      %860 = vmatprep.subr.mxu0 0.0
      %861 = vmatpush1.xpose.msra.mxu0 0.0
      %862 = vmatprep.subr.mxu0 0.0
      %863 = vmatpush1.xpose.msra.mxu0 0.0
      %864 = vmatprep.subr.mxu0 0.0
      %865 = vmatpush1.xpose.msra.mxu0 0.0
      %866 = vmatprep.subr.mxu0 0.0
      %867 = vmatpush1.xpose.msra.mxu0 0.0
      %868 = vmatprep.subr.mxu0 0.0
      %869 = vmatpush1.xpose.msra.mxu0 0.0
      %870 = vmatprep.subr.mxu0 0.0
      %871 = vmatpush1.xpose.msra.mxu0 0.0
      %872 = vmatprep.subr.mxu0 0.0
      %873 = vmatpush1.xpose.msra.mxu0 0.0
      %874 = vmatprep.subr.mxu0 0.0
      %875 = vmatpush1.xpose.msra.mxu0 0.0
      %876 = vmatprep.subr.mxu0 0.0
      %877 = vmatpush1.xpose.msra.mxu0 0.0
      %878 = vmatprep.subr.mxu0 0.0
      %879 = vmatpush1.xpose.msra.mxu0 0.0
      %880 = vmatprep.subr.mxu0 0.0
      %881 = vmatpush1.xpose.msra.mxu0 0.0
      %882 = vmatprep.subr.mxu0 0.0
      %883 = vmatpush1.xpose.msra.mxu0 0.0
      %884 = vmatprep.subr.mxu0 0.0
      %885 = vmatpush1.xpose.msra.mxu0 0.0
      %886 = vmatprep.subr.mxu0 0.0
      %887 = vmatpush1.xpose.msra.mxu0 0.0
      %888 = vmatprep.subr.mxu0 0.0
      %889 = vmatpush1.xpose.msra.mxu0 0.0
      %890 = vmatprep.subr.mxu0 0.0
      %891 = vmatpush1.xpose.msra.mxu0 0.0
      %892 = vmatprep.subr.mxu0 0.0
      %893 = vmatpush1.xpose.msra.mxu0 0.0
      %894 = vmatprep.mubr.f32.mxu0 0.0
      %895 = vmatmul.mubr.f32.gmra.mrb[0].mxu0 %v825
      %v896 = vpop.f32.mrb[0].mxu0
      %v897 = vadd.f32 0.0, %v896
      %v898 = vpop.f32.mrb[0].mxu0
      %899 = vdwg.mxu0
      %v900 = vsel %vm823, %v820, 0.0
      %901 = vadd.xlane.f32.xlu0 %v900
      %v902 = vpop.xlane.xlu0 %901
      %vm903 = vcmp.gt.s32.totalorder %v714, %v716
      %v904 = vsel %vm903, %v897, 0.0
      %v905 = vmul.f32 %v722, %v902
      %v906 = vadd.f32 %v904, %v905
      %v908 = vsel %vm823, %v821, 0
      %v911 = vsel %vm823, %v822, 0
      %913 = vmatprep.subr.mxu0 0.0
      %914 = vmatpush1.xpose.msra.mxu0 %v908
      %915 = vmatprep.subr.mxu0 0.0
      %916 = vmatpush1.xpose.msra.mxu0 %v911
      %917 = vmatprep.subr.mxu0 0.0
      %918 = vmatpush1.xpose.msra.mxu0 0.0
      %919 = vmatprep.subr.mxu0 0.0
      %920 = vmatpush1.xpose.msra.mxu0 0.0
      %921 = vmatprep.subr.mxu0 0.0
      %922 = vmatpush1.xpose.msra.mxu0 0.0
      %923 = vmatprep.subr.mxu0 0.0
      %924 = vmatpush1.xpose.msra.mxu0 0.0
      %925 = vmatprep.subr.mxu0 0.0
      %926 = vmatpush1.xpose.msra.mxu0 0.0
      %927 = vmatprep.subr.mxu0 0.0
      %928 = vmatpush1.xpose.msra.mxu0 0.0
      %929 = vmatprep.subr.mxu0 0.0
      %930 = vmatpush1.xpose.msra.mxu0 0.0
      %931 = vmatprep.subr.mxu0 0.0
      %932 = vmatpush1.xpose.msra.mxu0 0.0
      %933 = vmatprep.subr.mxu0 0.0
      %934 = vmatpush1.xpose.msra.mxu0 0.0
      %935 = vmatprep.subr.mxu0 0.0
      %936 = vmatpush1.xpose.msra.mxu0 0.0
      %937 = vmatprep.subr.mxu0 0.0
      %938 = vmatpush1.xpose.msra.mxu0 0.0
      %939 = vmatprep.subr.mxu0 0.0
      %940 = vmatpush1.xpose.msra.mxu0 0.0
      %941 = vmatprep.subr.mxu0 0.0
      %942 = vmatpush1.xpose.msra.mxu0 0.0
      %943 = vmatprep.subr.mxu0 0.0
      %944 = vmatpush1.xpose.msra.mxu0 0.0
      %945 = vmatprep.subr.mxu0 0.0
      %946 = vmatpush1.xpose.msra.mxu0 0.0
      %947 = vmatprep.subr.mxu0 0.0
      %948 = vmatpush1.xpose.msra.mxu0 0.0
      %949 = vmatprep.subr.mxu0 0.0
      %950 = vmatpush1.xpose.msra.mxu0 0.0
      %951 = vmatprep.subr.mxu0 0.0
      %952 = vmatpush1.xpose.msra.mxu0 0.0
      %953 = vmatprep.subr.mxu0 0.0
      %954 = vmatpush1.xpose.msra.mxu0 0.0
      %955 = vmatprep.subr.mxu0 0.0
      %956 = vmatpush1.xpose.msra.mxu0 0.0
      %957 = vmatprep.subr.mxu0 0.0
      %958 = vmatpush1.xpose.msra.mxu0 0.0
      %959 = vmatprep.subr.mxu0 0.0
      %960 = vmatpush1.xpose.msra.mxu0 0.0
      %961 = vmatprep.subr.mxu0 0.0
      %962 = vmatpush1.xpose.msra.mxu0 0.0
      %963 = vmatprep.subr.mxu0 0.0
      %964 = vmatpush1.xpose.msra.mxu0 0.0
      %965 = vmatprep.subr.mxu0 0.0
      %966 = vmatpush1.xpose.msra.mxu0 0.0
      %967 = vmatprep.subr.mxu0 0.0
      %968 = vmatpush1.xpose.msra.mxu0 0.0
      %969 = vmatprep.subr.mxu0 0.0
      %970 = vmatpush1.xpose.msra.mxu0 0.0
      %971 = vmatprep.subr.mxu0 0.0
      %972 = vmatpush1.xpose.msra.mxu0 0.0
      %973 = vmatprep.subr.mxu0 0.0
      %974 = vmatpush1.xpose.msra.mxu0 0.0
      %975 = vmatprep.subr.mxu0 0.0
      %976 = vmatpush1.xpose.msra.mxu0 0.0
      %977 = vmatprep.mubr.f32.mxu0 0.0
      %978 = vmatmul.mubr.f32.gmra.mrb[0].mxu0 %v825
      %v979 = vpop.f32.mrb[0].mxu0
      %v980 = vadd.f32 0.0, %v979
      %v981 = vpop.f32.mrb[0].mxu0
      %982 = vdwg.mxu0
      %v984 = vsel %vm723, %v906, 0
      %986 = vmatprep.subr.mxu0 0.0
      %987 = vmatpush1.msra.mxu0 %v707
      %988 = vmatprep.subr.mxu0 0.0
      %989 = vmatpush1.msra.mxu0 0.0
      %990 = vmatprep.subr.mxu0 0.0
      %991 = vmatpush1.msra.mxu0 0.0
      %992 = vmatprep.subr.mxu0 0.0
      %993 = vmatpush1.msra.mxu0 0.0
      %994 = vmatprep.subr.mxu0 0.0
      %995 = vmatpush1.msra.mxu0 0.0
      %996 = vmatprep.subr.mxu0 0.0
      %997 = vmatpush1.msra.mxu0 0.0
      %998 = vmatprep.subr.mxu0 0.0
      %999 = vmatpush1.msra.mxu0 0.0
      %1000 = vmatprep.subr.mxu0 0.0
      %1001 = vmatpush1.msra.mxu0 0.0
      %1002 = vmatprep.subr.mxu0 0.0
      %1003 = vmatpush1.msra.mxu0 0.0
      %1004 = vmatprep.subr.mxu0 0.0
      %1005 = vmatpush1.msra.mxu0 0.0
      %1006 = vmatprep.subr.mxu0 0.0
      %1007 = vmatpush1.msra.mxu0 0.0
      %1008 = vmatprep.subr.mxu0 0.0
      %1009 = vmatpush1.msra.mxu0 0.0
      %1010 = vmatprep.subr.mxu0 0.0
      %1011 = vmatpush1.msra.mxu0 0.0
      %1012 = vmatprep.subr.mxu0 0.0
      %1013 = vmatpush1.msra.mxu0 0.0
      %1014 = vmatprep.subr.mxu0 0.0
      %1015 = vmatpush1.msra.mxu0 0.0
      %1016 = vmatprep.subr.mxu0 0.0
      %1017 = vmatpush1.msra.mxu0 0.0
      %1018 = vmatprep.subr.mxu0 0.0
      %1019 = vmatpush1.msra.mxu0 0.0
      %1020 = vmatprep.subr.mxu0 0.0
      %1021 = vmatpush1.msra.mxu0 0.0
      %1022 = vmatprep.subr.mxu0 0.0
      %1023 = vmatpush1.msra.mxu0 0.0
      %1024 = vmatprep.subr.mxu0 0.0
      %1025 = vmatpush1.msra.mxu0 0.0
      %1026 = vmatprep.subr.mxu0 0.0
      %1027 = vmatpush1.msra.mxu0 0.0
      %1028 = vmatprep.subr.mxu0 0.0
      %1029 = vmatpush1.msra.mxu0 0.0
      %1030 = vmatprep.subr.mxu0 0.0
      %1031 = vmatpush1.msra.mxu0 0.0
      %1032 = vmatprep.subr.mxu0 0.0
      %1033 = vmatpush1.msra.mxu0 0.0
      %1034 = vmatprep.subr.mxu0 0.0
      %1035 = vmatpush1.msra.mxu0 0.0
      %1036 = vmatprep.subr.mxu0 0.0
      %1037 = vmatpush1.msra.mxu0 0.0
      %1038 = vmatprep.subr.mxu0 0.0
      %1039 = vmatpush1.msra.mxu0 0.0
      %1040 = vmatprep.subr.mxu0 0.0
      %1041 = vmatpush1.msra.mxu0 0.0
      %1042 = vmatprep.subr.mxu0 0.0
      %1043 = vmatpush1.msra.mxu0 0.0
      %1044 = vmatprep.subr.mxu0 0.0
      %1045 = vmatpush1.msra.mxu0 0.0
      %1046 = vmatprep.subr.mxu0 0.0
      %1047 = vmatpush1.msra.mxu0 0.0
      %1048 = vmatprep.subr.mxu0 0.0
      %1049 = vmatpush1.msra.mxu0 0.0
      %1050 = vmatprep.mubr.f32.mxu0 0.0
      %1051 = vmatmul.mubr.f32.gmra.mrb[0].mxu0 %v984
      %v1052 = vpop.f32.mrb[0].mxu0
      %v1053 = vadd.f32 %v980, %v1052
      %v1054 = vpop.f32.mrb[0].mxu0
      %1055 = vdwg.mxu0
      %v1056 = vmul.f32 %v821, %v810
      %v1057 = vmul.f32 %v822, %v810
      %1058 = vxpose.xlu0.b32.start [1/16] %v707, 128
      %1059 = vxpose.xlu0.b32.cont [2/16] 0.0, 128
      %1060 = vxpose.xlu0.b32.cont [3/16] 0.0, 128
      %1061 = vxpose.xlu0.b32.cont [4/16] 0.0, 128
      %1062 = vxpose.xlu0.b32.cont [5/16] 0.0, 128
      %1063 = vxpose.xlu0.b32.cont [6/16] 0.0, 128
      %1064 = vxpose.xlu0.b32.cont [7/16] 0.0, 128
      %1065 = vxpose.xlu0.b32.cont [8/16] 0.0, 128
      %1066 = vxpose.xlu0.b32.cont [9/16] 0.0, 128
      %1067 = vxpose.xlu0.b32.cont [10/16] 0.0, 128
      %1068 = vxpose.xlu0.b32.cont [11/16] 0.0, 128
      %1069 = vxpose.xlu0.b32.cont [12/16] 0.0, 128
      %1070 = vxpose.xlu0.b32.cont [13/16] 0.0, 128
      %1071 = vxpose.xlu0.b32.cont [14/16] 0.0, 128
      %1072 = vxpose.xlu0.b32.cont [15/16] 0.0, 128
      %1073 = vxpose.xlu0.b32.end [16/16] 0.0, 128
      %v1074 = vpop.trf.xlu0
      %v1075 = vpop.trf.xlu0
      %v1076 = vpop.trf.xlu0
      %v1077 = vpop.trf.xlu0
      %v1078 = vpop.trf.xlu0
      %v1079 = vpop.trf.xlu0
      %v1080 = vpop.trf.xlu0
      %v1081 = vpop.trf.xlu0
      %v1082 = vpop.trf.xlu0
      %v1083 = vpop.trf.xlu0
      %v1084 = vpop.trf.xlu0
      %v1085 = vpop.trf.xlu0
      %v1086 = vpop.trf.xlu0
      %v1087 = vpop.trf.xlu0
      %v1088 = vpop.trf.xlu0
      %v1089 = vpop.trf.xlu0
      %v1091 = vsel %vm723, %v1074, 0
      %v1094 = vsel %vm723, %v1075, 0
      %1096 = vmatprep.subr.mxu0 0.0
      %1097 = vmatpush1.msra.mxu0 %v811
      %1098 = vmatprep.subr.mxu0 0.0
      %1099 = vmatpush1.msra.mxu0 0.0
      %1100 = vmatprep.subr.mxu0 0.0
      %1101 = vmatpush1.msra.mxu0 0.0
      %1102 = vmatprep.subr.mxu0 0.0
      %1103 = vmatpush1.msra.mxu0 0.0
      %1104 = vmatprep.subr.mxu0 0.0
      %1105 = vmatpush1.msra.mxu0 0.0
      %1106 = vmatprep.subr.mxu0 0.0
      %1107 = vmatpush1.msra.mxu0 0.0
      %1108 = vmatprep.subr.mxu0 0.0
      %1109 = vmatpush1.msra.mxu0 0.0
      %1110 = vmatprep.subr.mxu0 0.0
      %1111 = vmatpush1.msra.mxu0 0.0
      %1112 = vmatprep.subr.mxu0 0.0
      %1113 = vmatpush1.msra.mxu0 0.0
      %1114 = vmatprep.subr.mxu0 0.0
      %1115 = vmatpush1.msra.mxu0 0.0
      %1116 = vmatprep.subr.mxu0 0.0
      %1117 = vmatpush1.msra.mxu0 0.0
      %1118 = vmatprep.subr.mxu0 0.0
      %1119 = vmatpush1.msra.mxu0 0.0
      %1120 = vmatprep.subr.mxu0 0.0
      %1121 = vmatpush1.msra.mxu0 0.0
      %1122 = vmatprep.subr.mxu0 0.0
      %1123 = vmatpush1.msra.mxu0 0.0
      %1124 = vmatprep.subr.mxu0 0.0
      %1125 = vmatpush1.msra.mxu0 0.0
      %1126 = vmatprep.subr.mxu0 0.0
      %1127 = vmatpush1.msra.mxu0 0.0
      %1128 = vmatprep.subr.mxu0 0.0
      %1129 = vmatpush1.msra.mxu0 0.0
      %1130 = vmatprep.subr.mxu0 0.0
      %1131 = vmatpush1.msra.mxu0 0.0
      %1132 = vmatprep.subr.mxu0 0.0
      %1133 = vmatpush1.msra.mxu0 0.0
      %1134 = vmatprep.subr.mxu0 0.0
      %1135 = vmatpush1.msra.mxu0 0.0
      %1136 = vmatprep.subr.mxu0 0.0
      %1137 = vmatpush1.msra.mxu0 0.0
      %1138 = vmatprep.subr.mxu0 0.0
      %1139 = vmatpush1.msra.mxu0 0.0
      %1140 = vmatprep.subr.mxu0 0.0
      %1141 = vmatpush1.msra.mxu0 0.0
      %1142 = vmatprep.subr.mxu0 0.0
      %1143 = vmatpush1.msra.mxu0 0.0
      %1144 = vmatprep.subr.mxu0 0.0
      %1145 = vmatpush1.msra.mxu0 0.0
      %1146 = vmatprep.subr.mxu0 0.0
      %1147 = vmatpush1.msra.mxu0 0.0
      %1148 = vmatprep.subr.mxu0 0.0
      %1149 = vmatpush1.msra.mxu0 0.0
      %1150 = vmatprep.subr.mxu0 0.0
      %1151 = vmatpush1.msra.mxu0 0.0
      %1152 = vmatprep.subr.mxu0 0.0
      %1153 = vmatpush1.msra.mxu0 0.0
      %1154 = vmatprep.subr.mxu0 0.0
      %1155 = vmatpush1.msra.mxu0 0.0
      %1156 = vmatprep.subr.mxu0 0.0
      %1157 = vmatpush1.msra.mxu0 0.0
      %1158 = vmatprep.subr.mxu0 0.0
      %1159 = vmatpush1.msra.mxu0 0.0
      %1160 = vmatprep.mubr.f32.mxu0 0.0
      %1161 = vmatmul.mubr.f32.gmra.mrb[0].mxu0 %v1091
      %v1162 = vpop.f32.mrb[0].mxu0
      %v1163 = vadd.f32 0.0, %v1162
      %v1164 = vpop.f32.mrb[0].mxu0
      %1165 = vmatprep.mubr.f32.mxu0 0.0
      %1166 = vmatmul.mubr.f32.gmra.mrb[0].mxu0 %v1094
      %v1167 = vpop.f32.mrb[0].mxu0
      %v1168 = vadd.f32 0.0, %v1167
      %v1169 = vpop.f32.mrb[0].mxu0
      %1170 = vdwg.mxu0
      %v1171 = vadd.f32 %v1056, %v1163
      %v1172 = vadd.f32 %v1057, %v1168
      %1173 = vst.msk [vmem:[#allocation2] sm:$0xff] %vm823, %v1171
      %1174 = vst.msk [vmem:[#allocation2 + $0x8] sm:$0xff] %vm823, %v1172
      %v1175 = vsel %vm823, %v1053, 0.0
      %1176 = vadd.xlane.f32.xlu0 %v1175
      %v1177 = vpop.xlane.xlu0 %1176
      %v1178 = vrcp.pop 16.0
      %v1179 = vmul.f32 %v1177, %v1178
      %v1180 = vsub.f32 %v1053, %v1179
      %v1181 = vmul.f32 %v1180, %v1180
      %v1182 = vsel %vm823, %v1181, 0.0
      %1183 = vadd.xlane.f32.xlu0 %v1182
      %v1184 = vpop.xlane.xlu0 %1183
      %v1185 = vmul.f32 %v1184, %v1178
      %v1186 = vadd.f32 %v1185, 0.00064
      %v1187 = vrsqrt.pop %v1186
      %v1188 = vmul.f32 %v1180, %v1187
      %v1189 = vld [vmem:[%s655] sm:$0x1]
      %v1191 = vlaneseq
      %v1192 = vshrl.u32 %v1191, 7
      %v1193 = vsub.s32 0, %v1192
      %v1194 = vrot.slane %v1189, %v1193
      %v1196 = vmul.f32 %v1188, %v1194
      %v1197 = vld [vmem:[%s658] sm:$0x1]
      %v1199 = vlaneseq
      %v1200 = vshrl.u32 %v1199, 7
      %v1201 = vsub.s32 0, %v1200
      %v1202 = vrot.slane %v1197, %v1201
      %v1204 = vadd.f32 %v1196, %v1202
      %1205 = vst.msk [vmem:[#allocation3] sm:$0xff] %vm823, %v1204
      %s1206 = scalar_lea.vmem [#allocation2], 16
      %v1207 = vld [vmem:[%s1206] sm:$0xff]
      %v1208 = vld [vmem:[%s1206 + $0x8] sm:$0xff]
      %1209 = vrot.lane.b32.xlu0 %v802, 112
      %v1210 = vpop.permute.xlu0 %1209
      %1211 = vrot.lane.b32.xlu0 %v806, 112
      %v1212 = vpop.permute.xlu0 %1211
      %v1213 = vsel %vm823, %v1210, 0
      %v1215 = vsel %vm823, %v1212, 0
      %1217 = vmatprep.subr.mxu0 0.0
      %1218 = vmatpush1.xpose.msra.mxu0 %v1215
      %1219 = vmatprep.subr.mxu0 0.0
      %1220 = vmatpush1.xpose.msra.mxu0 0.0
      %1221 = vmatprep.subr.mxu0 0.0
      %1222 = vmatpush1.xpose.msra.mxu0 0.0
      %1223 = vmatprep.subr.mxu0 0.0
      %1224 = vmatpush1.xpose.msra.mxu0 0.0
      %1225 = vmatprep.subr.mxu0 0.0
      %1226 = vmatpush1.xpose.msra.mxu0 0.0
      %1227 = vmatprep.subr.mxu0 0.0
      %1228 = vmatpush1.xpose.msra.mxu0 0.0
      %1229 = vmatprep.subr.mxu0 0.0
      %1230 = vmatpush1.xpose.msra.mxu0 0.0
      %1231 = vmatprep.subr.mxu0 0.0
      %1232 = vmatpush1.xpose.msra.mxu0 0.0
      %1233 = vmatprep.subr.mxu0 0.0
      %1234 = vmatpush1.xpose.msra.mxu0 0.0
      %1235 = vmatprep.subr.mxu0 0.0
      %1236 = vmatpush1.xpose.msra.mxu0 0.0
      %1237 = vmatprep.subr.mxu0 0.0
      %1238 = vmatpush1.xpose.msra.mxu0 0.0
      %1239 = vmatprep.subr.mxu0 0.0
      %1240 = vmatpush1.xpose.msra.mxu0 0.0
      %1241 = vmatprep.subr.mxu0 0.0
      %1242 = vmatpush1.xpose.msra.mxu0 0.0
      %1243 = vmatprep.subr.mxu0 0.0
      %1244 = vmatpush1.xpose.msra.mxu0 0.0
      %1245 = vmatprep.subr.mxu0 0.0
      %1246 = vmatpush1.xpose.msra.mxu0 0.0
      %1247 = vmatprep.subr.mxu0 0.0
      %1248 = vmatpush1.xpose.msra.mxu0 0.0
      %1249 = vmatprep.subr.mxu0 0.0
      %1250 = vmatpush1.xpose.msra.mxu0 0.0
      %1251 = vmatprep.subr.mxu0 0.0
      %1252 = vmatpush1.xpose.msra.mxu0 0.0
      %1253 = vmatprep.subr.mxu0 0.0
      %1254 = vmatpush1.xpose.msra.mxu0 0.0
      %1255 = vmatprep.subr.mxu0 0.0
      %1256 = vmatpush1.xpose.msra.mxu0 0.0
      %1257 = vmatprep.subr.mxu0 0.0
      %1258 = vmatpush1.xpose.msra.mxu0 0.0
      %1259 = vmatprep.subr.mxu0 0.0
      %1260 = vmatpush1.xpose.msra.mxu0 0.0
      %1261 = vmatprep.subr.mxu0 0.0
      %1262 = vmatpush1.xpose.msra.mxu0 0.0
      %1263 = vmatprep.subr.mxu0 0.0
      %1264 = vmatpush1.xpose.msra.mxu0 0.0
      %1265 = vmatprep.subr.mxu0 0.0
      %1266 = vmatpush1.xpose.msra.mxu0 0.0
      %1267 = vmatprep.subr.mxu0 0.0
      %1268 = vmatpush1.xpose.msra.mxu0 0.0
      %1269 = vmatprep.subr.mxu0 0.0
      %1270 = vmatpush1.xpose.msra.mxu0 0.0
      %1271 = vmatprep.subr.mxu0 0.0
      %1272 = vmatpush1.xpose.msra.mxu0 0.0
      %1273 = vmatprep.subr.mxu0 0.0
      %1274 = vmatpush1.xpose.msra.mxu0 0.0
      %1275 = vmatprep.subr.mxu0 0.0
      %1276 = vmatpush1.xpose.msra.mxu0 0.0
      %1277 = vmatprep.subr.mxu0 0.0
      %1278 = vmatpush1.xpose.msra.mxu0 0.0
      %1279 = vmatprep.subr.mxu0 0.0
      %1280 = vmatpush1.xpose.msra.mxu0 0.0
      %1281 = vmatprep.mubr.f32.mxu0 0.0
      %1282 = vmatmul.mubr.f32.gmra.mrb[0].mxu0 %v1213
      %v1283 = vpop.f32.mrb[0].mxu0
      %v1284 = vadd.f32 0.0, %v1283
      %v1285 = vpop.f32.mrb[0].mxu0
      %1286 = vdwg.mxu0
      %1288 = vrot.lane.b32.xlu0 %v820, 112
      %v1289 = vpop.permute.xlu0 %1288
      %v1291 = vsel %vm823, %v1289, 0.0
      %1292 = vadd.xlane.f32.xlu0 %v1291
      %v1293 = vpop.xlane.xlu0 %1292
      %v1294 = vsel %vm903, %v1284, 0.0
      %v1295 = vmul.f32 %v722, %v1293
      %v1296 = vadd.f32 %v1294, %v1295
      %v1298 = vsel %vm823, %v1207, 0
      %v1301 = vsel %vm823, %v1208, 0
      %1303 = vmatprep.subr.mxu0 0.0
      %1304 = vmatpush1.xpose.msra.mxu0 %v1298
      %1305 = vmatprep.subr.mxu0 0.0
      %1306 = vmatpush1.xpose.msra.mxu0 %v1301
      %1307 = vmatprep.subr.mxu0 0.0
      %1308 = vmatpush1.xpose.msra.mxu0 0.0
      %1309 = vmatprep.subr.mxu0 0.0
      %1310 = vmatpush1.xpose.msra.mxu0 0.0
      %1311 = vmatprep.subr.mxu0 0.0
      %1312 = vmatpush1.xpose.msra.mxu0 0.0
      %1313 = vmatprep.subr.mxu0 0.0
      %1314 = vmatpush1.xpose.msra.mxu0 0.0
      %1315 = vmatprep.subr.mxu0 0.0
      %1316 = vmatpush1.xpose.msra.mxu0 0.0
      %1317 = vmatprep.subr.mxu0 0.0
      %1318 = vmatpush1.xpose.msra.mxu0 0.0
      %1319 = vmatprep.subr.mxu0 0.0
      %1320 = vmatpush1.xpose.msra.mxu0 0.0
      %1321 = vmatprep.subr.mxu0 0.0
      %1322 = vmatpush1.xpose.msra.mxu0 0.0
      %1323 = vmatprep.subr.mxu0 0.0
      %1324 = vmatpush1.xpose.msra.mxu0 0.0
      %1325 = vmatprep.subr.mxu0 0.0
      %1326 = vmatpush1.xpose.msra.mxu0 0.0
      %1327 = vmatprep.subr.mxu0 0.0
      %1328 = vmatpush1.xpose.msra.mxu0 0.0
      %1329 = vmatprep.subr.mxu0 0.0
      %1330 = vmatpush1.xpose.msra.mxu0 0.0
      %1331 = vmatprep.subr.mxu0 0.0
      %1332 = vmatpush1.xpose.msra.mxu0 0.0
      %1333 = vmatprep.subr.mxu0 0.0
      %1334 = vmatpush1.xpose.msra.mxu0 0.0
      %1335 = vmatprep.subr.mxu0 0.0
      %1336 = vmatpush1.xpose.msra.mxu0 0.0
      %1337 = vmatprep.subr.mxu0 0.0
      %1338 = vmatpush1.xpose.msra.mxu0 0.0
      %1339 = vmatprep.subr.mxu0 0.0
      %1340 = vmatpush1.xpose.msra.mxu0 0.0
      %1341 = vmatprep.subr.mxu0 0.0
      %1342 = vmatpush1.xpose.msra.mxu0 0.0
      %1343 = vmatprep.subr.mxu0 0.0
      %1344 = vmatpush1.xpose.msra.mxu0 0.0
      %1345 = vmatprep.subr.mxu0 0.0
      %1346 = vmatpush1.xpose.msra.mxu0 0.0
      %1347 = vmatprep.subr.mxu0 0.0
      %1348 = vmatpush1.xpose.msra.mxu0 0.0
      %1349 = vmatprep.subr.mxu0 0.0
      %1350 = vmatpush1.xpose.msra.mxu0 0.0
      %1351 = vmatprep.subr.mxu0 0.0
      %1352 = vmatpush1.xpose.msra.mxu0 0.0
      %1353 = vmatprep.subr.mxu0 0.0
      %1354 = vmatpush1.xpose.msra.mxu0 0.0
      %1355 = vmatprep.subr.mxu0 0.0
      %1356 = vmatpush1.xpose.msra.mxu0 0.0
      %1357 = vmatprep.subr.mxu0 0.0
      %1358 = vmatpush1.xpose.msra.mxu0 0.0
      %1359 = vmatprep.subr.mxu0 0.0
      %1360 = vmatpush1.xpose.msra.mxu0 0.0
      %1361 = vmatprep.subr.mxu0 0.0
      %1362 = vmatpush1.xpose.msra.mxu0 0.0
      %1363 = vmatprep.subr.mxu0 0.0
      %1364 = vmatpush1.xpose.msra.mxu0 0.0
      %1365 = vmatprep.subr.mxu0 0.0
      %1366 = vmatpush1.xpose.msra.mxu0 0.0
      %1367 = vmatprep.mubr.f32.mxu0 0.0
      %1368 = vmatmul.mubr.f32.gmra.mrb[0].mxu0 %v1213
      %v1369 = vpop.f32.mrb[0].mxu0
      %v1370 = vadd.f32 0.0, %v1369
      %v1371 = vpop.f32.mrb[0].mxu0
      %1372 = vdwg.mxu0
      %1374 = vrot.lane.b32.xlu0 %v707, 112
      %v1375 = vpop.permute.xlu0 %1374
      %v1378 = vsel %vm723, %v1296, 0
      %1380 = vmatprep.subr.mxu0 0.0
      %1381 = vmatpush1.msra.mxu0 %v1375
      %1382 = vmatprep.subr.mxu0 0.0
      %1383 = vmatpush1.msra.mxu0 0.0
      %1384 = vmatprep.subr.mxu0 0.0
      %1385 = vmatpush1.msra.mxu0 0.0
      %1386 = vmatprep.subr.mxu0 0.0
      %1387 = vmatpush1.msra.mxu0 0.0
      %1388 = vmatprep.subr.mxu0 0.0
      %1389 = vmatpush1.msra.mxu0 0.0
      %1390 = vmatprep.subr.mxu0 0.0
      %1391 = vmatpush1.msra.mxu0 0.0
      %1392 = vmatprep.subr.mxu0 0.0
      %1393 = vmatpush1.msra.mxu0 0.0
      %1394 = vmatprep.subr.mxu0 0.0
      %1395 = vmatpush1.msra.mxu0 0.0
      %1396 = vmatprep.subr.mxu0 0.0
      %1397 = vmatpush1.msra.mxu0 0.0
      %1398 = vmatprep.subr.mxu0 0.0
      %1399 = vmatpush1.msra.mxu0 0.0
      %1400 = vmatprep.subr.mxu0 0.0
      %1401 = vmatpush1.msra.mxu0 0.0
      %1402 = vmatprep.subr.mxu0 0.0
      %1403 = vmatpush1.msra.mxu0 0.0
      %1404 = vmatprep.subr.mxu0 0.0
      %1405 = vmatpush1.msra.mxu0 0.0
      %1406 = vmatprep.subr.mxu0 0.0
      %1407 = vmatpush1.msra.mxu0 0.0
      %1408 = vmatprep.subr.mxu0 0.0
      %1409 = vmatpush1.msra.mxu0 0.0
      %1410 = vmatprep.subr.mxu0 0.0
      %1411 = vmatpush1.msra.mxu0 0.0
      %1412 = vmatprep.subr.mxu0 0.0
      %1413 = vmatpush1.msra.mxu0 0.0
      %1414 = vmatprep.subr.mxu0 0.0
      %1415 = vmatpush1.msra.mxu0 0.0
      %1416 = vmatprep.subr.mxu0 0.0
      %1417 = vmatpush1.msra.mxu0 0.0
      %1418 = vmatprep.subr.mxu0 0.0
      %1419 = vmatpush1.msra.mxu0 0.0
      %1420 = vmatprep.subr.mxu0 0.0
      %1421 = vmatpush1.msra.mxu0 0.0
      %1422 = vmatprep.subr.mxu0 0.0
      %1423 = vmatpush1.msra.mxu0 0.0
      %1424 = vmatprep.subr.mxu0 0.0
      %1425 = vmatpush1.msra.mxu0 0.0
      %1426 = vmatprep.subr.mxu0 0.0
      %1427 = vmatpush1.msra.mxu0 0.0
      %1428 = vmatprep.subr.mxu0 0.0
      %1429 = vmatpush1.msra.mxu0 0.0
      %1430 = vmatprep.subr.mxu0 0.0
      %1431 = vmatpush1.msra.mxu0 0.0
      %1432 = vmatprep.subr.mxu0 0.0
      %1433 = vmatpush1.msra.mxu0 0.0
      %1434 = vmatprep.subr.mxu0 0.0
      %1435 = vmatpush1.msra.mxu0 0.0
      %1436 = vmatprep.subr.mxu0 0.0
      %1437 = vmatpush1.msra.mxu0 0.0
      %1438 = vmatprep.subr.mxu0 0.0
      %1439 = vmatpush1.msra.mxu0 0.0
      %1440 = vmatprep.subr.mxu0 0.0
      %1441 = vmatpush1.msra.mxu0 0.0
      %1442 = vmatprep.subr.mxu0 0.0
      %1443 = vmatpush1.msra.mxu0 0.0
      %1444 = vmatprep.mubr.f32.mxu0 0.0
      %1445 = vmatmul.mubr.f32.gmra.mrb[0].mxu0 %v1378
      %v1446 = vpop.f32.mrb[0].mxu0
      %v1447 = vadd.f32 %v1370, %v1446
      %v1448 = vpop.f32.mrb[0].mxu0
      %1449 = vdwg.mxu0
      %1451 = vrot.lane.b32.xlu0 %v810, 112
      %v1452 = vpop.permute.xlu0 %1451
      %v1454 = vmul.f32 %v1207, %v1452
      %v1455 = vmul.f32 %v1208, %v1452
      %1456 = vxpose.xlu0.b32.start [1/16] %v1375, 128
      %1457 = vxpose.xlu0.b32.cont [2/16] 0.0, 128
      %1458 = vxpose.xlu0.b32.cont [3/16] 0.0, 128
      %1459 = vxpose.xlu0.b32.cont [4/16] 0.0, 128
      %1460 = vxpose.xlu0.b32.cont [5/16] 0.0, 128
      %1461 = vxpose.xlu0.b32.cont [6/16] 0.0, 128
      %1462 = vxpose.xlu0.b32.cont [7/16] 0.0, 128
      %1463 = vxpose.xlu0.b32.cont [8/16] 0.0, 128
      %1464 = vxpose.xlu0.b32.cont [9/16] 0.0, 128
      %1465 = vxpose.xlu0.b32.cont [10/16] 0.0, 128
      %1466 = vxpose.xlu0.b32.cont [11/16] 0.0, 128
      %1467 = vxpose.xlu0.b32.cont [12/16] 0.0, 128
      %1468 = vxpose.xlu0.b32.cont [13/16] 0.0, 128
      %1469 = vxpose.xlu0.b32.cont [14/16] 0.0, 128
      %1470 = vxpose.xlu0.b32.cont [15/16] 0.0, 128
      %1471 = vxpose.xlu0.b32.end [16/16] 0.0, 128
      %v1472 = vpop.trf.xlu0
      %v1473 = vpop.trf.xlu0
      %v1474 = vpop.trf.xlu0
      %v1475 = vpop.trf.xlu0
      %v1476 = vpop.trf.xlu0
      %v1477 = vpop.trf.xlu0
      %v1478 = vpop.trf.xlu0
      %v1479 = vpop.trf.xlu0
      %v1480 = vpop.trf.xlu0
      %v1481 = vpop.trf.xlu0
      %v1482 = vpop.trf.xlu0
      %v1483 = vpop.trf.xlu0
      %v1484 = vpop.trf.xlu0
      %v1485 = vpop.trf.xlu0
      %v1486 = vpop.trf.xlu0
      %v1487 = vpop.trf.xlu0
      %1489 = vrot.lane.b32.xlu0 %v811, 112
      %v1490 = vpop.permute.xlu0 %1489
      %v1493 = vsel %vm723, %v1472, 0
      %v1496 = vsel %vm723, %v1473, 0
      %1498 = vmatprep.subr.mxu0 0.0
      %1499 = vmatpush1.msra.mxu0 %v1490
      %1500 = vmatprep.subr.mxu0 0.0
      %1501 = vmatpush1.msra.mxu0 0.0
      %1502 = vmatprep.subr.mxu0 0.0
      %1503 = vmatpush1.msra.mxu0 0.0
      %1504 = vmatprep.subr.mxu0 0.0
      %1505 = vmatpush1.msra.mxu0 0.0
      %1506 = vmatprep.subr.mxu0 0.0
      %1507 = vmatpush1.msra.mxu0 0.0
      %1508 = vmatprep.subr.mxu0 0.0
      %1509 = vmatpush1.msra.mxu0 0.0
      %1510 = vmatprep.subr.mxu0 0.0
      %1511 = vmatpush1.msra.mxu0 0.0
      %1512 = vmatprep.subr.mxu0 0.0
      %1513 = vmatpush1.msra.mxu0 0.0
      %1514 = vmatprep.subr.mxu0 0.0
      %1515 = vmatpush1.msra.mxu0 0.0
      %1516 = vmatprep.subr.mxu0 0.0
      %1517 = vmatpush1.msra.mxu0 0.0
      %1518 = vmatprep.subr.mxu0 0.0
      %1519 = vmatpush1.msra.mxu0 0.0
      %1520 = vmatprep.subr.mxu0 0.0
      %1521 = vmatpush1.msra.mxu0 0.0
      %1522 = vmatprep.subr.mxu0 0.0
      %1523 = vmatpush1.msra.mxu0 0.0
      %1524 = vmatprep.subr.mxu0 0.0
      %1525 = vmatpush1.msra.mxu0 0.0
      %1526 = vmatprep.subr.mxu0 0.0
      %1527 = vmatpush1.msra.mxu0 0.0
      %1528 = vmatprep.subr.mxu0 0.0
      %1529 = vmatpush1.msra.mxu0 0.0
      %1530 = vmatprep.subr.mxu0 0.0
      %1531 = vmatpush1.msra.mxu0 0.0
      %1532 = vmatprep.subr.mxu0 0.0
      %1533 = vmatpush1.msra.mxu0 0.0
      %1534 = vmatprep.subr.mxu0 0.0
      %1535 = vmatpush1.msra.mxu0 0.0
      %1536 = vmatprep.subr.mxu0 0.0
      %1537 = vmatpush1.msra.mxu0 0.0
      %1538 = vmatprep.subr.mxu0 0.0
      %1539 = vmatpush1.msra.mxu0 0.0
      %1540 = vmatprep.subr.mxu0 0.0
      %1541 = vmatpush1.msra.mxu0 0.0
      %1542 = vmatprep.subr.mxu0 0.0
      %1543 = vmatpush1.msra.mxu0 0.0
      %1544 = vmatprep.subr.mxu0 0.0
      %1545 = vmatpush1.msra.mxu0 0.0
      %1546 = vmatprep.subr.mxu0 0.0
      %1547 = vmatpush1.msra.mxu0 0.0
      %1548 = vmatprep.subr.mxu0 0.0
      %1549 = vmatpush1.msra.mxu0 0.0
      %1550 = vmatprep.subr.mxu0 0.0
      %1551 = vmatpush1.msra.mxu0 0.0
      %1552 = vmatprep.subr.mxu0 0.0
      %1553 = vmatpush1.msra.mxu0 0.0
      %1554 = vmatprep.subr.mxu0 0.0
      %1555 = vmatpush1.msra.mxu0 0.0
      %1556 = vmatprep.subr.mxu0 0.0
      %1557 = vmatpush1.msra.mxu0 0.0
      %1558 = vmatprep.subr.mxu0 0.0
      %1559 = vmatpush1.msra.mxu0 0.0
      %1560 = vmatprep.subr.mxu0 0.0
      %1561 = vmatpush1.msra.mxu0 0.0
      %1562 = vmatprep.mubr.f32.mxu0 0.0
      %1563 = vmatmul.mubr.f32.gmra.mrb[0].mxu0 %v1493
      %v1564 = vpop.f32.mrb[0].mxu0
      %v1565 = vadd.f32 0.0, %v1564
      %v1566 = vpop.f32.mrb[0].mxu0
      %1567 = vmatprep.mubr.f32.mxu0 0.0
      %1568 = vmatmul.mubr.f32.gmra.mrb[0].mxu0 %v1496
      %v1569 = vpop.f32.mrb[0].mxu0
      %v1570 = vadd.f32 0.0, %v1569
      %v1571 = vpop.f32.mrb[0].mxu0
      %1572 = vdwg.mxu0
      %v1573 = vadd.f32 %v1454, %v1565
      %v1574 = vadd.f32 %v1455, %v1570
      %1575 = vst.msk [vmem:[%s1206] sm:$0xff] %vm823, %v1573
      %1576 = vst.msk [vmem:[%s1206 + $0x8] sm:$0xff] %vm823, %v1574
      %v1577 = vsel %vm823, %v1447, 0.0
      %1578 = vadd.xlane.f32.xlu0 %v1577
      %v1579 = vpop.xlane.xlu0 %1578
      %v1580 = vmul.f32 %v1579, %v1178
      %v1581 = vsub.f32 %v1447, %v1580
      %v1582 = vmul.f32 %v1581, %v1581
      %v1583 = vsel %vm823, %v1582, 0.0
      %1584 = vadd.xlane.f32.xlu0 %v1583
      %v1585 = vpop.xlane.xlu0 %1584
      %v1586 = vmul.f32 %v1585, %v1178
      %v1587 = vadd.f32 %v1586, 0.00064
      %v1588 = vrsqrt.pop %v1587
      %v1589 = vmul.f32 %v1581, %v1588
      %v1590 = vld [vmem:[%s655] sm:$0x1]
      %v1592 = vlaneseq
      %v1593 = vshrl.u32 %v1592, 7
      %v1594 = vsub.s32 0, %v1593
      %v1595 = vrot.slane %v1590, %v1594
      %1596 = vrot.lane.b32.xlu0 %v1595, 112
      %v1597 = vpop.permute.xlu0 %1596
      %v1599 = vmul.f32 %v1589, %v1597
      %v1600 = vld [vmem:[%s658] sm:$0x1]
      %v1602 = vlaneseq
      %v1603 = vshrl.u32 %v1602, 7
      %v1604 = vsub.s32 0, %v1603
      %v1605 = vrot.slane %v1600, %v1604
      %1606 = vrot.lane.b32.xlu0 %v1605, 112
      %v1607 = vpop.permute.xlu0 %1606
      %v1609 = vadd.f32 %v1599, %v1607
      %1611 = vrot.lane.b32.xlu0 %v1609, 16
      %v1612 = vpop.permute.xlu0 %1611
      %vm1614 = vcmask 261248
      %1615 = vst.msk [vmem:[#allocation3] sm:$0xff] %vm1614, %v1612
      %v1616 = vld [vmem:[#allocation3] sm:$0xff]
      %v1617 = vmul.f32 %v1616, %v708
      %vm1618 = vcmask 261120
      %1619 = vst.msk [vmem:[%s678] sm:$0xff] %vm1618, %v1617
      %p1620 = scmp.eq.s32.totalorder %s29, 1
      // Predicated region
      $region61: #{rwkv6_attention_forward.4} parent=55 // pred_check
        %p1621 = pneg %p1620
      $region62: #{rwkv6_attention_forward.4} parent=55 // pred_check_branch
        %1623 = sbr.rel (%p1621) target = $region64
      $region63: #{rwkv6_attention_forward.4} parent=55 // pred_region
        %v1624 = vld [vmem:[#allocation2] sm:$0xff]
        %v1625 = vld [vmem:[#allocation2 + $0x8] sm:$0xff]
        %v1626 = vld [vmem:[#allocation2 + $0x10] sm:$0xff]
        %v1627 = vld [vmem:[#allocation2 + $0x18] sm:$0xff]
        %1628 = vst.msk [vmem:[%s690] sm:$0xff] %vm823, %v1624
        %1629 = vst.msk [vmem:[%s690 + $0x8] sm:$0xff] %vm823, %v1625
        %1630 = vst.msk [vmem:[%s690 + $0x10] sm:$0xff] %vm823, %v1626
        %1631 = vst.msk [vmem:[%s690 + $0x18] sm:$0xff] %vm823, %v1627
      $region64: #{rwkv6_attention_forward.4} parent=55 // pred_fallthru
        _
      %s1632 = smul.u32 %s27, 2
      %s1633 = sadd.s32 %s1632, %s29
      %p1634 = scmp.lt.s32.totalorder %s1633, 3
      %s1635 = scalar_select %p1634, %s1633, 3
      %p1636 = scmp.lt.s32.totalorder %s28, 0
      %s1637 = scalar_select %p1636, %s28, 0
      %s1638 = sadd.s32 %s1637, %s1635
      %s1639 = smul.addr %s1638, 8
      %s1640 = scalar_lea.vmem %s9, %s1639
      %s1641 = smul.u32 2, %s28
      %p1642 = scmp.lt.s32.totalorder %s27, 1
      %s1643 = scalar_select %p1642, %s27, 1
      %p1644 = scmp.lt.s32.totalorder %s1641, 1
      %s1645 = scalar_select %p1644, %s1641, 1
      %s1646 = smul.addr %s1645, 2
      %s1647 = smul.addr %s1643, 4
      %s1648 = sadd.s32 %s1646, %s1647
      %s1649 = smul.addr %s1648, 8
      %s1650 = scalar_lea.vmem %s10, %s1649
      // Predicated region
      $region65: #{rwkv6_attention_forward.4} parent=55 // pred_check
        %p1651 = pneg %p331
      $region66: #{rwkv6_attention_forward.4} parent=55 // pred_check_branch
        %1653 = sbr.rel (%p1651) target = $region68
      $region67: #{rwkv6_attention_forward.4} parent=55 // pred_region
        %s1654 = smul.u32 %s27, 2
        %s1655 = sadd.s32 %s1654, %s29
      $region68: #{rwkv6_attention_forward.4} parent=55 // pred_fallthru
        _
      // Predicated region
      $region69: #{rwkv6_attention_forward.4} parent=55 // pred_check
        %p1656 = pneg %p359
      $region70: #{rwkv6_attention_forward.4} parent=55 // pred_check_branch
        %1658 = sbr.rel (%p1656) target = $region72
      $region71: #{rwkv6_attention_forward.4} parent=55 // pred_region
        %s1659 = smul.u32 2, %s28
      $region72: #{rwkv6_attention_forward.4} parent=55 // pred_fallthru
        _
    $region56: #{rwkv6_attention_forward.4} parent=5 // pred_fallthru
      _
    %p1660 = scmp.le.s32.totalorder 2, %s17
    // Predicated region
    $region73: #{rwkv6_attention_forward.4} parent=5 // pred_check
      %p1661 = pneg %p1660
    $region74: #{rwkv6_attention_forward.4} parent=5 // pred_check_branch
      %1663 = sbr.rel (%p1661) target = $region76
    $region75: #{rwkv6_attention_forward.4} parent=5 // pred_region
      %s1664 = ssub.s32 %s17, 2
      // Predicated region
      $region77: #{rwkv6_attention_forward.4} parent=75 // pred_check
        %p1665 = pneg %p337
      $region78: #{rwkv6_attention_forward.4} parent=75 // pred_check_branch
        %1667 = sbr.rel (%p1665) target = $region80
      $region79: #{rwkv6_attention_forward.4} parent=75 // pred_region
        %s1668 = smul.u32 %s30, 2
        %s1669 = sadd.s32 %s1668, %s32
        %p1670 = scmp.lt.s32.totalorder %s1669, 3
        %s1671 = scalar_select %p1670, %s1669, 3
        %p1672 = scmp.lt.s32.totalorder %s31, 0
        %s1673 = scalar_select %p1672, %s31, 0
        %s1674 = sadd.s32 %s1673, %s1671
        %s1675 = smul.addr %s1674, 8
        %s1676 = scalar_lea.vmem %s9, %s1675
      $region80: #{rwkv6_attention_forward.4} parent=75 // pred_fallthru
        _
      // Predicated region
      $region81: #{rwkv6_attention_forward.4} parent=75 // pred_check
        %p1677 = pneg %p365
      $region82: #{rwkv6_attention_forward.4} parent=75 // pred_check_branch
        %1679 = sbr.rel (%p1677) target = $region84
      $region83: #{rwkv6_attention_forward.4} parent=75 // pred_region
        %s1680 = smul.u32 2, %s31
        %p1681 = scmp.lt.s32.totalorder %s30, 1
        %s1682 = scalar_select %p1681, %s30, 1
        %p1683 = scmp.lt.s32.totalorder %s1680, 1
        %s1684 = scalar_select %p1683, %s1680, 1
        %s1685 = smul.addr %s1684, 2
        %s1686 = smul.addr %s1682, 4
        %s1687 = sadd.s32 %s1685, %s1686
        %s1688 = smul.addr %s1687, 8
        %s1689 = scalar_lea.vmem %s10, %s1688
      $region84: #{rwkv6_attention_forward.4} parent=75 // pred_fallthru
        _
    $region76: #{rwkv6_attention_forward.4} parent=5 // pred_fallthru
      _
  $region6: #{rwkv6_attention_forward.4} parent=0 // loop_footer
    %s21 = sadd.s32 1, %s17
  $region7: #{rwkv6_attention_forward.4} parent=0 // loop_footer_branch
    %16 = sbr.rel target = $region3
  $region8: #{rwkv6_attention_forward.4} parent=0 // loop_exit
    _

// kernel: rwkv6_attention_forward.3
$region0: #{rwkv6_attention_forward.3}
  #allocation0 [shape = 'u32[]', space=smem, size = 0x4, offset = 0x4, fixed_abs, tag = 'smem constant byte address 0x4 - core index']
  #allocation1 [shape = 'u32[144,128]{1,0:T(1,128)}', space=vmem, size = 0x12000, scoped, tag = 'internal scratch']
  %s0 = inlined_call_operand.vmem [shape: f32[32,32], index: 0, kind: input, shape index: {}]
  %s1 = inlined_call_operand.vmem [shape: f32[4,1,32], index: 1, kind: input, shape index: {}]
  %s2 = inlined_call_operand.vmem [shape: f32[6,32], index: 2, kind: input, shape index: {}]
  %s3 = inlined_call_operand.vmem [shape: f32[5,32,32], index: 3, kind: input, shape index: {}]
  %s4 = inlined_call_operand.vmem [shape: f32[5,32,32], index: 4, kind: input, shape index: {}]
  %s5 = inlined_call_operand.vmem [shape: f32[32,32], index: 5, kind: input, shape index: {}]
  %s6 = inlined_call_operand.vmem [shape: f32[32,32], index: 6, kind: input, shape index: {}]
  %s7 = inlined_call_operand.vmem [shape: f32[32,32], index: 7, kind: input, shape index: {}]
  %s8 = inlined_call_operand.vmem [shape: f32[32,32], index: 8, kind: input, shape index: {}]
  %s9 = inlined_call_operand.vmem [shape: f32[1,32], index: 9, kind: input, shape index: {}]
  %s10 = inlined_call_operand.vmem [shape: f32[32,64], index: 10, kind: input, shape index: {}]
  %s11 = inlined_call_operand.vmem [shape: f32[64,32], index: 11, kind: input, shape index: {}]
  %s12 = inlined_call_operand.vmem [shape: f32[32,32], index: 12, kind: output, shape index: {0}]
  %s13 = inlined_call_operand.vmem [shape: f32[32,32], index: 13, kind: output, shape index: {1}]
  %s14 = inlined_call_operand.vmem [shape: f32[32,32], index: 14, kind: output, shape index: {2}]
  %s15 = inlined_call_operand.vmem [shape: f32[32,32], index: 15, kind: output, shape index: {3}]
  %s16 = inlined_call_operand.vmem [shape: f32[32,32], index: 16, kind: output, shape index: {4}]
  %17 = xla_tuple %s12, %s13, %s14, %s15, %s16
  %s18 = sld [smem:[#allocation0]]
  $region113: #{rwkv6_attention_forward.3} parent=0
    _
  %s20 = ssub.s32 1, %s18
  %s21 = scalar_select 0, %s20, %s18
  loop: start=0, step=1, limit=6
  $region2: #{rwkv6_attention_forward.3} parent=0 // loop_pre_header
    _
  $region3: #{rwkv6_attention_forward.3} parent=0 // loop_header
    %s23 = sphi 0, %s27
    %p24 = scmp.ge.s32.totalorder %s23, 6
    %s30 = sphi 0, %s42
    %s31 = sphi 0, %s38
    %s32 = sphi 0, %s30
    %s33 = sphi 0, %s31
    %s34 = sphi 0, %s32
    %s35 = sphi 0, %s33
    %s45 = sphi 0, %s47
    %s48 = sphi 0, %s45
    %s49 = sphi 0, %s48
    %s65 = sphi 0, %s49
    %s71 = sphi 0, %s73
    %s74 = sphi 0, %s71
    %s75 = sphi 0, %s74
    %s91 = sphi 0, %s75
    %s95 = sphi 0, %s95
    %s97 = sphi 0, %s95
    %s98 = sphi 0, %s97
    %s112 = sphi 0, %s98
    %s116 = sphi 0, %s116
    %s118 = sphi 0, %s116
    %s119 = sphi 0, %s118
    %s133 = sphi 0, %s119
    %s137 = sphi 0, %s137
    %s139 = sphi 0, %s137
    %s140 = sphi 0, %s139
    %s154 = sphi 0, %s140
    %s160 = sphi 0, %s162
    %s163 = sphi 0, %s160
    %s164 = sphi 0, %s163
    %s180 = sphi 0, %s164
    %s186 = sphi 0, %s188
    %s189 = sphi 0, %s186
    %s190 = sphi 0, %s189
    %s206 = sphi 0, %s190
    %s212 = sphi 0, %s214
    %s215 = sphi 0, %s212
    %s216 = sphi 0, %s215
    %s232 = sphi 0, %s216
    %s238 = sphi 0, %s240
    %s241 = sphi 0, %s238
    %s242 = sphi 0, %s241
    %s258 = sphi 0, %s242
    %s264 = sphi 0, %s266
    %s267 = sphi 0, %s264
    %s268 = sphi 0, %s267
    %s284 = sphi 0, %s268
    %s288 = sphi 0, %s288
    %s290 = sphi 0, %s288
    %s291 = sphi 0, %s290
    %s305 = sphi 0, %s291
    %s311 = sphi 0, %s313
    %s314 = sphi 0, %s311
    %s315 = sphi 0, %s314
    %s331 = sphi 0, %s315
    %s339 = sphi 0, %s341
    %s342 = sphi 0, %s339
    %s343 = sphi 0, %s342
    %s359 = sphi 0, %s343
    %s367 = sphi 0, %s369
    %s370 = sphi 0, %s367
    %s371 = sphi 0, %s370
    %s387 = sphi 0, %s371
    %s395 = sphi 0, %s397
    %s398 = sphi 0, %s395
    %s399 = sphi 0, %s398
    %s415 = sphi 0, %s399
    %s423 = sphi 0, %s425
    %s426 = sphi 0, %s423
    %s427 = sphi 0, %s426
    %s443 = sphi 0, %s427
    %s451 = sphi 0, %s453
    %s454 = sphi 0, %s451
    %s455 = sphi 0, %s454
    %s471 = sphi 0, %s455
  $region4: #{rwkv6_attention_forward.3} parent=0 // loop_header_branch
    %26 = sbr.rel (%p24) target = $region8
  $region5: #{rwkv6_attention_forward.3} parent=0 // loop_body
    %s28 = ssub.s32 %s23, 1
    %s29 = ssub.s32 %s23, 2
    %s36 = sadd.s32 1, %s31
    %p37 = scmp.ge.s32.totalorder %s36, 1
    %s38 = scalar_select %p37, 0, %s36
    %s39 = sadd.s32 1, %s30
    %s40 = scalar_select %p37, %s39, %s30
    %p41 = scmp.ge.s32.totalorder %s40, 4
    %s42 = scalar_select %p41, 0, %s40
    %s43 = ssub.s32 %s30, %s42
    %p44 = scmp.eq.s32.totalorder %s43, 0
    %s46 = sadd.s32 %s45, 1
    %s47 = scalar_select %p44, %s45, %s46
    %p50 = pneg %p44
    %p51 = scmp.eq.s32.totalorder %s23, 3
    %p52 = por %p50, %p51
    %p53 = scmp.ne.s32.totalorder %s45, %s48
    %p54 = scmp.eq.s32.totalorder %s23, 0
    %p55 = por %p53, %p54
    %p56 = scmp.ne.s32.totalorder %s45, %s48
    %p57 = scmp.eq.s32.totalorder %s28, 3
    %p58 = por %p56, %p57
    %p59 = scmp.ne.s32.totalorder %s48, %s49
    %p60 = scmp.eq.s32.totalorder %s28, 0
    %p61 = por %p59, %p60
    %p62 = scmp.ne.s32.totalorder %s48, %s49
    %p63 = scmp.eq.s32.totalorder %s29, 3
    %p64 = por %p62, %p63
    %p66 = scmp.ne.s32.totalorder %s49, %s65
    %p67 = scmp.eq.s32.totalorder %s29, 0
    %p68 = por %p66, %p67
    %s69 = ssub.s32 %s30, %s42
    %p70 = scmp.eq.s32.totalorder %s69, 0
    %s72 = sadd.s32 %s71, 1
    %s73 = scalar_select %p70, %s71, %s72
    %p76 = pneg %p70
    %p77 = scmp.eq.s32.totalorder %s23, 3
    %p78 = por %p76, %p77
    %p79 = scmp.ne.s32.totalorder %s71, %s74
    %p80 = scmp.eq.s32.totalorder %s23, 0
    %p81 = por %p79, %p80
    %p82 = scmp.ne.s32.totalorder %s71, %s74
    %p83 = scmp.eq.s32.totalorder %s28, 3
    %p84 = por %p82, %p83
    %p85 = scmp.ne.s32.totalorder %s74, %s75
    %p86 = scmp.eq.s32.totalorder %s28, 0
    %p87 = por %p85, %p86
    %p88 = scmp.ne.s32.totalorder %s74, %s75
    %p89 = scmp.eq.s32.totalorder %s29, 3
    %p90 = por %p88, %p89
    %p92 = scmp.ne.s32.totalorder %s75, %s91
    %p93 = scmp.eq.s32.totalorder %s29, 0
    %p94 = por %p92, %p93
    %s96 = sadd.s32 %s95, 1
    %p99 = scmp.eq.s32.totalorder %s23, 3
    %p100 = scmp.ne.s32.totalorder %s95, %s97
    %p101 = scmp.eq.s32.totalorder %s23, 0
    %p102 = por %p100, %p101
    %p103 = scmp.ne.s32.totalorder %s95, %s97
    %p104 = scmp.eq.s32.totalorder %s28, 3
    %p105 = por %p103, %p104
    %p106 = scmp.ne.s32.totalorder %s97, %s98
    %p107 = scmp.eq.s32.totalorder %s28, 0
    %p108 = por %p106, %p107
    %p109 = scmp.ne.s32.totalorder %s97, %s98
    %p110 = scmp.eq.s32.totalorder %s29, 3
    %p111 = por %p109, %p110
    %p113 = scmp.ne.s32.totalorder %s98, %s112
    %p114 = scmp.eq.s32.totalorder %s29, 0
    %p115 = por %p113, %p114
    %s117 = sadd.s32 %s116, 1
    %p120 = scmp.eq.s32.totalorder %s23, 3
    %p121 = scmp.ne.s32.totalorder %s116, %s118
    %p122 = scmp.eq.s32.totalorder %s23, 0
    %p123 = por %p121, %p122
    %p124 = scmp.ne.s32.totalorder %s116, %s118
    %p125 = scmp.eq.s32.totalorder %s28, 3
    %p126 = por %p124, %p125
    %p127 = scmp.ne.s32.totalorder %s118, %s119
    %p128 = scmp.eq.s32.totalorder %s28, 0
    %p129 = por %p127, %p128
    %p130 = scmp.ne.s32.totalorder %s118, %s119
    %p131 = scmp.eq.s32.totalorder %s29, 3
    %p132 = por %p130, %p131
    %p134 = scmp.ne.s32.totalorder %s119, %s133
    %p135 = scmp.eq.s32.totalorder %s29, 0
    %p136 = por %p134, %p135
    %s138 = sadd.s32 %s137, 1
    %p141 = scmp.eq.s32.totalorder %s23, 3
    %p142 = scmp.ne.s32.totalorder %s137, %s139
    %p143 = scmp.eq.s32.totalorder %s23, 0
    %p144 = por %p142, %p143
    %p145 = scmp.ne.s32.totalorder %s137, %s139
    %p146 = scmp.eq.s32.totalorder %s28, 3
    %p147 = por %p145, %p146
    %p148 = scmp.ne.s32.totalorder %s139, %s140
    %p149 = scmp.eq.s32.totalorder %s28, 0
    %p150 = por %p148, %p149
    %p151 = scmp.ne.s32.totalorder %s139, %s140
    %p152 = scmp.eq.s32.totalorder %s29, 3
    %p153 = por %p151, %p152
    %p155 = scmp.ne.s32.totalorder %s140, %s154
    %p156 = scmp.eq.s32.totalorder %s29, 0
    %p157 = por %p155, %p156
    %s158 = ssub.s32 %s31, %s38
    %p159 = scmp.eq.s32.totalorder %s158, 0
    %s161 = sadd.s32 %s160, 1
    %s162 = scalar_select %p159, %s160, %s161
    %p165 = pneg %p159
    %p166 = scmp.eq.s32.totalorder %s23, 3
    %p167 = por %p165, %p166
    %p168 = scmp.ne.s32.totalorder %s160, %s163
    %p169 = scmp.eq.s32.totalorder %s23, 0
    %p170 = por %p168, %p169
    %p171 = scmp.ne.s32.totalorder %s160, %s163
    %p172 = scmp.eq.s32.totalorder %s28, 3
    %p173 = por %p171, %p172
    %p174 = scmp.ne.s32.totalorder %s163, %s164
    %p175 = scmp.eq.s32.totalorder %s28, 0
    %p176 = por %p174, %p175
    %p177 = scmp.ne.s32.totalorder %s163, %s164
    %p178 = scmp.eq.s32.totalorder %s29, 3
    %p179 = por %p177, %p178
    %p181 = scmp.ne.s32.totalorder %s164, %s180
    %p182 = scmp.eq.s32.totalorder %s29, 0
    %p183 = por %p181, %p182
    %s184 = ssub.s32 %s31, %s38
    %p185 = scmp.eq.s32.totalorder %s184, 0
    %s187 = sadd.s32 %s186, 1
    %s188 = scalar_select %p185, %s186, %s187
    %p191 = pneg %p185
    %p192 = scmp.eq.s32.totalorder %s23, 3
    %p193 = por %p191, %p192
    %p194 = scmp.ne.s32.totalorder %s186, %s189
    %p195 = scmp.eq.s32.totalorder %s23, 0
    %p196 = por %p194, %p195
    %p197 = scmp.ne.s32.totalorder %s186, %s189
    %p198 = scmp.eq.s32.totalorder %s28, 3
    %p199 = por %p197, %p198
    %p200 = scmp.ne.s32.totalorder %s189, %s190
    %p201 = scmp.eq.s32.totalorder %s28, 0
    %p202 = por %p200, %p201
    %p203 = scmp.ne.s32.totalorder %s189, %s190
    %p204 = scmp.eq.s32.totalorder %s29, 3
    %p205 = por %p203, %p204
    %p207 = scmp.ne.s32.totalorder %s190, %s206
    %p208 = scmp.eq.s32.totalorder %s29, 0
    %p209 = por %p207, %p208
    %s210 = ssub.s32 %s31, %s38
    %p211 = scmp.eq.s32.totalorder %s210, 0
    %s213 = sadd.s32 %s212, 1
    %s214 = scalar_select %p211, %s212, %s213
    %p217 = pneg %p211
    %p218 = scmp.eq.s32.totalorder %s23, 3
    %p219 = por %p217, %p218
    %p220 = scmp.ne.s32.totalorder %s212, %s215
    %p221 = scmp.eq.s32.totalorder %s23, 0
    %p222 = por %p220, %p221
    %p223 = scmp.ne.s32.totalorder %s212, %s215
    %p224 = scmp.eq.s32.totalorder %s28, 3
    %p225 = por %p223, %p224
    %p226 = scmp.ne.s32.totalorder %s215, %s216
    %p227 = scmp.eq.s32.totalorder %s28, 0
    %p228 = por %p226, %p227
    %p229 = scmp.ne.s32.totalorder %s215, %s216
    %p230 = scmp.eq.s32.totalorder %s29, 3
    %p231 = por %p229, %p230
    %p233 = scmp.ne.s32.totalorder %s216, %s232
    %p234 = scmp.eq.s32.totalorder %s29, 0
    %p235 = por %p233, %p234
    %s236 = ssub.s32 %s31, %s38
    %p237 = scmp.eq.s32.totalorder %s236, 0
    %s239 = sadd.s32 %s238, 1
    %s240 = scalar_select %p237, %s238, %s239
    %p243 = pneg %p237
    %p244 = scmp.eq.s32.totalorder %s23, 3
    %p245 = por %p243, %p244
    %p246 = scmp.ne.s32.totalorder %s238, %s241
    %p247 = scmp.eq.s32.totalorder %s23, 0
    %p248 = por %p246, %p247
    %p249 = scmp.ne.s32.totalorder %s238, %s241
    %p250 = scmp.eq.s32.totalorder %s28, 3
    %p251 = por %p249, %p250
    %p252 = scmp.ne.s32.totalorder %s241, %s242
    %p253 = scmp.eq.s32.totalorder %s28, 0
    %p254 = por %p252, %p253
    %p255 = scmp.ne.s32.totalorder %s241, %s242
    %p256 = scmp.eq.s32.totalorder %s29, 3
    %p257 = por %p255, %p256
    %p259 = scmp.ne.s32.totalorder %s242, %s258
    %p260 = scmp.eq.s32.totalorder %s29, 0
    %p261 = por %p259, %p260
    %s262 = ssub.s32 %s31, %s38
    %p263 = scmp.eq.s32.totalorder %s262, 0
    %s265 = sadd.s32 %s264, 1
    %s266 = scalar_select %p263, %s264, %s265
    %p269 = pneg %p263
    %p270 = scmp.eq.s32.totalorder %s23, 3
    %p271 = por %p269, %p270
    %p272 = scmp.ne.s32.totalorder %s264, %s267
    %p273 = scmp.eq.s32.totalorder %s23, 0
    %p274 = por %p272, %p273
    %p275 = scmp.ne.s32.totalorder %s264, %s267
    %p276 = scmp.eq.s32.totalorder %s28, 3
    %p277 = por %p275, %p276
    %p278 = scmp.ne.s32.totalorder %s267, %s268
    %p279 = scmp.eq.s32.totalorder %s28, 0
    %p280 = por %p278, %p279
    %p281 = scmp.ne.s32.totalorder %s267, %s268
    %p282 = scmp.eq.s32.totalorder %s29, 3
    %p283 = por %p281, %p282
    %p285 = scmp.ne.s32.totalorder %s268, %s284
    %p286 = scmp.eq.s32.totalorder %s29, 0
    %p287 = por %p285, %p286
    %s289 = sadd.s32 %s288, 1
    %p292 = scmp.eq.s32.totalorder %s23, 3
    %p293 = scmp.ne.s32.totalorder %s288, %s290
    %p294 = scmp.eq.s32.totalorder %s23, 0
    %p295 = por %p293, %p294
    %p296 = scmp.ne.s32.totalorder %s288, %s290
    %p297 = scmp.eq.s32.totalorder %s28, 3
    %p298 = por %p296, %p297
    %p299 = scmp.ne.s32.totalorder %s290, %s291
    %p300 = scmp.eq.s32.totalorder %s28, 0
    %p301 = por %p299, %p300
    %p302 = scmp.ne.s32.totalorder %s290, %s291
    %p303 = scmp.eq.s32.totalorder %s29, 3
    %p304 = por %p302, %p303
    %p306 = scmp.ne.s32.totalorder %s291, %s305
    %p307 = scmp.eq.s32.totalorder %s29, 0
    %p308 = por %p306, %p307
    %s309 = ssub.s32 %s31, %s38
    %p310 = scmp.eq.s32.totalorder %s309, 0
    %s312 = sadd.s32 %s311, 1
    %s313 = scalar_select %p310, %s311, %s312
    %p316 = pneg %p310
    %p317 = scmp.eq.s32.totalorder %s23, 3
    %p318 = por %p316, %p317
    %p319 = scmp.ne.s32.totalorder %s311, %s314
    %p320 = scmp.eq.s32.totalorder %s23, 0
    %p321 = por %p319, %p320
    %p322 = scmp.ne.s32.totalorder %s311, %s314
    %p323 = scmp.eq.s32.totalorder %s28, 3
    %p324 = por %p322, %p323
    %p325 = scmp.ne.s32.totalorder %s314, %s315
    %p326 = scmp.eq.s32.totalorder %s28, 0
    %p327 = por %p325, %p326
    %p328 = scmp.ne.s32.totalorder %s314, %s315
    %p329 = scmp.eq.s32.totalorder %s29, 3
    %p330 = por %p328, %p329
    %p332 = scmp.ne.s32.totalorder %s315, %s331
    %p333 = scmp.eq.s32.totalorder %s29, 0
    %p334 = por %p332, %p333
    %s335 = ssub.s32 %s30, %s42
    %s336 = ssub.s32 %s31, %s38
    %s337 = sor.u32 %s335, %s336
    %p338 = scmp.eq.s32.totalorder %s337, 0
    %s340 = sadd.s32 %s339, 1
    %s341 = scalar_select %p338, %s339, %s340
    %p344 = pneg %p338
    %p345 = scmp.eq.s32.totalorder %s23, 3
    %p346 = por %p344, %p345
    %p347 = scmp.ne.s32.totalorder %s339, %s342
    %p348 = scmp.eq.s32.totalorder %s23, 0
    %p349 = por %p347, %p348
    %p350 = scmp.ne.s32.totalorder %s339, %s342
    %p351 = scmp.eq.s32.totalorder %s28, 3
    %p352 = por %p350, %p351
    %p353 = scmp.ne.s32.totalorder %s342, %s343
    %p354 = scmp.eq.s32.totalorder %s28, 0
    %p355 = por %p353, %p354
    %p356 = scmp.ne.s32.totalorder %s342, %s343
    %p357 = scmp.eq.s32.totalorder %s29, 3
    %p358 = por %p356, %p357
    %p360 = scmp.ne.s32.totalorder %s343, %s359
    %p361 = scmp.eq.s32.totalorder %s29, 0
    %p362 = por %p360, %p361
    %s363 = ssub.s32 %s30, %s42
    %s364 = ssub.s32 %s31, %s38
    %s365 = sor.u32 %s363, %s364
    %p366 = scmp.eq.s32.totalorder %s365, 0
    %s368 = sadd.s32 %s367, 1
    %s369 = scalar_select %p366, %s367, %s368
    %p372 = pneg %p366
    %p373 = scmp.eq.s32.totalorder %s23, 3
    %p374 = por %p372, %p373
    %p375 = scmp.ne.s32.totalorder %s367, %s370
    %p376 = scmp.eq.s32.totalorder %s23, 0
    %p377 = por %p375, %p376
    %p378 = scmp.ne.s32.totalorder %s367, %s370
    %p379 = scmp.eq.s32.totalorder %s28, 3
    %p380 = por %p378, %p379
    %p381 = scmp.ne.s32.totalorder %s370, %s371
    %p382 = scmp.eq.s32.totalorder %s28, 0
    %p383 = por %p381, %p382
    %p384 = scmp.ne.s32.totalorder %s370, %s371
    %p385 = scmp.eq.s32.totalorder %s29, 3
    %p386 = por %p384, %p385
    %p388 = scmp.ne.s32.totalorder %s371, %s387
    %p389 = scmp.eq.s32.totalorder %s29, 0
    %p390 = por %p388, %p389
    %s391 = ssub.s32 %s30, %s42
    %s392 = ssub.s32 %s31, %s38
    %s393 = sor.u32 %s391, %s392
    %p394 = scmp.eq.s32.totalorder %s393, 0
    %s396 = sadd.s32 %s395, 1
    %s397 = scalar_select %p394, %s395, %s396
    %p400 = pneg %p394
    %p401 = scmp.eq.s32.totalorder %s23, 3
    %p402 = por %p400, %p401
    %p403 = scmp.ne.s32.totalorder %s395, %s398
    %p404 = scmp.eq.s32.totalorder %s23, 0
    %p405 = por %p403, %p404
    %p406 = scmp.ne.s32.totalorder %s395, %s398
    %p407 = scmp.eq.s32.totalorder %s28, 3
    %p408 = por %p406, %p407
    %p409 = scmp.ne.s32.totalorder %s398, %s399
    %p410 = scmp.eq.s32.totalorder %s28, 0
    %p411 = por %p409, %p410
    %p412 = scmp.ne.s32.totalorder %s398, %s399
    %p413 = scmp.eq.s32.totalorder %s29, 3
    %p414 = por %p412, %p413
    %p416 = scmp.ne.s32.totalorder %s399, %s415
    %p417 = scmp.eq.s32.totalorder %s29, 0
    %p418 = por %p416, %p417
    %s419 = ssub.s32 %s30, %s42
    %s420 = ssub.s32 %s31, %s38
    %s421 = sor.u32 %s419, %s420
    %p422 = scmp.eq.s32.totalorder %s421, 0
    %s424 = sadd.s32 %s423, 1
    %s425 = scalar_select %p422, %s423, %s424
    %p428 = pneg %p422
    %p429 = scmp.eq.s32.totalorder %s23, 3
    %p430 = por %p428, %p429
    %p431 = scmp.ne.s32.totalorder %s423, %s426
    %p432 = scmp.eq.s32.totalorder %s23, 0
    %p433 = por %p431, %p432
    %p434 = scmp.ne.s32.totalorder %s423, %s426
    %p435 = scmp.eq.s32.totalorder %s28, 3
    %p436 = por %p434, %p435
    %p437 = scmp.ne.s32.totalorder %s426, %s427
    %p438 = scmp.eq.s32.totalorder %s28, 0
    %p439 = por %p437, %p438
    %p440 = scmp.ne.s32.totalorder %s426, %s427
    %p441 = scmp.eq.s32.totalorder %s29, 3
    %p442 = por %p440, %p441
    %p444 = scmp.ne.s32.totalorder %s427, %s443
    %p445 = scmp.eq.s32.totalorder %s29, 0
    %p446 = por %p444, %p445
    %s447 = ssub.s32 %s30, %s42
    %s448 = ssub.s32 %s31, %s38
    %s449 = sor.u32 %s447, %s448
    %p450 = scmp.eq.s32.totalorder %s449, 0
    %s452 = sadd.s32 %s451, 1
    %s453 = scalar_select %p450, %s451, %s452
    %p456 = pneg %p450
    %p457 = scmp.eq.s32.totalorder %s23, 3
    %p458 = por %p456, %p457
    %p459 = scmp.ne.s32.totalorder %s451, %s454
    %p460 = scmp.eq.s32.totalorder %s23, 0
    %p461 = por %p459, %p460
    %p462 = scmp.ne.s32.totalorder %s451, %s454
    %p463 = scmp.eq.s32.totalorder %s28, 3
    %p464 = por %p462, %p463
    %p465 = scmp.ne.s32.totalorder %s454, %s455
    %p466 = scmp.eq.s32.totalorder %s28, 0
    %p467 = por %p465, %p466
    %p468 = scmp.ne.s32.totalorder %s454, %s455
    %p469 = scmp.eq.s32.totalorder %s29, 3
    %p470 = por %p468, %p469
    %p472 = scmp.ne.s32.totalorder %s455, %s471
    %p473 = scmp.eq.s32.totalorder %s29, 0
    %p474 = por %p472, %p473
    %p475 = scmp.le.s32.totalorder 1, %s23
    %p476 = scmp.lt.s32.totalorder %s23, 5
    %p477 = pnand %p475, %p476
    %p478 = pneg %p477
    // Predicated region
    $region9: #{rwkv6_attention_forward.3} parent=5 // pred_check
      _
    $region10: #{rwkv6_attention_forward.3} parent=5 // pred_check_branch
      %480 = sbr.rel (%p477) target = $region12
    $region11: #{rwkv6_attention_forward.3} parent=5 // pred_region
      %s481 = ssub.s32 %s23, 1
      // Predicated region
      $region13: #{rwkv6_attention_forward.3} parent=11 // pred_check
        %p482 = pneg %p108
      $region14: #{rwkv6_attention_forward.3} parent=11 // pred_check_branch
        %484 = sbr.rel (%p482) target = $region16
      $region15: #{rwkv6_attention_forward.3} parent=11 // pred_region
        _
      $region16: #{rwkv6_attention_forward.3} parent=11 // pred_fallthru
        _
      // Predicated region
      $region17: #{rwkv6_attention_forward.3} parent=11 // pred_check
        %p485 = pneg %p129
      $region18: #{rwkv6_attention_forward.3} parent=11 // pred_check_branch
        %487 = sbr.rel (%p485) target = $region20
      $region19: #{rwkv6_attention_forward.3} parent=11 // pred_region
        _
      $region20: #{rwkv6_attention_forward.3} parent=11 // pred_fallthru
        _
      // Predicated region
      $region21: #{rwkv6_attention_forward.3} parent=11 // pred_check
        %p488 = pneg %p150
      $region22: #{rwkv6_attention_forward.3} parent=11 // pred_check_branch
        %490 = sbr.rel (%p488) target = $region24
      $region23: #{rwkv6_attention_forward.3} parent=11 // pred_region
        _
      $region24: #{rwkv6_attention_forward.3} parent=11 // pred_fallthru
        _
      // Predicated region
      $region25: #{rwkv6_attention_forward.3} parent=11 // pred_check
        %p491 = pneg %p176
      $region26: #{rwkv6_attention_forward.3} parent=11 // pred_check_branch
        %493 = sbr.rel (%p491) target = $region28
      $region27: #{rwkv6_attention_forward.3} parent=11 // pred_region
        %p494 = scmp.lt.s32.totalorder %s33, 0
        %s495 = scalar_select %p494, %s33, 0
        %s496 = smul.addr %s495, 8
        %s497 = scalar_lea.vmem %s5, %s496
      $region28: #{rwkv6_attention_forward.3} parent=11 // pred_fallthru
        _
      // Predicated region
      $region29: #{rwkv6_attention_forward.3} parent=11 // pred_check
        %p498 = pneg %p202
      $region30: #{rwkv6_attention_forward.3} parent=11 // pred_check_branch
        %500 = sbr.rel (%p498) target = $region32
      $region31: #{rwkv6_attention_forward.3} parent=11 // pred_region
        %p501 = scmp.lt.s32.totalorder %s33, 0
        %s502 = scalar_select %p501, %s33, 0
        %s503 = smul.addr %s502, 8
        %s504 = scalar_lea.vmem %s6, %s503
      $region32: #{rwkv6_attention_forward.3} parent=11 // pred_fallthru
        _
      // Predicated region
      $region33: #{rwkv6_attention_forward.3} parent=11 // pred_check
        %p505 = pneg %p228
      $region34: #{rwkv6_attention_forward.3} parent=11 // pred_check_branch
        %507 = sbr.rel (%p505) target = $region36
      $region35: #{rwkv6_attention_forward.3} parent=11 // pred_region
        %p508 = scmp.lt.s32.totalorder %s33, 0
        %s509 = scalar_select %p508, %s33, 0
        %s510 = smul.addr %s509, 8
        %s511 = scalar_lea.vmem %s7, %s510
      $region36: #{rwkv6_attention_forward.3} parent=11 // pred_fallthru
        _
      // Predicated region
      $region37: #{rwkv6_attention_forward.3} parent=11 // pred_check
        %p512 = pneg %p254
      $region38: #{rwkv6_attention_forward.3} parent=11 // pred_check_branch
        %514 = sbr.rel (%p512) target = $region40
      $region39: #{rwkv6_attention_forward.3} parent=11 // pred_region
        %p515 = scmp.lt.s32.totalorder %s33, 0
        %s516 = scalar_select %p515, %s33, 0
        %s517 = smul.addr %s516, 8
        %s518 = scalar_lea.vmem %s8, %s517
      $region40: #{rwkv6_attention_forward.3} parent=11 // pred_fallthru
        _
      // Predicated region
      $region41: #{rwkv6_attention_forward.3} parent=11 // pred_check
        %p519 = pneg %p280
      $region42: #{rwkv6_attention_forward.3} parent=11 // pred_check_branch
        %521 = sbr.rel (%p519) target = $region44
      $region43: #{rwkv6_attention_forward.3} parent=11 // pred_region
        %p522 = scmp.lt.s32.totalorder %s33, 0
        %s523 = scalar_select %p522, %s33, 0
        %s524 = scalar_lea.vmem %s9, %s523
      $region44: #{rwkv6_attention_forward.3} parent=11 // pred_fallthru
        _
      // Predicated region
      $region45: #{rwkv6_attention_forward.3} parent=11 // pred_check
        %p525 = pneg %p301
      $region46: #{rwkv6_attention_forward.3} parent=11 // pred_check_branch
        %527 = sbr.rel (%p525) target = $region48
      $region47: #{rwkv6_attention_forward.3} parent=11 // pred_region
        _
      $region48: #{rwkv6_attention_forward.3} parent=11 // pred_fallthru
        _
      // Predicated region
      $region49: #{rwkv6_attention_forward.3} parent=11 // pred_check
        %p528 = pneg %p327
      $region50: #{rwkv6_attention_forward.3} parent=11 // pred_check_branch
        %530 = sbr.rel (%p528) target = $region52
      $region51: #{rwkv6_attention_forward.3} parent=11 // pred_region
        %p531 = scmp.lt.s32.totalorder %s33, 0
        %s532 = scalar_select %p531, %s33, 0
        %s533 = smul.addr %s532, 8
        %s534 = scalar_lea.vmem %s11, %s533
      $region52: #{rwkv6_attention_forward.3} parent=11 // pred_fallthru
        _
    $region12: #{rwkv6_attention_forward.3} parent=5 // pred_fallthru
      _
    %p535 = scmp.lt.s32.totalorder %s23, 4
    // Predicated region
    $region53: #{rwkv6_attention_forward.3} parent=5 // pred_check
      %p536 = pneg %p535
    $region54: #{rwkv6_attention_forward.3} parent=5 // pred_check_branch
      %538 = sbr.rel (%p536) target = $region56
    $region55: #{rwkv6_attention_forward.3} parent=5 // pred_region
      // Predicated region
      $region57: #{rwkv6_attention_forward.3} parent=55 // pred_check
        %p539 = pneg %p55
      $region58: #{rwkv6_attention_forward.3} parent=55 // pred_check_branch
        %541 = sbr.rel (%p539) target = $region60
      $region59: #{rwkv6_attention_forward.3} parent=55 // pred_region
        %p542 = scmp.lt.s32.totalorder %s30, 3
        %s543 = scalar_select %p542, %s30, 3
        %s544 = smul.addr %s543, 8
        %s545 = scalar_lea.vmem %s0, %s544
      $region60: #{rwkv6_attention_forward.3} parent=55 // pred_fallthru
        _
      // Predicated region
      $region61: #{rwkv6_attention_forward.3} parent=55 // pred_check
        %p546 = pneg %p81
      $region62: #{rwkv6_attention_forward.3} parent=55 // pred_check_branch
        %548 = sbr.rel (%p546) target = $region64
      $region63: #{rwkv6_attention_forward.3} parent=55 // pred_region
        %p549 = scmp.lt.s32.totalorder %s30, 3
        %s550 = scalar_select %p549, %s30, 3
        %s551 = scalar_lea.vmem %s1, %s550
      $region64: #{rwkv6_attention_forward.3} parent=55 // pred_fallthru
        _
    $region56: #{rwkv6_attention_forward.3} parent=5 // pred_fallthru
      _
    %p552 = scmp.le.s32.totalorder 1, %s23
    %p553 = scmp.lt.s32.totalorder %s23, 5
    %p554 = pnand %p552, %p553
    %p555 = pneg %p554
    // Predicated region
    $region65: #{rwkv6_attention_forward.3} parent=5 // pred_check
      _
    $region66: #{rwkv6_attention_forward.3} parent=5 // pred_check_branch
      %557 = sbr.rel (%p554) target = $region68
    $region67: #{rwkv6_attention_forward.3} parent=5 // pred_region
      %s558 = ssub.s32 %s23, 1
      %p559 = scmp.lt.s32.totalorder %s32, 3
      %s560 = scalar_select %p559, %s32, 3
      %s561 = smul.addr %s560, 8
      %s562 = scalar_lea.vmem %s0, %s561
      %p563 = pneg %p61
      %p564 = pneg %p58
      %p565 = scmp.lt.s32.totalorder %s32, 3
      %s566 = scalar_select %p565, %s32, 3
      %s567 = scalar_lea.vmem %s1, %s566
      %p568 = pneg %p87
      %p569 = pneg %p84
      %p570 = pneg %p108
      %p571 = pneg %p105
      %p572 = pneg %p129
      %p573 = pneg %p126
      %p574 = pneg %p150
      %p575 = pneg %p147
      %p576 = scmp.lt.s32.totalorder %s33, 0
      %s577 = scalar_select %p576, %s33, 0
      %s578 = smul.addr %s577, 8
      %s579 = scalar_lea.vmem %s5, %s578
      %p580 = pneg %p176
      %p581 = pneg %p173
      %p582 = scmp.lt.s32.totalorder %s33, 0
      %s583 = scalar_select %p582, %s33, 0
      %s584 = smul.addr %s583, 8
      %s585 = scalar_lea.vmem %s6, %s584
      %p586 = pneg %p202
      %p587 = pneg %p199
      %p588 = scmp.lt.s32.totalorder %s33, 0
      %s589 = scalar_select %p588, %s33, 0
      %s590 = smul.addr %s589, 8
      %s591 = scalar_lea.vmem %s7, %s590
      %p592 = pneg %p228
      %p593 = pneg %p225
      %p594 = scmp.lt.s32.totalorder %s33, 0
      %s595 = scalar_select %p594, %s33, 0
      %s596 = smul.addr %s595, 8
      %s597 = scalar_lea.vmem %s8, %s596
      %p598 = pneg %p254
      %p599 = pneg %p251
      %p600 = scmp.lt.s32.totalorder %s33, 0
      %s601 = scalar_select %p600, %s33, 0
      %s602 = scalar_lea.vmem %s9, %s601
      %p603 = pneg %p280
      %p604 = pneg %p277
      %p605 = pneg %p301
      %p606 = pneg %p298
      %p607 = scmp.lt.s32.totalorder %s33, 0
      %s608 = scalar_select %p607, %s33, 0
      %s609 = smul.addr %s608, 8
      %s610 = scalar_lea.vmem %s11, %s609
      %p611 = pneg %p327
      %p612 = pneg %p324
      %p613 = pneg %p355
      %p614 = pneg %p352
      %p615 = scmp.lt.s32.totalorder %s32, 3
      %s616 = scalar_select %p615, %s32, 3
      %p617 = scmp.lt.s32.totalorder %s33, 0
      %s618 = scalar_select %p617, %s33, 0
      %s619 = sadd.s32 %s618, %s616
      %s620 = smul.addr %s619, 8
      %s621 = scalar_lea.vmem %s12, %s620
      %p622 = pneg %p383
      %p623 = pneg %p380
      %p624 = scmp.lt.s32.totalorder %s32, 3
      %s625 = scalar_select %p624, %s32, 3
      %p626 = scmp.lt.s32.totalorder %s33, 0
      %s627 = scalar_select %p626, %s33, 0
      %s628 = sadd.s32 %s627, %s625
      %s629 = smul.addr %s628, 8
      %s630 = scalar_lea.vmem %s13, %s629
      %p631 = pneg %p411
      %p632 = pneg %p408
      %p633 = scmp.lt.s32.totalorder %s32, 3
      %s634 = scalar_select %p633, %s32, 3
      %p635 = scmp.lt.s32.totalorder %s33, 0
      %s636 = scalar_select %p635, %s33, 0
      %s637 = sadd.s32 %s636, %s634
      %s638 = smul.addr %s637, 8
      %s639 = scalar_lea.vmem %s14, %s638
      %p640 = pneg %p439
      %p641 = pneg %p436
      %p642 = scmp.lt.s32.totalorder %s32, 3
      %s643 = scalar_select %p642, %s32, 3
      %p644 = scmp.lt.s32.totalorder %s33, 0
      %s645 = scalar_select %p644, %s33, 0
      %s646 = sadd.s32 %s645, %s643
      %s647 = smul.addr %s646, 8
      %s648 = scalar_lea.vmem %s15, %s647
      %p649 = pneg %p467
      %p650 = pneg %p464
      %p651 = scmp.lt.s32.totalorder %s32, 3
      %s652 = scalar_select %p651, %s32, 3
      %p653 = scmp.lt.s32.totalorder %s33, 0
      %s654 = scalar_select %p653, %s33, 0
      %s655 = sadd.s32 %s654, %s652
      %s656 = smul.addr %s655, 8
      %s657 = scalar_lea.vmem %s16, %s656
      %p658 = scmp.lt.s32.totalorder %s32, 3
      %s659 = scalar_select %p658, %s32, 3
      %s660 = smul.addr %s659, 8
      %s661 = scalar_lea.vmem %s0, %s660
      %p662 = scmp.lt.s32.totalorder %s32, 3
      %s663 = scalar_select %p662, %s32, 3
      %s664 = scalar_lea.vmem %s1, %s663
      %p665 = scmp.lt.s32.totalorder %s33, 0
      %s666 = scalar_select %p665, %s33, 0
      %s667 = smul.addr %s666, 8
      %s668 = scalar_lea.vmem %s5, %s667
      %p669 = scmp.lt.s32.totalorder %s33, 0
      %s670 = scalar_select %p669, %s33, 0
      %s671 = smul.addr %s670, 8
      %s672 = scalar_lea.vmem %s6, %s671
      %p673 = scmp.lt.s32.totalorder %s33, 0
      %s674 = scalar_select %p673, %s33, 0
      %s675 = smul.addr %s674, 8
      %s676 = scalar_lea.vmem %s7, %s675
      %p677 = scmp.lt.s32.totalorder %s33, 0
      %s678 = scalar_select %p677, %s33, 0
      %s679 = smul.addr %s678, 8
      %s680 = scalar_lea.vmem %s8, %s679
      %p681 = scmp.lt.s32.totalorder %s33, 0
      %s682 = scalar_select %p681, %s33, 0
      %s683 = scalar_lea.vmem %s9, %s682
      %p684 = scmp.lt.s32.totalorder %s33, 0
      %s685 = scalar_select %p684, %s33, 0
      %s686 = smul.addr %s685, 8
      %s687 = scalar_lea.vmem %s11, %s686
      %p688 = scmp.lt.s32.totalorder %s32, 3
      %s689 = scalar_select %p688, %s32, 3
      %p690 = scmp.lt.s32.totalorder %s33, 0
      %s691 = scalar_select %p690, %s33, 0
      %s692 = sadd.s32 %s691, %s689
      %s693 = smul.addr %s692, 8
      %s694 = scalar_lea.vmem %s12, %s693
      %p695 = scmp.lt.s32.totalorder %s32, 3
      %s696 = scalar_select %p695, %s32, 3
      %p697 = scmp.lt.s32.totalorder %s33, 0
      %s698 = scalar_select %p697, %s33, 0
      %s699 = sadd.s32 %s698, %s696
      %s700 = smul.addr %s699, 8
      %s701 = scalar_lea.vmem %s13, %s700
      %p702 = scmp.lt.s32.totalorder %s32, 3
      %s703 = scalar_select %p702, %s32, 3
      %p704 = scmp.lt.s32.totalorder %s33, 0
      %s705 = scalar_select %p704, %s33, 0
      %s706 = sadd.s32 %s705, %s703
      %s707 = smul.addr %s706, 8
      %s708 = scalar_lea.vmem %s14, %s707
      %p709 = scmp.lt.s32.totalorder %s32, 3
      %s710 = scalar_select %p709, %s32, 3
      %p711 = scmp.lt.s32.totalorder %s33, 0
      %s712 = scalar_select %p711, %s33, 0
      %s713 = sadd.s32 %s712, %s710
      %s714 = smul.addr %s713, 8
      %s715 = scalar_lea.vmem %s15, %s714
      %p716 = scmp.lt.s32.totalorder %s32, 3
      %s717 = scalar_select %p716, %s32, 3
      %p718 = scmp.lt.s32.totalorder %s33, 0
      %s719 = scalar_select %p718, %s33, 0
      %s720 = sadd.s32 %s719, %s717
      %s721 = smul.addr %s720, 8
      %s722 = scalar_lea.vmem %s16, %s721
      %v723 = vld [vmem:[%s661] sm:$0xff]
      %v724 = vlaneseq
      %v725 = vshrl.u32 %v724, 7
      %v726 = vlaneseq
      %v727 = vand.u32 %v726, 127
      %v728 = vadd.s32 %v727, 1
      %vm729 = vcmp.eq.s32.totalorder %v725, %v728
      %v730 = vsel %vm729, 1, 0
      %v731 = vcvt.s32.f32 %v730
      %vm732 = vcmp.eq.s32.totalorder %v725, 0
      %v733 = vsel %vm732, 1, 0
      %v734 = vcvt.s32.f32 %v733
      %v735 = vld [vmem:[%s664] sm:$0x1]
      %v737 = vlaneseq
      %v738 = vshrl.u32 %v737, 7
      %v739 = vsub.s32 0, %v738
      %v740 = vrot.slane %v735, %v739
      %v742 = vmul.f32 %v734, %v740
      %vm743 = vcmask 64512
      %v745 = vsel %vm743, %v731, 0
      %747 = vmatprep.subr.mxu0 0.0
      %748 = vmatpush1.msra.mxu0 %v723
      %749 = vmatprep.subr.mxu0 0.0
      %750 = vmatpush1.msra.mxu0 0.0
      %751 = vmatprep.subr.mxu0 0.0
      %752 = vmatpush1.msra.mxu0 0.0
      %753 = vmatprep.subr.mxu0 0.0
      %754 = vmatpush1.msra.mxu0 0.0
      %755 = vmatprep.subr.mxu0 0.0
      %756 = vmatpush1.msra.mxu0 0.0
      %757 = vmatprep.subr.mxu0 0.0
      %758 = vmatpush1.msra.mxu0 0.0
      %759 = vmatprep.subr.mxu0 0.0
      %760 = vmatpush1.msra.mxu0 0.0
      %761 = vmatprep.subr.mxu0 0.0
      %762 = vmatpush1.msra.mxu0 0.0
      %763 = vmatprep.subr.mxu0 0.0
      %764 = vmatpush1.msra.mxu0 0.0
      %765 = vmatprep.subr.mxu0 0.0
      %766 = vmatpush1.msra.mxu0 0.0
      %767 = vmatprep.subr.mxu0 0.0
      %768 = vmatpush1.msra.mxu0 0.0
      %769 = vmatprep.subr.mxu0 0.0
      %770 = vmatpush1.msra.mxu0 0.0
      %771 = vmatprep.subr.mxu0 0.0
      %772 = vmatpush1.msra.mxu0 0.0
      %773 = vmatprep.subr.mxu0 0.0
      %774 = vmatpush1.msra.mxu0 0.0
      %775 = vmatprep.subr.mxu0 0.0
      %776 = vmatpush1.msra.mxu0 0.0
      %777 = vmatprep.subr.mxu0 0.0
      %778 = vmatpush1.msra.mxu0 0.0
      %779 = vmatprep.subr.mxu0 0.0
      %780 = vmatpush1.msra.mxu0 0.0
      %781 = vmatprep.subr.mxu0 0.0
      %782 = vmatpush1.msra.mxu0 0.0
      %783 = vmatprep.subr.mxu0 0.0
      %784 = vmatpush1.msra.mxu0 0.0
      %785 = vmatprep.subr.mxu0 0.0
      %786 = vmatpush1.msra.mxu0 0.0
      %787 = vmatprep.subr.mxu0 0.0
      %788 = vmatpush1.msra.mxu0 0.0
      %789 = vmatprep.subr.mxu0 0.0
      %790 = vmatpush1.msra.mxu0 0.0
      %791 = vmatprep.subr.mxu0 0.0
      %792 = vmatpush1.msra.mxu0 0.0
      %793 = vmatprep.subr.mxu0 0.0
      %794 = vmatpush1.msra.mxu0 0.0
      %795 = vmatprep.subr.mxu0 0.0
      %796 = vmatpush1.msra.mxu0 0.0
      %797 = vmatprep.subr.mxu0 0.0
      %798 = vmatpush1.msra.mxu0 0.0
      %799 = vmatprep.subr.mxu0 0.0
      %800 = vmatpush1.msra.mxu0 0.0
      %801 = vmatprep.subr.mxu0 0.0
      %802 = vmatpush1.msra.mxu0 0.0
      %803 = vmatprep.subr.mxu0 0.0
      %804 = vmatpush1.msra.mxu0 0.0
      %805 = vmatprep.subr.mxu0 0.0
      %806 = vmatpush1.msra.mxu0 0.0
      %807 = vmatprep.subr.mxu0 0.0
      %808 = vmatpush1.msra.mxu0 0.0
      %809 = vmatprep.subr.mxu0 0.0
      %810 = vmatpush1.msra.mxu0 0.0
      %811 = vmatprep.mubr.f32.mxu0 0.0
      %812 = vmatmul.mubr.f32.gmra.mrb[0].mxu0 %v745
      %v813 = vpop.f32.mrb[0].mxu0
      %v814 = vadd.f32 %v742, %v813
      %v815 = vpop.f32.mrb[0].mxu0
      %816 = vdwg.mxu0
      %v817 = vsub.f32 %v814, %v723
      %v818 = vld [vmem:[%s2] sm:$0x1]
      %v819 = vlaneseq
      %v820 = vshrl.u32 %v819, 7
      %v821 = vsub.s32 0, %v820
      %v822 = vrot.slane %v818, %v821
      %v823 = vmul.f32 %v817, %v822
      %v824 = vadd.f32 %v723, %v823
      %v825 = vld [vmem:[%s3] sm:$0xff]
      %v826 = vld [vmem:[%s3 + $0x8] sm:$0xff]
      %v827 = vld [vmem:[%s3 + $0x10] sm:$0xff]
      %v828 = vld [vmem:[%s3 + $0x18] sm:$0xff]
      %vm829 = vcmask 261120
      %v831 = vsel %vm829, %v824, 0
      %833 = vmatprep.subr.mxu0 0.0
      %834 = vmatpush1.msra.mxu0 %v825
      %835 = vmatprep.subr.mxu0 0.0
      %836 = vmatpush1.msra.mxu0 %v826
      %837 = vmatprep.subr.mxu0 0.0
      %838 = vmatpush1.msra.mxu0 %v827
      %839 = vmatprep.subr.mxu0 0.0
      %840 = vmatpush1.msra.mxu0 %v828
      %841 = vmatprep.subr.mxu0 0.0
      %842 = vmatpush1.msra.mxu0 0.0
      %843 = vmatprep.subr.mxu0 0.0
      %844 = vmatpush1.msra.mxu0 0.0
      %845 = vmatprep.subr.mxu0 0.0
      %846 = vmatpush1.msra.mxu0 0.0
      %847 = vmatprep.subr.mxu0 0.0
      %848 = vmatpush1.msra.mxu0 0.0
      %849 = vmatprep.subr.mxu0 0.0
      %850 = vmatpush1.msra.mxu0 0.0
      %851 = vmatprep.subr.mxu0 0.0
      %852 = vmatpush1.msra.mxu0 0.0
      %853 = vmatprep.subr.mxu0 0.0
      %854 = vmatpush1.msra.mxu0 0.0
      %855 = vmatprep.subr.mxu0 0.0
      %856 = vmatpush1.msra.mxu0 0.0
      %857 = vmatprep.subr.mxu0 0.0
      %858 = vmatpush1.msra.mxu0 0.0
      %859 = vmatprep.subr.mxu0 0.0
      %860 = vmatpush1.msra.mxu0 0.0
      %861 = vmatprep.subr.mxu0 0.0
      %862 = vmatpush1.msra.mxu0 0.0
      %863 = vmatprep.subr.mxu0 0.0
      %864 = vmatpush1.msra.mxu0 0.0
      %865 = vmatprep.subr.mxu0 0.0
      %866 = vmatpush1.msra.mxu0 0.0
      %867 = vmatprep.subr.mxu0 0.0
      %868 = vmatpush1.msra.mxu0 0.0
      %869 = vmatprep.subr.mxu0 0.0
      %870 = vmatpush1.msra.mxu0 0.0
      %871 = vmatprep.subr.mxu0 0.0
      %872 = vmatpush1.msra.mxu0 0.0
      %873 = vmatprep.subr.mxu0 0.0
      %874 = vmatpush1.msra.mxu0 0.0
      %875 = vmatprep.subr.mxu0 0.0
      %876 = vmatpush1.msra.mxu0 0.0
      %877 = vmatprep.subr.mxu0 0.0
      %878 = vmatpush1.msra.mxu0 0.0
      %879 = vmatprep.subr.mxu0 0.0
      %880 = vmatpush1.msra.mxu0 0.0
      %881 = vmatprep.subr.mxu0 0.0
      %882 = vmatpush1.msra.mxu0 0.0
      %883 = vmatprep.subr.mxu0 0.0
      %884 = vmatpush1.msra.mxu0 0.0
      %885 = vmatprep.subr.mxu0 0.0
      %886 = vmatpush1.msra.mxu0 0.0
      %887 = vmatprep.subr.mxu0 0.0
      %888 = vmatpush1.msra.mxu0 0.0
      %889 = vmatprep.subr.mxu0 0.0
      %890 = vmatpush1.msra.mxu0 0.0
      %891 = vmatprep.subr.mxu0 0.0
      %892 = vmatpush1.msra.mxu0 0.0
      %893 = vmatprep.subr.mxu0 0.0
      %894 = vmatpush1.msra.mxu0 0.0
      %895 = vmatprep.subr.mxu0 0.0
      %896 = vmatpush1.msra.mxu0 0.0
      %897 = vmatprep.mubr.f32.mxu0 0.0
      %898 = vmatmul.mubr.f32.gmra.mrb[0].mxu0 %v831
      %v899 = vpop.f32.mrb[0].mxu0
      %v900 = vadd.f32 0.0, %v899
      %v901 = vpop.f32.mrb[0].mxu0
      %902 = vdwg.mxu0
      %v903 = vtanh.pop %v900
      %v904 = vld [vmem:[%s4] sm:$0xff]
      %v905 = vld [vmem:[%s4 + $0x8] sm:$0xff]
      %v906 = vld [vmem:[%s4 + $0x10] sm:$0xff]
      %v907 = vld [vmem:[%s4 + $0x18] sm:$0xff]
      %v908 = vld [vmem:[%s2 + $0x1] sm:$0x1]
      %v909 = vlaneseq
      %v910 = vshrl.u32 %v909, 7
      %v911 = vsub.s32 0, %v910
      %v912 = vrot.slane %v908, %v911
      %v914 = vsel %vm829, %v903, 0
      %916 = vmatprep.subr.mxu0 0.0
      %917 = vmatpush1.msra.mxu0 %v904
      %918 = vmatprep.subr.mxu0 0.0
      %919 = vmatpush1.msra.mxu0 %v905
      %920 = vmatprep.subr.mxu0 0.0
      %921 = vmatpush1.msra.mxu0 %v906
      %922 = vmatprep.subr.mxu0 0.0
      %923 = vmatpush1.msra.mxu0 %v907
      %924 = vmatprep.subr.mxu0 0.0
      %925 = vmatpush1.msra.mxu0 0.0
      %926 = vmatprep.subr.mxu0 0.0
      %927 = vmatpush1.msra.mxu0 0.0
      %928 = vmatprep.subr.mxu0 0.0
      %929 = vmatpush1.msra.mxu0 0.0
      %930 = vmatprep.subr.mxu0 0.0
      %931 = vmatpush1.msra.mxu0 0.0
      %932 = vmatprep.subr.mxu0 0.0
      %933 = vmatpush1.msra.mxu0 0.0
      %934 = vmatprep.subr.mxu0 0.0
      %935 = vmatpush1.msra.mxu0 0.0
      %936 = vmatprep.subr.mxu0 0.0
      %937 = vmatpush1.msra.mxu0 0.0
      %938 = vmatprep.subr.mxu0 0.0
      %939 = vmatpush1.msra.mxu0 0.0
      %940 = vmatprep.subr.mxu0 0.0
      %941 = vmatpush1.msra.mxu0 0.0
      %942 = vmatprep.subr.mxu0 0.0
      %943 = vmatpush1.msra.mxu0 0.0
      %944 = vmatprep.subr.mxu0 0.0
      %945 = vmatpush1.msra.mxu0 0.0
      %946 = vmatprep.subr.mxu0 0.0
      %947 = vmatpush1.msra.mxu0 0.0
      %948 = vmatprep.subr.mxu0 0.0
      %949 = vmatpush1.msra.mxu0 0.0
      %950 = vmatprep.subr.mxu0 0.0
      %951 = vmatpush1.msra.mxu0 0.0
      %952 = vmatprep.subr.mxu0 0.0
      %953 = vmatpush1.msra.mxu0 0.0
      %954 = vmatprep.subr.mxu0 0.0
      %955 = vmatpush1.msra.mxu0 0.0
      %956 = vmatprep.subr.mxu0 0.0
      %957 = vmatpush1.msra.mxu0 0.0
      %958 = vmatprep.subr.mxu0 0.0
      %959 = vmatpush1.msra.mxu0 0.0
      %960 = vmatprep.subr.mxu0 0.0
      %961 = vmatpush1.msra.mxu0 0.0
      %962 = vmatprep.subr.mxu0 0.0
      %963 = vmatpush1.msra.mxu0 0.0
      %964 = vmatprep.subr.mxu0 0.0
      %965 = vmatpush1.msra.mxu0 0.0
      %966 = vmatprep.subr.mxu0 0.0
      %967 = vmatpush1.msra.mxu0 0.0
      %968 = vmatprep.subr.mxu0 0.0
      %969 = vmatpush1.msra.mxu0 0.0
      %970 = vmatprep.subr.mxu0 0.0
      %971 = vmatpush1.msra.mxu0 0.0
      %972 = vmatprep.subr.mxu0 0.0
      %973 = vmatpush1.msra.mxu0 0.0
      %974 = vmatprep.subr.mxu0 0.0
      %975 = vmatpush1.msra.mxu0 0.0
      %976 = vmatprep.subr.mxu0 0.0
      %977 = vmatpush1.msra.mxu0 0.0
      %978 = vmatprep.subr.mxu0 0.0
      %979 = vmatpush1.msra.mxu0 0.0
      %980 = vmatprep.mubr.f32.mxu0 0.0
      %981 = vmatmul.mubr.f32.gmra.mrb[0].mxu0 %v914
      %v982 = vpop.f32.mrb[0].mxu0
      %v983 = vadd.f32 %v912, %v982
      %v984 = vpop.f32.mrb[0].mxu0
      %985 = vdwg.mxu0
      %v986 = vmul.f32 %v817, %v983
      %v987 = vadd.f32 %v723, %v986
      %s988 = scalar_lea.vmem %s3, 32
      %v989 = vld [vmem:[%s988] sm:$0xff]
      %v990 = vld [vmem:[%s988 + $0x8] sm:$0xff]
      %v991 = vld [vmem:[%s988 + $0x10] sm:$0xff]
      %v992 = vld [vmem:[%s988 + $0x18] sm:$0xff]
      %993 = vmatprep.subr.mxu0 0.0
      %994 = vmatpush1.msra.mxu0 %v989
      %995 = vmatprep.subr.mxu0 0.0
      %996 = vmatpush1.msra.mxu0 %v990
      %997 = vmatprep.subr.mxu0 0.0
      %998 = vmatpush1.msra.mxu0 %v991
      %999 = vmatprep.subr.mxu0 0.0
      %1000 = vmatpush1.msra.mxu0 %v992
      %1001 = vmatprep.subr.mxu0 0.0
      %1002 = vmatpush1.msra.mxu0 0.0
      %1003 = vmatprep.subr.mxu0 0.0
      %1004 = vmatpush1.msra.mxu0 0.0
      %1005 = vmatprep.subr.mxu0 0.0
      %1006 = vmatpush1.msra.mxu0 0.0
      %1007 = vmatprep.subr.mxu0 0.0
      %1008 = vmatpush1.msra.mxu0 0.0
      %1009 = vmatprep.subr.mxu0 0.0
      %1010 = vmatpush1.msra.mxu0 0.0
      %1011 = vmatprep.subr.mxu0 0.0
      %1012 = vmatpush1.msra.mxu0 0.0
      %1013 = vmatprep.subr.mxu0 0.0
      %1014 = vmatpush1.msra.mxu0 0.0
      %1015 = vmatprep.subr.mxu0 0.0
      %1016 = vmatpush1.msra.mxu0 0.0
      %1017 = vmatprep.subr.mxu0 0.0
      %1018 = vmatpush1.msra.mxu0 0.0
      %1019 = vmatprep.subr.mxu0 0.0
      %1020 = vmatpush1.msra.mxu0 0.0
      %1021 = vmatprep.subr.mxu0 0.0
      %1022 = vmatpush1.msra.mxu0 0.0
      %1023 = vmatprep.subr.mxu0 0.0
      %1024 = vmatpush1.msra.mxu0 0.0
      %1025 = vmatprep.subr.mxu0 0.0
      %1026 = vmatpush1.msra.mxu0 0.0
      %1027 = vmatprep.subr.mxu0 0.0
      %1028 = vmatpush1.msra.mxu0 0.0
      %1029 = vmatprep.subr.mxu0 0.0
      %1030 = vmatpush1.msra.mxu0 0.0
      %1031 = vmatprep.subr.mxu0 0.0
      %1032 = vmatpush1.msra.mxu0 0.0
      %1033 = vmatprep.subr.mxu0 0.0
      %1034 = vmatpush1.msra.mxu0 0.0
      %1035 = vmatprep.subr.mxu0 0.0
      %1036 = vmatpush1.msra.mxu0 0.0
      %1037 = vmatprep.subr.mxu0 0.0
      %1038 = vmatpush1.msra.mxu0 0.0
      %1039 = vmatprep.subr.mxu0 0.0
      %1040 = vmatpush1.msra.mxu0 0.0
      %1041 = vmatprep.subr.mxu0 0.0
      %1042 = vmatpush1.msra.mxu0 0.0
      %1043 = vmatprep.subr.mxu0 0.0
      %1044 = vmatpush1.msra.mxu0 0.0
      %1045 = vmatprep.subr.mxu0 0.0
      %1046 = vmatpush1.msra.mxu0 0.0
      %1047 = vmatprep.subr.mxu0 0.0
      %1048 = vmatpush1.msra.mxu0 0.0
      %1049 = vmatprep.subr.mxu0 0.0
      %1050 = vmatpush1.msra.mxu0 0.0
      %1051 = vmatprep.subr.mxu0 0.0
      %1052 = vmatpush1.msra.mxu0 0.0
      %1053 = vmatprep.subr.mxu0 0.0
      %1054 = vmatpush1.msra.mxu0 0.0
      %1055 = vmatprep.subr.mxu0 0.0
      %1056 = vmatpush1.msra.mxu0 0.0
      %1057 = vmatprep.mubr.f32.mxu0 0.0
      %1058 = vmatmul.mubr.f32.gmra.mrb[0].mxu0 %v831
      %v1059 = vpop.f32.mrb[0].mxu0
      %v1060 = vadd.f32 0.0, %v1059
      %v1061 = vpop.f32.mrb[0].mxu0
      %1062 = vdwg.mxu0
      %v1063 = vtanh.pop %v1060
      %s1064 = scalar_lea.vmem %s4, 32
      %v1065 = vld [vmem:[%s1064] sm:$0xff]
      %v1066 = vld [vmem:[%s1064 + $0x8] sm:$0xff]
      %v1067 = vld [vmem:[%s1064 + $0x10] sm:$0xff]
      %v1068 = vld [vmem:[%s1064 + $0x18] sm:$0xff]
      %v1069 = vld [vmem:[%s2 + $0x2] sm:$0x1]
      %v1070 = vlaneseq
      %v1071 = vshrl.u32 %v1070, 7
      %v1072 = vsub.s32 0, %v1071
      %v1073 = vrot.slane %v1069, %v1072
      %v1075 = vsel %vm829, %v1063, 0
      %1077 = vmatprep.subr.mxu0 0.0
      %1078 = vmatpush1.msra.mxu0 %v1065
      %1079 = vmatprep.subr.mxu0 0.0
      %1080 = vmatpush1.msra.mxu0 %v1066
      %1081 = vmatprep.subr.mxu0 0.0
      %1082 = vmatpush1.msra.mxu0 %v1067
      %1083 = vmatprep.subr.mxu0 0.0
      %1084 = vmatpush1.msra.mxu0 %v1068
      %1085 = vmatprep.subr.mxu0 0.0
      %1086 = vmatpush1.msra.mxu0 0.0
      %1087 = vmatprep.subr.mxu0 0.0
      %1088 = vmatpush1.msra.mxu0 0.0
      %1089 = vmatprep.subr.mxu0 0.0
      %1090 = vmatpush1.msra.mxu0 0.0
      %1091 = vmatprep.subr.mxu0 0.0
      %1092 = vmatpush1.msra.mxu0 0.0
      %1093 = vmatprep.subr.mxu0 0.0
      %1094 = vmatpush1.msra.mxu0 0.0
      %1095 = vmatprep.subr.mxu0 0.0
      %1096 = vmatpush1.msra.mxu0 0.0
      %1097 = vmatprep.subr.mxu0 0.0
      %1098 = vmatpush1.msra.mxu0 0.0
      %1099 = vmatprep.subr.mxu0 0.0
      %1100 = vmatpush1.msra.mxu0 0.0
      %1101 = vmatprep.subr.mxu0 0.0
      %1102 = vmatpush1.msra.mxu0 0.0
      %1103 = vmatprep.subr.mxu0 0.0
      %1104 = vmatpush1.msra.mxu0 0.0
      %1105 = vmatprep.subr.mxu0 0.0
      %1106 = vmatpush1.msra.mxu0 0.0
      %1107 = vmatprep.subr.mxu0 0.0
      %1108 = vmatpush1.msra.mxu0 0.0
      %1109 = vmatprep.subr.mxu0 0.0
      %1110 = vmatpush1.msra.mxu0 0.0
      %1111 = vmatprep.subr.mxu0 0.0
      %1112 = vmatpush1.msra.mxu0 0.0
      %1113 = vmatprep.subr.mxu0 0.0
      %1114 = vmatpush1.msra.mxu0 0.0
      %1115 = vmatprep.subr.mxu0 0.0
      %1116 = vmatpush1.msra.mxu0 0.0
      %1117 = vmatprep.subr.mxu0 0.0
      %1118 = vmatpush1.msra.mxu0 0.0
      %1119 = vmatprep.subr.mxu0 0.0
      %1120 = vmatpush1.msra.mxu0 0.0
      %1121 = vmatprep.subr.mxu0 0.0
      %1122 = vmatpush1.msra.mxu0 0.0
      %1123 = vmatprep.subr.mxu0 0.0
      %1124 = vmatpush1.msra.mxu0 0.0
      %1125 = vmatprep.subr.mxu0 0.0
      %1126 = vmatpush1.msra.mxu0 0.0
      %1127 = vmatprep.subr.mxu0 0.0
      %1128 = vmatpush1.msra.mxu0 0.0
      %1129 = vmatprep.subr.mxu0 0.0
      %1130 = vmatpush1.msra.mxu0 0.0
      %1131 = vmatprep.subr.mxu0 0.0
      %1132 = vmatpush1.msra.mxu0 0.0
      %1133 = vmatprep.subr.mxu0 0.0
      %1134 = vmatpush1.msra.mxu0 0.0
      %1135 = vmatprep.subr.mxu0 0.0
      %1136 = vmatpush1.msra.mxu0 0.0
      %1137 = vmatprep.subr.mxu0 0.0
      %1138 = vmatpush1.msra.mxu0 0.0
      %1139 = vmatprep.subr.mxu0 0.0
      %1140 = vmatpush1.msra.mxu0 0.0
      %1141 = vmatprep.mubr.f32.mxu0 0.0
      %1142 = vmatmul.mubr.f32.gmra.mrb[0].mxu0 %v1075
      %v1143 = vpop.f32.mrb[0].mxu0
      %v1144 = vadd.f32 %v1073, %v1143
      %v1145 = vpop.f32.mrb[0].mxu0
      %1146 = vdwg.mxu0
      %v1147 = vmul.f32 %v817, %v1144
      %v1148 = vadd.f32 %v723, %v1147
      %s1149 = scalar_lea.vmem %s3, 64
      %v1150 = vld [vmem:[%s1149] sm:$0xff]
      %v1151 = vld [vmem:[%s1149 + $0x8] sm:$0xff]
      %v1152 = vld [vmem:[%s1149 + $0x10] sm:$0xff]
      %v1153 = vld [vmem:[%s1149 + $0x18] sm:$0xff]
      %1154 = vmatprep.subr.mxu0 0.0
      %1155 = vmatpush1.msra.mxu0 %v1150
      %1156 = vmatprep.subr.mxu0 0.0
      %1157 = vmatpush1.msra.mxu0 %v1151
      %1158 = vmatprep.subr.mxu0 0.0
      %1159 = vmatpush1.msra.mxu0 %v1152
      %1160 = vmatprep.subr.mxu0 0.0
      %1161 = vmatpush1.msra.mxu0 %v1153
      %1162 = vmatprep.subr.mxu0 0.0
      %1163 = vmatpush1.msra.mxu0 0.0
      %1164 = vmatprep.subr.mxu0 0.0
      %1165 = vmatpush1.msra.mxu0 0.0
      %1166 = vmatprep.subr.mxu0 0.0
      %1167 = vmatpush1.msra.mxu0 0.0
      %1168 = vmatprep.subr.mxu0 0.0
      %1169 = vmatpush1.msra.mxu0 0.0
      %1170 = vmatprep.subr.mxu0 0.0
      %1171 = vmatpush1.msra.mxu0 0.0
      %1172 = vmatprep.subr.mxu0 0.0
      %1173 = vmatpush1.msra.mxu0 0.0
      %1174 = vmatprep.subr.mxu0 0.0
      %1175 = vmatpush1.msra.mxu0 0.0
      %1176 = vmatprep.subr.mxu0 0.0
      %1177 = vmatpush1.msra.mxu0 0.0
      %1178 = vmatprep.subr.mxu0 0.0
      %1179 = vmatpush1.msra.mxu0 0.0
      %1180 = vmatprep.subr.mxu0 0.0
      %1181 = vmatpush1.msra.mxu0 0.0
      %1182 = vmatprep.subr.mxu0 0.0
      %1183 = vmatpush1.msra.mxu0 0.0
      %1184 = vmatprep.subr.mxu0 0.0
      %1185 = vmatpush1.msra.mxu0 0.0
      %1186 = vmatprep.subr.mxu0 0.0
      %1187 = vmatpush1.msra.mxu0 0.0
      %1188 = vmatprep.subr.mxu0 0.0
      %1189 = vmatpush1.msra.mxu0 0.0
      %1190 = vmatprep.subr.mxu0 0.0
      %1191 = vmatpush1.msra.mxu0 0.0
      %1192 = vmatprep.subr.mxu0 0.0
      %1193 = vmatpush1.msra.mxu0 0.0
      %1194 = vmatprep.subr.mxu0 0.0
      %1195 = vmatpush1.msra.mxu0 0.0
      %1196 = vmatprep.subr.mxu0 0.0
      %1197 = vmatpush1.msra.mxu0 0.0
      %1198 = vmatprep.subr.mxu0 0.0
      %1199 = vmatpush1.msra.mxu0 0.0
      %1200 = vmatprep.subr.mxu0 0.0
      %1201 = vmatpush1.msra.mxu0 0.0
      %1202 = vmatprep.subr.mxu0 0.0
      %1203 = vmatpush1.msra.mxu0 0.0
      %1204 = vmatprep.subr.mxu0 0.0
      %1205 = vmatpush1.msra.mxu0 0.0
      %1206 = vmatprep.subr.mxu0 0.0
      %1207 = vmatpush1.msra.mxu0 0.0
      %1208 = vmatprep.subr.mxu0 0.0
      %1209 = vmatpush1.msra.mxu0 0.0
      %1210 = vmatprep.subr.mxu0 0.0
      %1211 = vmatpush1.msra.mxu0 0.0
      %1212 = vmatprep.subr.mxu0 0.0
      %1213 = vmatpush1.msra.mxu0 0.0
      %1214 = vmatprep.subr.mxu0 0.0
      %1215 = vmatpush1.msra.mxu0 0.0
      %1216 = vmatprep.subr.mxu0 0.0
      %1217 = vmatpush1.msra.mxu0 0.0
      %1218 = vmatprep.mubr.f32.mxu0 0.0
      %1219 = vmatmul.mubr.f32.gmra.mrb[0].mxu0 %v831
      %v1220 = vpop.f32.mrb[0].mxu0
      %v1221 = vadd.f32 0.0, %v1220
      %v1222 = vpop.f32.mrb[0].mxu0
      %1223 = vdwg.mxu0
      %v1224 = vtanh.pop %v1221
      %s1225 = scalar_lea.vmem %s4, 64
      %v1226 = vld [vmem:[%s1225] sm:$0xff]
      %v1227 = vld [vmem:[%s1225 + $0x8] sm:$0xff]
      %v1228 = vld [vmem:[%s1225 + $0x10] sm:$0xff]
      %v1229 = vld [vmem:[%s1225 + $0x18] sm:$0xff]
      %v1230 = vld [vmem:[%s2 + $0x3] sm:$0x1]
      %v1231 = vlaneseq
      %v1232 = vshrl.u32 %v1231, 7
      %v1233 = vsub.s32 0, %v1232
      %v1234 = vrot.slane %v1230, %v1233
      %v1236 = vsel %vm829, %v1224, 0
      %1238 = vmatprep.subr.mxu0 0.0
      %1239 = vmatpush1.msra.mxu0 %v1226
      %1240 = vmatprep.subr.mxu0 0.0
      %1241 = vmatpush1.msra.mxu0 %v1227
      %1242 = vmatprep.subr.mxu0 0.0
      %1243 = vmatpush1.msra.mxu0 %v1228
      %1244 = vmatprep.subr.mxu0 0.0
      %1245 = vmatpush1.msra.mxu0 %v1229
      %1246 = vmatprep.subr.mxu0 0.0
      %1247 = vmatpush1.msra.mxu0 0.0
      %1248 = vmatprep.subr.mxu0 0.0
      %1249 = vmatpush1.msra.mxu0 0.0
      %1250 = vmatprep.subr.mxu0 0.0
      %1251 = vmatpush1.msra.mxu0 0.0
      %1252 = vmatprep.subr.mxu0 0.0
      %1253 = vmatpush1.msra.mxu0 0.0
      %1254 = vmatprep.subr.mxu0 0.0
      %1255 = vmatpush1.msra.mxu0 0.0
      %1256 = vmatprep.subr.mxu0 0.0
      %1257 = vmatpush1.msra.mxu0 0.0
      %1258 = vmatprep.subr.mxu0 0.0
      %1259 = vmatpush1.msra.mxu0 0.0
      %1260 = vmatprep.subr.mxu0 0.0
      %1261 = vmatpush1.msra.mxu0 0.0
      %1262 = vmatprep.subr.mxu0 0.0
      %1263 = vmatpush1.msra.mxu0 0.0
      %1264 = vmatprep.subr.mxu0 0.0
      %1265 = vmatpush1.msra.mxu0 0.0
      %1266 = vmatprep.subr.mxu0 0.0
      %1267 = vmatpush1.msra.mxu0 0.0
      %1268 = vmatprep.subr.mxu0 0.0
      %1269 = vmatpush1.msra.mxu0 0.0
      %1270 = vmatprep.subr.mxu0 0.0
      %1271 = vmatpush1.msra.mxu0 0.0
      %1272 = vmatprep.subr.mxu0 0.0
      %1273 = vmatpush1.msra.mxu0 0.0
      %1274 = vmatprep.subr.mxu0 0.0
      %1275 = vmatpush1.msra.mxu0 0.0
      %1276 = vmatprep.subr.mxu0 0.0
      %1277 = vmatpush1.msra.mxu0 0.0
      %1278 = vmatprep.subr.mxu0 0.0
      %1279 = vmatpush1.msra.mxu0 0.0
      %1280 = vmatprep.subr.mxu0 0.0
      %1281 = vmatpush1.msra.mxu0 0.0
      %1282 = vmatprep.subr.mxu0 0.0
      %1283 = vmatpush1.msra.mxu0 0.0
      %1284 = vmatprep.subr.mxu0 0.0
      %1285 = vmatpush1.msra.mxu0 0.0
      %1286 = vmatprep.subr.mxu0 0.0
      %1287 = vmatpush1.msra.mxu0 0.0
      %1288 = vmatprep.subr.mxu0 0.0
      %1289 = vmatpush1.msra.mxu0 0.0
      %1290 = vmatprep.subr.mxu0 0.0
      %1291 = vmatpush1.msra.mxu0 0.0
      %1292 = vmatprep.subr.mxu0 0.0
      %1293 = vmatpush1.msra.mxu0 0.0
      %1294 = vmatprep.subr.mxu0 0.0
      %1295 = vmatpush1.msra.mxu0 0.0
      %1296 = vmatprep.subr.mxu0 0.0
      %1297 = vmatpush1.msra.mxu0 0.0
      %1298 = vmatprep.subr.mxu0 0.0
      %1299 = vmatpush1.msra.mxu0 0.0
      %1300 = vmatprep.subr.mxu0 0.0
      %1301 = vmatpush1.msra.mxu0 0.0
      %1302 = vmatprep.mubr.f32.mxu0 0.0
      %1303 = vmatmul.mubr.f32.gmra.mrb[0].mxu0 %v1236
      %v1304 = vpop.f32.mrb[0].mxu0
      %v1305 = vadd.f32 %v1234, %v1304
      %v1306 = vpop.f32.mrb[0].mxu0
      %1307 = vdwg.mxu0
      %v1308 = vmul.f32 %v817, %v1305
      %v1309 = vadd.f32 %v723, %v1308
      %s1310 = scalar_lea.vmem %s3, 96
      %v1311 = vld [vmem:[%s1310] sm:$0xff]
      %v1312 = vld [vmem:[%s1310 + $0x8] sm:$0xff]
      %v1313 = vld [vmem:[%s1310 + $0x10] sm:$0xff]
      %v1314 = vld [vmem:[%s1310 + $0x18] sm:$0xff]
      %1315 = vmatprep.subr.mxu0 0.0
      %1316 = vmatpush1.msra.mxu0 %v1311
      %1317 = vmatprep.subr.mxu0 0.0
      %1318 = vmatpush1.msra.mxu0 %v1312
      %1319 = vmatprep.subr.mxu0 0.0
      %1320 = vmatpush1.msra.mxu0 %v1313
      %1321 = vmatprep.subr.mxu0 0.0
      %1322 = vmatpush1.msra.mxu0 %v1314
      %1323 = vmatprep.subr.mxu0 0.0
      %1324 = vmatpush1.msra.mxu0 0.0
      %1325 = vmatprep.subr.mxu0 0.0
      %1326 = vmatpush1.msra.mxu0 0.0
      %1327 = vmatprep.subr.mxu0 0.0
      %1328 = vmatpush1.msra.mxu0 0.0
      %1329 = vmatprep.subr.mxu0 0.0
      %1330 = vmatpush1.msra.mxu0 0.0
      %1331 = vmatprep.subr.mxu0 0.0
      %1332 = vmatpush1.msra.mxu0 0.0
      %1333 = vmatprep.subr.mxu0 0.0
      %1334 = vmatpush1.msra.mxu0 0.0
      %1335 = vmatprep.subr.mxu0 0.0
      %1336 = vmatpush1.msra.mxu0 0.0
      %1337 = vmatprep.subr.mxu0 0.0
      %1338 = vmatpush1.msra.mxu0 0.0
      %1339 = vmatprep.subr.mxu0 0.0
      %1340 = vmatpush1.msra.mxu0 0.0
      %1341 = vmatprep.subr.mxu0 0.0
      %1342 = vmatpush1.msra.mxu0 0.0
      %1343 = vmatprep.subr.mxu0 0.0
      %1344 = vmatpush1.msra.mxu0 0.0
      %1345 = vmatprep.subr.mxu0 0.0
      %1346 = vmatpush1.msra.mxu0 0.0
      %1347 = vmatprep.subr.mxu0 0.0
      %1348 = vmatpush1.msra.mxu0 0.0
      %1349 = vmatprep.subr.mxu0 0.0
      %1350 = vmatpush1.msra.mxu0 0.0
      %1351 = vmatprep.subr.mxu0 0.0
      %1352 = vmatpush1.msra.mxu0 0.0
      %1353 = vmatprep.subr.mxu0 0.0
      %1354 = vmatpush1.msra.mxu0 0.0
      %1355 = vmatprep.subr.mxu0 0.0
      %1356 = vmatpush1.msra.mxu0 0.0
      %1357 = vmatprep.subr.mxu0 0.0
      %1358 = vmatpush1.msra.mxu0 0.0
      %1359 = vmatprep.subr.mxu0 0.0
      %1360 = vmatpush1.msra.mxu0 0.0
      %1361 = vmatprep.subr.mxu0 0.0
      %1362 = vmatpush1.msra.mxu0 0.0
      %1363 = vmatprep.subr.mxu0 0.0
      %1364 = vmatpush1.msra.mxu0 0.0
      %1365 = vmatprep.subr.mxu0 0.0
      %1366 = vmatpush1.msra.mxu0 0.0
      %1367 = vmatprep.subr.mxu0 0.0
      %1368 = vmatpush1.msra.mxu0 0.0
      %1369 = vmatprep.subr.mxu0 0.0
      %1370 = vmatpush1.msra.mxu0 0.0
      %1371 = vmatprep.subr.mxu0 0.0
      %1372 = vmatpush1.msra.mxu0 0.0
      %1373 = vmatprep.subr.mxu0 0.0
      %1374 = vmatpush1.msra.mxu0 0.0
      %1375 = vmatprep.subr.mxu0 0.0
      %1376 = vmatpush1.msra.mxu0 0.0
      %1377 = vmatprep.subr.mxu0 0.0
      %1378 = vmatpush1.msra.mxu0 0.0
      %1379 = vmatprep.mubr.f32.mxu0 0.0
      %1380 = vmatmul.mubr.f32.gmra.mrb[0].mxu0 %v831
      %v1381 = vpop.f32.mrb[0].mxu0
      %v1382 = vadd.f32 0.0, %v1381
      %v1383 = vpop.f32.mrb[0].mxu0
      %1384 = vdwg.mxu0
      %v1385 = vtanh.pop %v1382
      %s1386 = scalar_lea.vmem %s4, 96
      %v1387 = vld [vmem:[%s1386] sm:$0xff]
      %v1388 = vld [vmem:[%s1386 + $0x8] sm:$0xff]
      %v1389 = vld [vmem:[%s1386 + $0x10] sm:$0xff]
      %v1390 = vld [vmem:[%s1386 + $0x18] sm:$0xff]
      %v1391 = vld [vmem:[%s2 + $0x4] sm:$0x1]
      %v1392 = vlaneseq
      %v1393 = vshrl.u32 %v1392, 7
      %v1394 = vsub.s32 0, %v1393
      %v1395 = vrot.slane %v1391, %v1394
      %v1397 = vsel %vm829, %v1385, 0
      %1399 = vmatprep.subr.mxu0 0.0
      %1400 = vmatpush1.msra.mxu0 %v1387
      %1401 = vmatprep.subr.mxu0 0.0
      %1402 = vmatpush1.msra.mxu0 %v1388
      %1403 = vmatprep.subr.mxu0 0.0
      %1404 = vmatpush1.msra.mxu0 %v1389
      %1405 = vmatprep.subr.mxu0 0.0
      %1406 = vmatpush1.msra.mxu0 %v1390
      %1407 = vmatprep.subr.mxu0 0.0
      %1408 = vmatpush1.msra.mxu0 0.0
      %1409 = vmatprep.subr.mxu0 0.0
      %1410 = vmatpush1.msra.mxu0 0.0
      %1411 = vmatprep.subr.mxu0 0.0
      %1412 = vmatpush1.msra.mxu0 0.0
      %1413 = vmatprep.subr.mxu0 0.0
      %1414 = vmatpush1.msra.mxu0 0.0
      %1415 = vmatprep.subr.mxu0 0.0
      %1416 = vmatpush1.msra.mxu0 0.0
      %1417 = vmatprep.subr.mxu0 0.0
      %1418 = vmatpush1.msra.mxu0 0.0
      %1419 = vmatprep.subr.mxu0 0.0
      %1420 = vmatpush1.msra.mxu0 0.0
      %1421 = vmatprep.subr.mxu0 0.0
      %1422 = vmatpush1.msra.mxu0 0.0
      %1423 = vmatprep.subr.mxu0 0.0
      %1424 = vmatpush1.msra.mxu0 0.0
      %1425 = vmatprep.subr.mxu0 0.0
      %1426 = vmatpush1.msra.mxu0 0.0
      %1427 = vmatprep.subr.mxu0 0.0
      %1428 = vmatpush1.msra.mxu0 0.0
      %1429 = vmatprep.subr.mxu0 0.0
      %1430 = vmatpush1.msra.mxu0 0.0
      %1431 = vmatprep.subr.mxu0 0.0
      %1432 = vmatpush1.msra.mxu0 0.0
      %1433 = vmatprep.subr.mxu0 0.0
      %1434 = vmatpush1.msra.mxu0 0.0
      %1435 = vmatprep.subr.mxu0 0.0
      %1436 = vmatpush1.msra.mxu0 0.0
      %1437 = vmatprep.subr.mxu0 0.0
      %1438 = vmatpush1.msra.mxu0 0.0
      %1439 = vmatprep.subr.mxu0 0.0
      %1440 = vmatpush1.msra.mxu0 0.0
      %1441 = vmatprep.subr.mxu0 0.0
      %1442 = vmatpush1.msra.mxu0 0.0
      %1443 = vmatprep.subr.mxu0 0.0
      %1444 = vmatpush1.msra.mxu0 0.0
      %1445 = vmatprep.subr.mxu0 0.0
      %1446 = vmatpush1.msra.mxu0 0.0
      %1447 = vmatprep.subr.mxu0 0.0
      %1448 = vmatpush1.msra.mxu0 0.0
      %1449 = vmatprep.subr.mxu0 0.0
      %1450 = vmatpush1.msra.mxu0 0.0
      %1451 = vmatprep.subr.mxu0 0.0
      %1452 = vmatpush1.msra.mxu0 0.0
      %1453 = vmatprep.subr.mxu0 0.0
      %1454 = vmatpush1.msra.mxu0 0.0
      %1455 = vmatprep.subr.mxu0 0.0
      %1456 = vmatpush1.msra.mxu0 0.0
      %1457 = vmatprep.subr.mxu0 0.0
      %1458 = vmatpush1.msra.mxu0 0.0
      %1459 = vmatprep.subr.mxu0 0.0
      %1460 = vmatpush1.msra.mxu0 0.0
      %1461 = vmatprep.subr.mxu0 0.0
      %1462 = vmatpush1.msra.mxu0 0.0
      %1463 = vmatprep.mubr.f32.mxu0 0.0
      %1464 = vmatmul.mubr.f32.gmra.mrb[0].mxu0 %v1397
      %v1465 = vpop.f32.mrb[0].mxu0
      %v1466 = vadd.f32 %v1395, %v1465
      %v1467 = vpop.f32.mrb[0].mxu0
      %1468 = vdwg.mxu0
      %v1469 = vmul.f32 %v817, %v1466
      %v1470 = vadd.f32 %v723, %v1469
      %s1471 = scalar_lea.vmem %s3, 128
      %v1472 = vld [vmem:[%s1471] sm:$0xff]
      %v1473 = vld [vmem:[%s1471 + $0x8] sm:$0xff]
      %v1474 = vld [vmem:[%s1471 + $0x10] sm:$0xff]
      %v1475 = vld [vmem:[%s1471 + $0x18] sm:$0xff]
      %1476 = vmatprep.subr.mxu0 0.0
      %1477 = vmatpush1.msra.mxu0 %v1472
      %1478 = vmatprep.subr.mxu0 0.0
      %1479 = vmatpush1.msra.mxu0 %v1473
      %1480 = vmatprep.subr.mxu0 0.0
      %1481 = vmatpush1.msra.mxu0 %v1474
      %1482 = vmatprep.subr.mxu0 0.0
      %1483 = vmatpush1.msra.mxu0 %v1475
      %1484 = vmatprep.subr.mxu0 0.0
      %1485 = vmatpush1.msra.mxu0 0.0
      %1486 = vmatprep.subr.mxu0 0.0
      %1487 = vmatpush1.msra.mxu0 0.0
      %1488 = vmatprep.subr.mxu0 0.0
      %1489 = vmatpush1.msra.mxu0 0.0
      %1490 = vmatprep.subr.mxu0 0.0
      %1491 = vmatpush1.msra.mxu0 0.0
      %1492 = vmatprep.subr.mxu0 0.0
      %1493 = vmatpush1.msra.mxu0 0.0
      %1494 = vmatprep.subr.mxu0 0.0
      %1495 = vmatpush1.msra.mxu0 0.0
      %1496 = vmatprep.subr.mxu0 0.0
      %1497 = vmatpush1.msra.mxu0 0.0
      %1498 = vmatprep.subr.mxu0 0.0
      %1499 = vmatpush1.msra.mxu0 0.0
      %1500 = vmatprep.subr.mxu0 0.0
      %1501 = vmatpush1.msra.mxu0 0.0
      %1502 = vmatprep.subr.mxu0 0.0
      %1503 = vmatpush1.msra.mxu0 0.0
      %1504 = vmatprep.subr.mxu0 0.0
      %1505 = vmatpush1.msra.mxu0 0.0
      %1506 = vmatprep.subr.mxu0 0.0
      %1507 = vmatpush1.msra.mxu0 0.0
      %1508 = vmatprep.subr.mxu0 0.0
      %1509 = vmatpush1.msra.mxu0 0.0
      %1510 = vmatprep.subr.mxu0 0.0
      %1511 = vmatpush1.msra.mxu0 0.0
      %1512 = vmatprep.subr.mxu0 0.0
      %1513 = vmatpush1.msra.mxu0 0.0
      %1514 = vmatprep.subr.mxu0 0.0
      %1515 = vmatpush1.msra.mxu0 0.0
      %1516 = vmatprep.subr.mxu0 0.0
      %1517 = vmatpush1.msra.mxu0 0.0
      %1518 = vmatprep.subr.mxu0 0.0
      %1519 = vmatpush1.msra.mxu0 0.0
      %1520 = vmatprep.subr.mxu0 0.0
      %1521 = vmatpush1.msra.mxu0 0.0
      %1522 = vmatprep.subr.mxu0 0.0
      %1523 = vmatpush1.msra.mxu0 0.0
      %1524 = vmatprep.subr.mxu0 0.0
      %1525 = vmatpush1.msra.mxu0 0.0
      %1526 = vmatprep.subr.mxu0 0.0
      %1527 = vmatpush1.msra.mxu0 0.0
      %1528 = vmatprep.subr.mxu0 0.0
      %1529 = vmatpush1.msra.mxu0 0.0
      %1530 = vmatprep.subr.mxu0 0.0
      %1531 = vmatpush1.msra.mxu0 0.0
      %1532 = vmatprep.subr.mxu0 0.0
      %1533 = vmatpush1.msra.mxu0 0.0
      %1534 = vmatprep.subr.mxu0 0.0
      %1535 = vmatpush1.msra.mxu0 0.0
      %1536 = vmatprep.subr.mxu0 0.0
      %1537 = vmatpush1.msra.mxu0 0.0
      %1538 = vmatprep.subr.mxu0 0.0
      %1539 = vmatpush1.msra.mxu0 0.0
      %1540 = vmatprep.mubr.f32.mxu0 0.0
      %1541 = vmatmul.mubr.f32.gmra.mrb[0].mxu0 %v831
      %v1542 = vpop.f32.mrb[0].mxu0
      %v1543 = vadd.f32 0.0, %v1542
      %v1544 = vpop.f32.mrb[0].mxu0
      %1545 = vdwg.mxu0
      %v1546 = vtanh.pop %v1543
      %s1547 = scalar_lea.vmem %s4, 128
      %v1548 = vld [vmem:[%s1547] sm:$0xff]
      %v1549 = vld [vmem:[%s1547 + $0x8] sm:$0xff]
      %v1550 = vld [vmem:[%s1547 + $0x10] sm:$0xff]
      %v1551 = vld [vmem:[%s1547 + $0x18] sm:$0xff]
      %v1552 = vld [vmem:[%s2 + $0x5] sm:$0x1]
      %v1553 = vlaneseq
      %v1554 = vshrl.u32 %v1553, 7
      %v1555 = vsub.s32 0, %v1554
      %v1556 = vrot.slane %v1552, %v1555
      %v1558 = vsel %vm829, %v1546, 0
      %1560 = vmatprep.subr.mxu0 0.0
      %1561 = vmatpush1.msra.mxu0 %v1548
      %1562 = vmatprep.subr.mxu0 0.0
      %1563 = vmatpush1.msra.mxu0 %v1549
      %1564 = vmatprep.subr.mxu0 0.0
      %1565 = vmatpush1.msra.mxu0 %v1550
      %1566 = vmatprep.subr.mxu0 0.0
      %1567 = vmatpush1.msra.mxu0 %v1551
      %1568 = vmatprep.subr.mxu0 0.0
      %1569 = vmatpush1.msra.mxu0 0.0
      %1570 = vmatprep.subr.mxu0 0.0
      %1571 = vmatpush1.msra.mxu0 0.0
      %1572 = vmatprep.subr.mxu0 0.0
      %1573 = vmatpush1.msra.mxu0 0.0
      %1574 = vmatprep.subr.mxu0 0.0
      %1575 = vmatpush1.msra.mxu0 0.0
      %1576 = vmatprep.subr.mxu0 0.0
      %1577 = vmatpush1.msra.mxu0 0.0
      %1578 = vmatprep.subr.mxu0 0.0
      %1579 = vmatpush1.msra.mxu0 0.0
      %1580 = vmatprep.subr.mxu0 0.0
      %1581 = vmatpush1.msra.mxu0 0.0
      %1582 = vmatprep.subr.mxu0 0.0
      %1583 = vmatpush1.msra.mxu0 0.0
      %1584 = vmatprep.subr.mxu0 0.0
      %1585 = vmatpush1.msra.mxu0 0.0
      %1586 = vmatprep.subr.mxu0 0.0
      %1587 = vmatpush1.msra.mxu0 0.0
      %1588 = vmatprep.subr.mxu0 0.0
      %1589 = vmatpush1.msra.mxu0 0.0
      %1590 = vmatprep.subr.mxu0 0.0
      %1591 = vmatpush1.msra.mxu0 0.0
      %1592 = vmatprep.subr.mxu0 0.0
      %1593 = vmatpush1.msra.mxu0 0.0
      %1594 = vmatprep.subr.mxu0 0.0
      %1595 = vmatpush1.msra.mxu0 0.0
      %1596 = vmatprep.subr.mxu0 0.0
      %1597 = vmatpush1.msra.mxu0 0.0
      %1598 = vmatprep.subr.mxu0 0.0
      %1599 = vmatpush1.msra.mxu0 0.0
      %1600 = vmatprep.subr.mxu0 0.0
      %1601 = vmatpush1.msra.mxu0 0.0
      %1602 = vmatprep.subr.mxu0 0.0
      %1603 = vmatpush1.msra.mxu0 0.0
      %1604 = vmatprep.subr.mxu0 0.0
      %1605 = vmatpush1.msra.mxu0 0.0
      %1606 = vmatprep.subr.mxu0 0.0
      %1607 = vmatpush1.msra.mxu0 0.0
      %1608 = vmatprep.subr.mxu0 0.0
      %1609 = vmatpush1.msra.mxu0 0.0
      %1610 = vmatprep.subr.mxu0 0.0
      %1611 = vmatpush1.msra.mxu0 0.0
      %1612 = vmatprep.subr.mxu0 0.0
      %1613 = vmatpush1.msra.mxu0 0.0
      %1614 = vmatprep.subr.mxu0 0.0
      %1615 = vmatpush1.msra.mxu0 0.0
      %1616 = vmatprep.subr.mxu0 0.0
      %1617 = vmatpush1.msra.mxu0 0.0
      %1618 = vmatprep.subr.mxu0 0.0
      %1619 = vmatpush1.msra.mxu0 0.0
      %1620 = vmatprep.subr.mxu0 0.0
      %1621 = vmatpush1.msra.mxu0 0.0
      %1622 = vmatprep.subr.mxu0 0.0
      %1623 = vmatpush1.msra.mxu0 0.0
      %1624 = vmatprep.mubr.f32.mxu0 0.0
      %1625 = vmatmul.mubr.f32.gmra.mrb[0].mxu0 %v1558
      %v1626 = vpop.f32.mrb[0].mxu0
      %v1627 = vadd.f32 %v1556, %v1626
      %v1628 = vpop.f32.mrb[0].mxu0
      %1629 = vdwg.mxu0
      %v1630 = vmul.f32 %v817, %v1627
      %v1631 = vadd.f32 %v723, %v1630
      %v1632 = vld [vmem:[%s668] sm:$0xff]
      %v1633 = vld [vmem:[%s668 + $0x8] sm:$0xff]
      %v1634 = vld [vmem:[%s668 + $0x10] sm:$0xff]
      %v1635 = vld [vmem:[%s668 + $0x18] sm:$0xff]
      %v1637 = vsel %vm829, %v1470, 0
      %1639 = vmatprep.subr.mxu0 0.0
      %1640 = vmatpush1.msra.mxu0 %v1632
      %1641 = vmatprep.subr.mxu0 0.0
      %1642 = vmatpush1.msra.mxu0 %v1633
      %1643 = vmatprep.subr.mxu0 0.0
      %1644 = vmatpush1.msra.mxu0 %v1634
      %1645 = vmatprep.subr.mxu0 0.0
      %1646 = vmatpush1.msra.mxu0 %v1635
      %1647 = vmatprep.subr.mxu0 0.0
      %1648 = vmatpush1.msra.mxu0 0.0
      %1649 = vmatprep.subr.mxu0 0.0
      %1650 = vmatpush1.msra.mxu0 0.0
      %1651 = vmatprep.subr.mxu0 0.0
      %1652 = vmatpush1.msra.mxu0 0.0
      %1653 = vmatprep.subr.mxu0 0.0
      %1654 = vmatpush1.msra.mxu0 0.0
      %1655 = vmatprep.subr.mxu0 0.0
      %1656 = vmatpush1.msra.mxu0 0.0
      %1657 = vmatprep.subr.mxu0 0.0
      %1658 = vmatpush1.msra.mxu0 0.0
      %1659 = vmatprep.subr.mxu0 0.0
      %1660 = vmatpush1.msra.mxu0 0.0
      %1661 = vmatprep.subr.mxu0 0.0
      %1662 = vmatpush1.msra.mxu0 0.0
      %1663 = vmatprep.subr.mxu0 0.0
      %1664 = vmatpush1.msra.mxu0 0.0
      %1665 = vmatprep.subr.mxu0 0.0
      %1666 = vmatpush1.msra.mxu0 0.0
      %1667 = vmatprep.subr.mxu0 0.0
      %1668 = vmatpush1.msra.mxu0 0.0
      %1669 = vmatprep.subr.mxu0 0.0
      %1670 = vmatpush1.msra.mxu0 0.0
      %1671 = vmatprep.subr.mxu0 0.0
      %1672 = vmatpush1.msra.mxu0 0.0
      %1673 = vmatprep.subr.mxu0 0.0
      %1674 = vmatpush1.msra.mxu0 0.0
      %1675 = vmatprep.subr.mxu0 0.0
      %1676 = vmatpush1.msra.mxu0 0.0
      %1677 = vmatprep.subr.mxu0 0.0
      %1678 = vmatpush1.msra.mxu0 0.0
      %1679 = vmatprep.subr.mxu0 0.0
      %1680 = vmatpush1.msra.mxu0 0.0
      %1681 = vmatprep.subr.mxu0 0.0
      %1682 = vmatpush1.msra.mxu0 0.0
      %1683 = vmatprep.subr.mxu0 0.0
      %1684 = vmatpush1.msra.mxu0 0.0
      %1685 = vmatprep.subr.mxu0 0.0
      %1686 = vmatpush1.msra.mxu0 0.0
      %1687 = vmatprep.subr.mxu0 0.0
      %1688 = vmatpush1.msra.mxu0 0.0
      %1689 = vmatprep.subr.mxu0 0.0
      %1690 = vmatpush1.msra.mxu0 0.0
      %1691 = vmatprep.subr.mxu0 0.0
      %1692 = vmatpush1.msra.mxu0 0.0
      %1693 = vmatprep.subr.mxu0 0.0
      %1694 = vmatpush1.msra.mxu0 0.0
      %1695 = vmatprep.subr.mxu0 0.0
      %1696 = vmatpush1.msra.mxu0 0.0
      %1697 = vmatprep.subr.mxu0 0.0
      %1698 = vmatpush1.msra.mxu0 0.0
      %1699 = vmatprep.subr.mxu0 0.0
      %1700 = vmatpush1.msra.mxu0 0.0
      %1701 = vmatprep.subr.mxu0 0.0
      %1702 = vmatpush1.msra.mxu0 0.0
      %1703 = vmatprep.mubr.f32.mxu0 0.0
      %1704 = vmatmul.mubr.f32.gmra.mrb[0].mxu0 %v1637
      %v1705 = vpop.f32.mrb[0].mxu0
      %v1706 = vadd.f32 0.0, %v1705
      %v1707 = vpop.f32.mrb[0].mxu0
      %1708 = vdwg.mxu0
      %1709 = vst.msk [vmem:[%s694] sm:$0xff] %vm829, %v1706
      %v1710 = vld [vmem:[%s672] sm:$0xff]
      %v1711 = vld [vmem:[%s672 + $0x8] sm:$0xff]
      %v1712 = vld [vmem:[%s672 + $0x10] sm:$0xff]
      %v1713 = vld [vmem:[%s672 + $0x18] sm:$0xff]
      %v1715 = vsel %vm829, %v1148, 0
      %1717 = vmatprep.subr.mxu0 0.0
      %1718 = vmatpush1.msra.mxu0 %v1710
      %1719 = vmatprep.subr.mxu0 0.0
      %1720 = vmatpush1.msra.mxu0 %v1711
      %1721 = vmatprep.subr.mxu0 0.0
      %1722 = vmatpush1.msra.mxu0 %v1712
      %1723 = vmatprep.subr.mxu0 0.0
      %1724 = vmatpush1.msra.mxu0 %v1713
      %1725 = vmatprep.subr.mxu0 0.0
      %1726 = vmatpush1.msra.mxu0 0.0
      %1727 = vmatprep.subr.mxu0 0.0
      %1728 = vmatpush1.msra.mxu0 0.0
      %1729 = vmatprep.subr.mxu0 0.0
      %1730 = vmatpush1.msra.mxu0 0.0
      %1731 = vmatprep.subr.mxu0 0.0
      %1732 = vmatpush1.msra.mxu0 0.0
      %1733 = vmatprep.subr.mxu0 0.0
      %1734 = vmatpush1.msra.mxu0 0.0
      %1735 = vmatprep.subr.mxu0 0.0
      %1736 = vmatpush1.msra.mxu0 0.0
      %1737 = vmatprep.subr.mxu0 0.0
      %1738 = vmatpush1.msra.mxu0 0.0
      %1739 = vmatprep.subr.mxu0 0.0
      %1740 = vmatpush1.msra.mxu0 0.0
      %1741 = vmatprep.subr.mxu0 0.0
      %1742 = vmatpush1.msra.mxu0 0.0
      %1743 = vmatprep.subr.mxu0 0.0
      %1744 = vmatpush1.msra.mxu0 0.0
      %1745 = vmatprep.subr.mxu0 0.0
      %1746 = vmatpush1.msra.mxu0 0.0
      %1747 = vmatprep.subr.mxu0 0.0
      %1748 = vmatpush1.msra.mxu0 0.0
      %1749 = vmatprep.subr.mxu0 0.0
      %1750 = vmatpush1.msra.mxu0 0.0
      %1751 = vmatprep.subr.mxu0 0.0
      %1752 = vmatpush1.msra.mxu0 0.0
      %1753 = vmatprep.subr.mxu0 0.0
      %1754 = vmatpush1.msra.mxu0 0.0
      %1755 = vmatprep.subr.mxu0 0.0
      %1756 = vmatpush1.msra.mxu0 0.0
      %1757 = vmatprep.subr.mxu0 0.0
      %1758 = vmatpush1.msra.mxu0 0.0
      %1759 = vmatprep.subr.mxu0 0.0
      %1760 = vmatpush1.msra.mxu0 0.0
      %1761 = vmatprep.subr.mxu0 0.0
      %1762 = vmatpush1.msra.mxu0 0.0
      %1763 = vmatprep.subr.mxu0 0.0
      %1764 = vmatpush1.msra.mxu0 0.0
      %1765 = vmatprep.subr.mxu0 0.0
      %1766 = vmatpush1.msra.mxu0 0.0
      %1767 = vmatprep.subr.mxu0 0.0
      %1768 = vmatpush1.msra.mxu0 0.0
      %1769 = vmatprep.subr.mxu0 0.0
      %1770 = vmatpush1.msra.mxu0 0.0
      %1771 = vmatprep.subr.mxu0 0.0
      %1772 = vmatpush1.msra.mxu0 0.0
      %1773 = vmatprep.subr.mxu0 0.0
      %1774 = vmatpush1.msra.mxu0 0.0
      %1775 = vmatprep.subr.mxu0 0.0
      %1776 = vmatpush1.msra.mxu0 0.0
      %1777 = vmatprep.subr.mxu0 0.0
      %1778 = vmatpush1.msra.mxu0 0.0
      %1779 = vmatprep.subr.mxu0 0.0
      %1780 = vmatpush1.msra.mxu0 0.0
      %1781 = vmatprep.mubr.f32.mxu0 0.0
      %1782 = vmatmul.mubr.f32.gmra.mrb[0].mxu0 %v1715
      %v1783 = vpop.f32.mrb[0].mxu0
      %v1784 = vadd.f32 0.0, %v1783
      %v1785 = vpop.f32.mrb[0].mxu0
      %1786 = vdwg.mxu0
      %1787 = vst.msk [vmem:[%s701] sm:$0xff] %vm829, %v1784
      %v1788 = vld [vmem:[%s676] sm:$0xff]
      %v1789 = vld [vmem:[%s676 + $0x8] sm:$0xff]
      %v1790 = vld [vmem:[%s676 + $0x10] sm:$0xff]
      %v1791 = vld [vmem:[%s676 + $0x18] sm:$0xff]
      %v1793 = vsel %vm829, %v1309, 0
      %1795 = vmatprep.subr.mxu0 0.0
      %1796 = vmatpush1.msra.mxu0 %v1788
      %1797 = vmatprep.subr.mxu0 0.0
      %1798 = vmatpush1.msra.mxu0 %v1789
      %1799 = vmatprep.subr.mxu0 0.0
      %1800 = vmatpush1.msra.mxu0 %v1790
      %1801 = vmatprep.subr.mxu0 0.0
      %1802 = vmatpush1.msra.mxu0 %v1791
      %1803 = vmatprep.subr.mxu0 0.0
      %1804 = vmatpush1.msra.mxu0 0.0
      %1805 = vmatprep.subr.mxu0 0.0
      %1806 = vmatpush1.msra.mxu0 0.0
      %1807 = vmatprep.subr.mxu0 0.0
      %1808 = vmatpush1.msra.mxu0 0.0
      %1809 = vmatprep.subr.mxu0 0.0
      %1810 = vmatpush1.msra.mxu0 0.0
      %1811 = vmatprep.subr.mxu0 0.0
      %1812 = vmatpush1.msra.mxu0 0.0
      %1813 = vmatprep.subr.mxu0 0.0
      %1814 = vmatpush1.msra.mxu0 0.0
      %1815 = vmatprep.subr.mxu0 0.0
      %1816 = vmatpush1.msra.mxu0 0.0
      %1817 = vmatprep.subr.mxu0 0.0
      %1818 = vmatpush1.msra.mxu0 0.0
      %1819 = vmatprep.subr.mxu0 0.0
      %1820 = vmatpush1.msra.mxu0 0.0
      %1821 = vmatprep.subr.mxu0 0.0
      %1822 = vmatpush1.msra.mxu0 0.0
      %1823 = vmatprep.subr.mxu0 0.0
      %1824 = vmatpush1.msra.mxu0 0.0
      %1825 = vmatprep.subr.mxu0 0.0
      %1826 = vmatpush1.msra.mxu0 0.0
      %1827 = vmatprep.subr.mxu0 0.0
      %1828 = vmatpush1.msra.mxu0 0.0
      %1829 = vmatprep.subr.mxu0 0.0
      %1830 = vmatpush1.msra.mxu0 0.0
      %1831 = vmatprep.subr.mxu0 0.0
      %1832 = vmatpush1.msra.mxu0 0.0
      %1833 = vmatprep.subr.mxu0 0.0
      %1834 = vmatpush1.msra.mxu0 0.0
      %1835 = vmatprep.subr.mxu0 0.0
      %1836 = vmatpush1.msra.mxu0 0.0
      %1837 = vmatprep.subr.mxu0 0.0
      %1838 = vmatpush1.msra.mxu0 0.0
      %1839 = vmatprep.subr.mxu0 0.0
      %1840 = vmatpush1.msra.mxu0 0.0
      %1841 = vmatprep.subr.mxu0 0.0
      %1842 = vmatpush1.msra.mxu0 0.0
      %1843 = vmatprep.subr.mxu0 0.0
      %1844 = vmatpush1.msra.mxu0 0.0
      %1845 = vmatprep.subr.mxu0 0.0
      %1846 = vmatpush1.msra.mxu0 0.0
      %1847 = vmatprep.subr.mxu0 0.0
      %1848 = vmatpush1.msra.mxu0 0.0
      %1849 = vmatprep.subr.mxu0 0.0
      %1850 = vmatpush1.msra.mxu0 0.0
      %1851 = vmatprep.subr.mxu0 0.0
      %1852 = vmatpush1.msra.mxu0 0.0
      %1853 = vmatprep.subr.mxu0 0.0
      %1854 = vmatpush1.msra.mxu0 0.0
      %1855 = vmatprep.subr.mxu0 0.0
      %1856 = vmatpush1.msra.mxu0 0.0
      %1857 = vmatprep.subr.mxu0 0.0
      %1858 = vmatpush1.msra.mxu0 0.0
      %1859 = vmatprep.mubr.f32.mxu0 0.0
      %1860 = vmatmul.mubr.f32.gmra.mrb[0].mxu0 %v1793
      %v1861 = vpop.f32.mrb[0].mxu0
      %v1862 = vadd.f32 0.0, %v1861
      %v1863 = vpop.f32.mrb[0].mxu0
      %1864 = vdwg.mxu0
      %1865 = vst.msk [vmem:[%s708] sm:$0xff] %vm829, %v1862
      %v1866 = vld [vmem:[%s680] sm:$0xff]
      %v1867 = vld [vmem:[%s680 + $0x8] sm:$0xff]
      %v1868 = vld [vmem:[%s680 + $0x10] sm:$0xff]
      %v1869 = vld [vmem:[%s680 + $0x18] sm:$0xff]
      %v1871 = vsel %vm829, %v1631, 0
      %1873 = vmatprep.subr.mxu0 0.0
      %1874 = vmatpush1.msra.mxu0 %v1866
      %1875 = vmatprep.subr.mxu0 0.0
      %1876 = vmatpush1.msra.mxu0 %v1867
      %1877 = vmatprep.subr.mxu0 0.0
      %1878 = vmatpush1.msra.mxu0 %v1868
      %1879 = vmatprep.subr.mxu0 0.0
      %1880 = vmatpush1.msra.mxu0 %v1869
      %1881 = vmatprep.subr.mxu0 0.0
      %1882 = vmatpush1.msra.mxu0 0.0
      %1883 = vmatprep.subr.mxu0 0.0
      %1884 = vmatpush1.msra.mxu0 0.0
      %1885 = vmatprep.subr.mxu0 0.0
      %1886 = vmatpush1.msra.mxu0 0.0
      %1887 = vmatprep.subr.mxu0 0.0
      %1888 = vmatpush1.msra.mxu0 0.0
      %1889 = vmatprep.subr.mxu0 0.0
      %1890 = vmatpush1.msra.mxu0 0.0
      %1891 = vmatprep.subr.mxu0 0.0
      %1892 = vmatpush1.msra.mxu0 0.0
      %1893 = vmatprep.subr.mxu0 0.0
      %1894 = vmatpush1.msra.mxu0 0.0
      %1895 = vmatprep.subr.mxu0 0.0
      %1896 = vmatpush1.msra.mxu0 0.0
      %1897 = vmatprep.subr.mxu0 0.0
      %1898 = vmatpush1.msra.mxu0 0.0
      %1899 = vmatprep.subr.mxu0 0.0
      %1900 = vmatpush1.msra.mxu0 0.0
      %1901 = vmatprep.subr.mxu0 0.0
      %1902 = vmatpush1.msra.mxu0 0.0
      %1903 = vmatprep.subr.mxu0 0.0
      %1904 = vmatpush1.msra.mxu0 0.0
      %1905 = vmatprep.subr.mxu0 0.0
      %1906 = vmatpush1.msra.mxu0 0.0
      %1907 = vmatprep.subr.mxu0 0.0
      %1908 = vmatpush1.msra.mxu0 0.0
      %1909 = vmatprep.subr.mxu0 0.0
      %1910 = vmatpush1.msra.mxu0 0.0
      %1911 = vmatprep.subr.mxu0 0.0
      %1912 = vmatpush1.msra.mxu0 0.0
      %1913 = vmatprep.subr.mxu0 0.0
      %1914 = vmatpush1.msra.mxu0 0.0
      %1915 = vmatprep.subr.mxu0 0.0
      %1916 = vmatpush1.msra.mxu0 0.0
      %1917 = vmatprep.subr.mxu0 0.0
      %1918 = vmatpush1.msra.mxu0 0.0
      %1919 = vmatprep.subr.mxu0 0.0
      %1920 = vmatpush1.msra.mxu0 0.0
      %1921 = vmatprep.subr.mxu0 0.0
      %1922 = vmatpush1.msra.mxu0 0.0
      %1923 = vmatprep.subr.mxu0 0.0
      %1924 = vmatpush1.msra.mxu0 0.0
      %1925 = vmatprep.subr.mxu0 0.0
      %1926 = vmatpush1.msra.mxu0 0.0
      %1927 = vmatprep.subr.mxu0 0.0
      %1928 = vmatpush1.msra.mxu0 0.0
      %1929 = vmatprep.subr.mxu0 0.0
      %1930 = vmatpush1.msra.mxu0 0.0
      %1931 = vmatprep.subr.mxu0 0.0
      %1932 = vmatpush1.msra.mxu0 0.0
      %1933 = vmatprep.subr.mxu0 0.0
      %1934 = vmatpush1.msra.mxu0 0.0
      %1935 = vmatprep.subr.mxu0 0.0
      %1936 = vmatpush1.msra.mxu0 0.0
      %1937 = vmatprep.mubr.f32.mxu0 0.0
      %1938 = vmatmul.mubr.f32.gmra.mrb[0].mxu0 %v1871
      %v1939 = vpop.f32.mrb[0].mxu0
      %v1940 = vadd.f32 0.0, %v1939
      %v1941 = vpop.f32.mrb[0].mxu0
      %1942 = vdwg.mxu0
      %v1943 = vxor.u32 %v1940, 2147483648
      %v1944 = vmul.f32 %v1943, 1.442695
      %v1945 = vpow.pop %v1944
      %v1946 = vadd.f32 %v1945, 1.0
      %v1947 = vrcp.pop %v1946
      %v1948 = vmul.f32 1.0, %v1947
      %v1949 = vmul.f32 %v1940, %v1948
      %1950 = vst.msk [vmem:[%s715] sm:$0xff] %vm829, %v1949
      %v1951 = vld [vmem:[%s10] sm:$0xff]
      %v1952 = vld [vmem:[%s10 + $0x8] sm:$0xff]
      %v1953 = vld [vmem:[%s10 + $0x10] sm:$0xff]
      %v1954 = vld [vmem:[%s10 + $0x18] sm:$0xff]
      %v1956 = vsel %vm829, %v987, 0
      %1958 = vmatprep.subr.mxu0 0.0
      %1959 = vmatpush1.msra.mxu0 %v1951
      %1960 = vmatprep.subr.mxu0 0.0
      %1961 = vmatpush1.msra.mxu0 %v1952
      %1962 = vmatprep.subr.mxu0 0.0
      %1963 = vmatpush1.msra.mxu0 %v1953
      %1964 = vmatprep.subr.mxu0 0.0
      %1965 = vmatpush1.msra.mxu0 %v1954
      %1966 = vmatprep.subr.mxu0 0.0
      %1967 = vmatpush1.msra.mxu0 0.0
      %1968 = vmatprep.subr.mxu0 0.0
      %1969 = vmatpush1.msra.mxu0 0.0
      %1970 = vmatprep.subr.mxu0 0.0
      %1971 = vmatpush1.msra.mxu0 0.0
      %1972 = vmatprep.subr.mxu0 0.0
      %1973 = vmatpush1.msra.mxu0 0.0
      %1974 = vmatprep.subr.mxu0 0.0
      %1975 = vmatpush1.msra.mxu0 0.0
      %1976 = vmatprep.subr.mxu0 0.0
      %1977 = vmatpush1.msra.mxu0 0.0
      %1978 = vmatprep.subr.mxu0 0.0
      %1979 = vmatpush1.msra.mxu0 0.0
      %1980 = vmatprep.subr.mxu0 0.0
      %1981 = vmatpush1.msra.mxu0 0.0
      %1982 = vmatprep.subr.mxu0 0.0
      %1983 = vmatpush1.msra.mxu0 0.0
      %1984 = vmatprep.subr.mxu0 0.0
      %1985 = vmatpush1.msra.mxu0 0.0
      %1986 = vmatprep.subr.mxu0 0.0
      %1987 = vmatpush1.msra.mxu0 0.0
      %1988 = vmatprep.subr.mxu0 0.0
      %1989 = vmatpush1.msra.mxu0 0.0
      %1990 = vmatprep.subr.mxu0 0.0
      %1991 = vmatpush1.msra.mxu0 0.0
      %1992 = vmatprep.subr.mxu0 0.0
      %1993 = vmatpush1.msra.mxu0 0.0
      %1994 = vmatprep.subr.mxu0 0.0
      %1995 = vmatpush1.msra.mxu0 0.0
      %1996 = vmatprep.subr.mxu0 0.0
      %1997 = vmatpush1.msra.mxu0 0.0
      %1998 = vmatprep.subr.mxu0 0.0
      %1999 = vmatpush1.msra.mxu0 0.0
      %2000 = vmatprep.subr.mxu0 0.0
      %2001 = vmatpush1.msra.mxu0 0.0
      %2002 = vmatprep.subr.mxu0 0.0
      %2003 = vmatpush1.msra.mxu0 0.0
      %2004 = vmatprep.subr.mxu0 0.0
      %2005 = vmatpush1.msra.mxu0 0.0
      %2006 = vmatprep.subr.mxu0 0.0
      %2007 = vmatpush1.msra.mxu0 0.0
      %2008 = vmatprep.subr.mxu0 0.0
      %2009 = vmatpush1.msra.mxu0 0.0
      %2010 = vmatprep.subr.mxu0 0.0
      %2011 = vmatpush1.msra.mxu0 0.0
      %2012 = vmatprep.subr.mxu0 0.0
      %2013 = vmatpush1.msra.mxu0 0.0
      %2014 = vmatprep.subr.mxu0 0.0
      %2015 = vmatpush1.msra.mxu0 0.0
      %2016 = vmatprep.subr.mxu0 0.0
      %2017 = vmatpush1.msra.mxu0 0.0
      %2018 = vmatprep.subr.mxu0 0.0
      %2019 = vmatpush1.msra.mxu0 0.0
      %2020 = vmatprep.subr.mxu0 0.0
      %2021 = vmatpush1.msra.mxu0 0.0
      %2022 = vmatprep.mubr.f32.mxu0 0.0
      %2023 = vmatmul.mubr.f32.gmra.mrb[0].mxu0 %v1956
      %v2024 = vpop.f32.mrb[0].mxu0
      %v2025 = vadd.f32 0.0, %v2024
      %v2026 = vpop.f32.mrb[0].mxu0
      %2027 = vdwg.mxu0
      %v2028 = vtanh.pop %v2025
      %v2029 = vld [vmem:[%s687] sm:$0xff]
      %v2030 = vld [vmem:[%s687 + $0x8] sm:$0xff]
      %v2031 = vld [vmem:[%s687 + $0x10] sm:$0xff]
      %v2032 = vld [vmem:[%s687 + $0x18] sm:$0xff]
      %v2033 = vld [vmem:[%s687 + $0x20] sm:$0xff]
      %v2034 = vld [vmem:[%s687 + $0x28] sm:$0xff]
      %v2035 = vld [vmem:[%s687 + $0x30] sm:$0xff]
      %v2036 = vld [vmem:[%s687 + $0x38] sm:$0xff]
      %v2037 = vld [vmem:[%s683] sm:$0x1]
      %v2039 = vlaneseq
      %v2040 = vshrl.u32 %v2039, 7
      %v2041 = vsub.s32 0, %v2040
      %v2042 = vrot.slane %v2037, %v2041
      %vm2044 = vcmask 523264
      %v2046 = vsel %vm2044, %v2028, 0
      %2048 = vmatprep.subr.mxu0 0.0
      %2049 = vmatpush1.msra.mxu0 %v2029
      %2050 = vmatprep.subr.mxu0 0.0
      %2051 = vmatpush1.msra.mxu0 %v2030
      %2052 = vmatprep.subr.mxu0 0.0
      %2053 = vmatpush1.msra.mxu0 %v2031
      %2054 = vmatprep.subr.mxu0 0.0
      %2055 = vmatpush1.msra.mxu0 %v2032
      %2056 = vmatprep.subr.mxu0 0.0
      %2057 = vmatpush1.msra.mxu0 %v2033
      %2058 = vmatprep.subr.mxu0 0.0
      %2059 = vmatpush1.msra.mxu0 %v2034
      %2060 = vmatprep.subr.mxu0 0.0
      %2061 = vmatpush1.msra.mxu0 %v2035
      %2062 = vmatprep.subr.mxu0 0.0
      %2063 = vmatpush1.msra.mxu0 %v2036
      %2064 = vmatprep.subr.mxu0 0.0
      %2065 = vmatpush1.msra.mxu0 0.0
      %2066 = vmatprep.subr.mxu0 0.0
      %2067 = vmatpush1.msra.mxu0 0.0
      %2068 = vmatprep.subr.mxu0 0.0
      %2069 = vmatpush1.msra.mxu0 0.0
      %2070 = vmatprep.subr.mxu0 0.0
      %2071 = vmatpush1.msra.mxu0 0.0
      %2072 = vmatprep.subr.mxu0 0.0
      %2073 = vmatpush1.msra.mxu0 0.0
      %2074 = vmatprep.subr.mxu0 0.0
      %2075 = vmatpush1.msra.mxu0 0.0
      %2076 = vmatprep.subr.mxu0 0.0
      %2077 = vmatpush1.msra.mxu0 0.0
      %2078 = vmatprep.subr.mxu0 0.0
      %2079 = vmatpush1.msra.mxu0 0.0
      %2080 = vmatprep.subr.mxu0 0.0
      %2081 = vmatpush1.msra.mxu0 0.0
      %2082 = vmatprep.subr.mxu0 0.0
      %2083 = vmatpush1.msra.mxu0 0.0
      %2084 = vmatprep.subr.mxu0 0.0
      %2085 = vmatpush1.msra.mxu0 0.0
      %2086 = vmatprep.subr.mxu0 0.0
      %2087 = vmatpush1.msra.mxu0 0.0
      %2088 = vmatprep.subr.mxu0 0.0
      %2089 = vmatpush1.msra.mxu0 0.0
      %2090 = vmatprep.subr.mxu0 0.0
      %2091 = vmatpush1.msra.mxu0 0.0
      %2092 = vmatprep.subr.mxu0 0.0
      %2093 = vmatpush1.msra.mxu0 0.0
      %2094 = vmatprep.subr.mxu0 0.0
      %2095 = vmatpush1.msra.mxu0 0.0
      %2096 = vmatprep.subr.mxu0 0.0
      %2097 = vmatpush1.msra.mxu0 0.0
      %2098 = vmatprep.subr.mxu0 0.0
      %2099 = vmatpush1.msra.mxu0 0.0
      %2100 = vmatprep.subr.mxu0 0.0
      %2101 = vmatpush1.msra.mxu0 0.0
      %2102 = vmatprep.subr.mxu0 0.0
      %2103 = vmatpush1.msra.mxu0 0.0
      %2104 = vmatprep.subr.mxu0 0.0
      %2105 = vmatpush1.msra.mxu0 0.0
      %2106 = vmatprep.subr.mxu0 0.0
      %2107 = vmatpush1.msra.mxu0 0.0
      %2108 = vmatprep.subr.mxu0 0.0
      %2109 = vmatpush1.msra.mxu0 0.0
      %2110 = vmatprep.subr.mxu0 0.0
      %2111 = vmatpush1.msra.mxu0 0.0
      %2112 = vmatprep.mubr.f32.mxu0 0.0
      %2113 = vmatmul.mubr.f32.gmra.mrb[0].mxu0 %v2046
      %v2114 = vpop.f32.mrb[0].mxu0
      %v2115 = vadd.f32 %v2042, %v2114
      %v2116 = vpop.f32.mrb[0].mxu0
      %2117 = vdwg.mxu0
      %2118 = vst.msk [vmem:[%s722] sm:$0xff] %vm829, %v2115
      %p2119 = scmp.lt.s32.totalorder %s32, 3
      %s2120 = scalar_select %p2119, %s32, 3
      %p2121 = scmp.lt.s32.totalorder %s33, 0
      %s2122 = scalar_select %p2121, %s33, 0
      %s2123 = sadd.s32 %s2122, %s2120
      %s2124 = smul.addr %s2123, 8
      %s2125 = scalar_lea.vmem %s12, %s2124
      %p2126 = scmp.lt.s32.totalorder %s32, 3
      %s2127 = scalar_select %p2126, %s32, 3
      %p2128 = scmp.lt.s32.totalorder %s33, 0
      %s2129 = scalar_select %p2128, %s33, 0
      %s2130 = sadd.s32 %s2129, %s2127
      %s2131 = smul.addr %s2130, 8
      %s2132 = scalar_lea.vmem %s13, %s2131
      %p2133 = scmp.lt.s32.totalorder %s32, 3
      %s2134 = scalar_select %p2133, %s32, 3
      %p2135 = scmp.lt.s32.totalorder %s33, 0
      %s2136 = scalar_select %p2135, %s33, 0
      %s2137 = sadd.s32 %s2136, %s2134
      %s2138 = smul.addr %s2137, 8
      %s2139 = scalar_lea.vmem %s14, %s2138
      %p2140 = scmp.lt.s32.totalorder %s32, 3
      %s2141 = scalar_select %p2140, %s32, 3
      %p2142 = scmp.lt.s32.totalorder %s33, 0
      %s2143 = scalar_select %p2142, %s33, 0
      %s2144 = sadd.s32 %s2143, %s2141
      %s2145 = smul.addr %s2144, 8
      %s2146 = scalar_lea.vmem %s15, %s2145
      %p2147 = scmp.lt.s32.totalorder %s32, 3
      %s2148 = scalar_select %p2147, %s32, 3
      %p2149 = scmp.lt.s32.totalorder %s33, 0
      %s2150 = scalar_select %p2149, %s33, 0
      %s2151 = sadd.s32 %s2150, %s2148
      %s2152 = smul.addr %s2151, 8
      %s2153 = scalar_lea.vmem %s16, %s2152
      // Predicated region
      $region69: #{rwkv6_attention_forward.3} parent=67 // pred_check
        %p2154 = pneg %p352
      $region70: #{rwkv6_attention_forward.3} parent=67 // pred_check_branch
        %2156 = sbr.rel (%p2154) target = $region72
      $region71: #{rwkv6_attention_forward.3} parent=67 // pred_region
        _
      $region72: #{rwkv6_attention_forward.3} parent=67 // pred_fallthru
        _
      // Predicated region
      $region73: #{rwkv6_attention_forward.3} parent=67 // pred_check
        %p2157 = pneg %p380
      $region74: #{rwkv6_attention_forward.3} parent=67 // pred_check_branch
        %2159 = sbr.rel (%p2157) target = $region76
      $region75: #{rwkv6_attention_forward.3} parent=67 // pred_region
        _
      $region76: #{rwkv6_attention_forward.3} parent=67 // pred_fallthru
        _
      // Predicated region
      $region77: #{rwkv6_attention_forward.3} parent=67 // pred_check
        %p2160 = pneg %p408
      $region78: #{rwkv6_attention_forward.3} parent=67 // pred_check_branch
        %2162 = sbr.rel (%p2160) target = $region80
      $region79: #{rwkv6_attention_forward.3} parent=67 // pred_region
        _
      $region80: #{rwkv6_attention_forward.3} parent=67 // pred_fallthru
        _
      // Predicated region
      $region81: #{rwkv6_attention_forward.3} parent=67 // pred_check
        %p2163 = pneg %p436
      $region82: #{rwkv6_attention_forward.3} parent=67 // pred_check_branch
        %2165 = sbr.rel (%p2163) target = $region84
      $region83: #{rwkv6_attention_forward.3} parent=67 // pred_region
        _
      $region84: #{rwkv6_attention_forward.3} parent=67 // pred_fallthru
        _
      // Predicated region
      $region85: #{rwkv6_attention_forward.3} parent=67 // pred_check
        %p2166 = pneg %p464
      $region86: #{rwkv6_attention_forward.3} parent=67 // pred_check_branch
        %2168 = sbr.rel (%p2166) target = $region88
      $region87: #{rwkv6_attention_forward.3} parent=67 // pred_region
        _
      $region88: #{rwkv6_attention_forward.3} parent=67 // pred_fallthru
        _
    $region68: #{rwkv6_attention_forward.3} parent=5 // pred_fallthru
      _
    %p2169 = scmp.le.s32.totalorder 2, %s23
    // Predicated region
    $region89: #{rwkv6_attention_forward.3} parent=5 // pred_check
      %p2170 = pneg %p2169
    $region90: #{rwkv6_attention_forward.3} parent=5 // pred_check_branch
      %2172 = sbr.rel (%p2170) target = $region92
    $region91: #{rwkv6_attention_forward.3} parent=5 // pred_region
      %s2173 = ssub.s32 %s23, 2
      // Predicated region
      $region93: #{rwkv6_attention_forward.3} parent=91 // pred_check
        %p2174 = pneg %p358
      $region94: #{rwkv6_attention_forward.3} parent=91 // pred_check_branch
        %2176 = sbr.rel (%p2174) target = $region96
      $region95: #{rwkv6_attention_forward.3} parent=91 // pred_region
        %p2177 = scmp.lt.s32.totalorder %s34, 3
        %s2178 = scalar_select %p2177, %s34, 3
        %p2179 = scmp.lt.s32.totalorder %s35, 0
        %s2180 = scalar_select %p2179, %s35, 0
        %s2181 = sadd.s32 %s2180, %s2178
        %s2182 = smul.addr %s2181, 8
        %s2183 = scalar_lea.vmem %s12, %s2182
      $region96: #{rwkv6_attention_forward.3} parent=91 // pred_fallthru
        _
      // Predicated region
      $region97: #{rwkv6_attention_forward.3} parent=91 // pred_check
        %p2184 = pneg %p386
      $region98: #{rwkv6_attention_forward.3} parent=91 // pred_check_branch
        %2186 = sbr.rel (%p2184) target = $region100
      $region99: #{rwkv6_attention_forward.3} parent=91 // pred_region
        %p2187 = scmp.lt.s32.totalorder %s34, 3
        %s2188 = scalar_select %p2187, %s34, 3
        %p2189 = scmp.lt.s32.totalorder %s35, 0
        %s2190 = scalar_select %p2189, %s35, 0
        %s2191 = sadd.s32 %s2190, %s2188
        %s2192 = smul.addr %s2191, 8
        %s2193 = scalar_lea.vmem %s13, %s2192
      $region100: #{rwkv6_attention_forward.3} parent=91 // pred_fallthru
        _
      // Predicated region
      $region101: #{rwkv6_attention_forward.3} parent=91 // pred_check
        %p2194 = pneg %p414
      $region102: #{rwkv6_attention_forward.3} parent=91 // pred_check_branch
        %2196 = sbr.rel (%p2194) target = $region104
      $region103: #{rwkv6_attention_forward.3} parent=91 // pred_region
        %p2197 = scmp.lt.s32.totalorder %s34, 3
        %s2198 = scalar_select %p2197, %s34, 3
        %p2199 = scmp.lt.s32.totalorder %s35, 0
        %s2200 = scalar_select %p2199, %s35, 0
        %s2201 = sadd.s32 %s2200, %s2198
        %s2202 = smul.addr %s2201, 8
        %s2203 = scalar_lea.vmem %s14, %s2202
      $region104: #{rwkv6_attention_forward.3} parent=91 // pred_fallthru
        _
      // Predicated region
      $region105: #{rwkv6_attention_forward.3} parent=91 // pred_check
        %p2204 = pneg %p442
      $region106: #{rwkv6_attention_forward.3} parent=91 // pred_check_branch
        %2206 = sbr.rel (%p2204) target = $region108
      $region107: #{rwkv6_attention_forward.3} parent=91 // pred_region
        %p2207 = scmp.lt.s32.totalorder %s34, 3
        %s2208 = scalar_select %p2207, %s34, 3
        %p2209 = scmp.lt.s32.totalorder %s35, 0
        %s2210 = scalar_select %p2209, %s35, 0
        %s2211 = sadd.s32 %s2210, %s2208
        %s2212 = smul.addr %s2211, 8
        %s2213 = scalar_lea.vmem %s15, %s2212
      $region108: #{rwkv6_attention_forward.3} parent=91 // pred_fallthru
        _
      // Predicated region
      $region109: #{rwkv6_attention_forward.3} parent=91 // pred_check
        %p2214 = pneg %p470
      $region110: #{rwkv6_attention_forward.3} parent=91 // pred_check_branch
        %2216 = sbr.rel (%p2214) target = $region112
      $region111: #{rwkv6_attention_forward.3} parent=91 // pred_region
        %p2217 = scmp.lt.s32.totalorder %s34, 3
        %s2218 = scalar_select %p2217, %s34, 3
        %p2219 = scmp.lt.s32.totalorder %s35, 0
        %s2220 = scalar_select %p2219, %s35, 0
        %s2221 = sadd.s32 %s2220, %s2218
        %s2222 = smul.addr %s2221, 8
        %s2223 = scalar_lea.vmem %s16, %s2222
      $region112: #{rwkv6_attention_forward.3} parent=91 // pred_fallthru
        _
    $region92: #{rwkv6_attention_forward.3} parent=5 // pred_fallthru
      _
  $region6: #{rwkv6_attention_forward.3} parent=0 // loop_footer
    %s27 = sadd.s32 1, %s23
  $region7: #{rwkv6_attention_forward.3} parent=0 // loop_footer_branch
    %22 = sbr.rel target = $region3
  $region8: #{rwkv6_attention_forward.3} parent=0 // loop_exit
    _

</llo_original>
